<compile_context>
chip_gen: v5e
topology: v5e:2x2
jax: 0.10.0
libtpu: 0.0.40
codegen_flags: <defaults>
</compile_context>

<pallas_src>
import jax
import jax.numpy as jnp
import numpy as np
from jax.experimental import pallas as pl
from jax.experimental.pallas import tpu as pltpu


# ----------------------------------------------------------------------------
# Fused kernel: one sample per grid step.
# ----------------------------------------------------------------------------
def _fused_kernel(x_ref, r1_ref, m1_ref, b1_ref, r2_ref, w2_ref, b2_ref,
                  w1f_ref, b1f_ref, w2f_ref, b2f_ref, w3f_ref, b3f_ref, o_ref):
    f32, bf16 = jnp.float32, jnp.bfloat16
    dot = lambda a, b: jnp.dot(a, b, preferred_element_type=f32)

    # ---- conv1 + ReLU + 2x2 max-pool --------------------------------------
    xb = x_ref[0].astype(bf16)                                   # (32, 32)
    # Row gather on the MXU: xs[s][i, :] = x[s + 2*i, :]
    # (s = pool_row_offset + tap_dy, s in [0, 6)).
    xs = [dot(r1_ref[s], xb).astype(bf16) for s in range(6)]     # 6 x (14, 32)
    # Per pool-row offset accumulate the 5 y-taps; packed m1[dy] handles the
    # x-taps, the 6 output channels and BOTH pool-column offsets (lane blocks
    # 0:128 and 128:256), so pooling reduces to two aligned maxes.
    y1 = []
    for py in range(2):
        acc = dot(xs[py], m1_ref[0])                             # (14, 256)
        for dy in range(1, 5):
            acc = acc + dot(xs[py + dy], m1_ref[dy])
        y1.append(acc)
    y1 = jnp.maximum(y1[0], y1[1])                               # pool rows
    a1 = jnp.maximum(y1[:, :128], y1[:, 128:])                   # pool cols
    a1 = jnp.maximum(a1 + b1_ref[...], 0.0).astype(bf16)         # (14, 128)
    # a1 layout: row = y (14), lane = x*6 + channel (84 used, rest exactly 0).

    # ---- conv2 + ReLU + 2x2 max-pool (same scheme) -------------------------
    a1s = [dot(r2_ref[s], a1).astype(bf16) for s in range(6)]    # 6 x (5, 128)
    y2 = []
    for py in range(2):
        acc = dot(a1s[py], w2_ref[0])                            # (5, 256)
        for dy in range(1, 5):
            acc = acc + dot(a1s[py + dy], w2_ref[dy])
        y2.append(acc)
    y2 = jnp.maximum(y2[0], y2[1])
    a2 = jnp.maximum(y2[:, :128], y2[:, 128:])
    a2 = jnp.maximum(a2 + b2_ref[...], 0.0)                      # (5, 128) f32
    # a2 layout: row = pooled y (5), lane = pooled_x*16 + channel (80 used).

    # ---- fc1 as a (position, channel) contraction: no flatten / concats ----
    h1 = b1f_ref[...]                                            # (1, 128)
    for q in range(5):
        h1 = h1 + dot(a2[q:q + 1, :].astype(bf16), w1f_ref[q])
    h1 = jnp.maximum(h1, 0.0)

    # ---- fc2 + ReLU, fc3 ----------------------------------------------------
    h2 = jnp.maximum(dot(h1.astype(bf16), w2f_ref[...]) + b2f_ref[...], 0.0)
    # TODO(synk): the reference module declares fc2: 120->184 but fc3: 84->10,
    # so the PyTorch forward as written raises a shape error.  We keep the
    # declared parameter shapes and feed fc3 the first 84 features of fc2
    # (rows 84.. of the padded fc3 weight are zero).
    o_ref[0] = dot(h2.astype(bf16), w3f_ref[...]) + b3f_ref[...]


# ----------------------------------------------------------------------------
# Forward pass: single pallas_call, batch-parallel grid.
# ----------------------------------------------------------------------------
_W_NAMES = ["r1", "m1", "b1v", "r2", "w2p", "b2v",
            "w1f", "b1f", "w2f", "b2f", "w3f", "b3f"]


def net_forward(x, pk):
    """x: (N, 1, 32, 32) float32 -> logits (N, 10) float32."""
    n_b = x.shape[0]
    x3 = x.reshape(n_b, 32, 32).astype(jnp.float32)

    def const(a):
        return pl.BlockSpec(a.shape, lambda n, nd=a.ndim: (0,) * nd)

    out = pl.pallas_call(
        _fused_kernel,
        out_shape=jax.ShapeDtypeStruct((n_b, 1, 128), jnp.float32),
        grid=(n_b,),
        in_specs=[pl.BlockSpec((1, 32, 32), lambda n: (n, 0, 0))]
                 + [const(pk[k]) for k in _W_NAMES],
        out_specs=pl.BlockSpec((1, 1, 128), lambda n: (n, 0, 0)),
        compiler_params=pltpu.CompilerParams(
            dimension_semantics=("parallel",)),
    )(x3, *[pk[k] for k in _W_NAMES])
    # TODO(synk): for very large batches, pack several samples per grid step to
    # better fill the MXU M dimension; at small N the model is latency-bound.
    return out[:, 0, :10]


# ----------------------------------------------------------------------------
# One-time parameter packing (host-side numpy): lane-dense, MXU-ready layouts.
# ----------------------------------------------------------------------------
def pack_params(p):
    bf16 = jnp.bfloat16
    wc1 = np.asarray(p["w_c1"], np.float32)      # (6, 1, 5, 5)
    bc1 = np.asarray(p["b_c1"], np.float32)
    wc2 = np.asarray(p["w_c2"], np.float32)      # (16, 6, 5, 5)
    bc2 = np.asarray(p["b_c2"], np.float32)
    wf1 = np.asarray(p["w_f1"], np.float32)      # (120, 400)
    bf1 = np.asarray(p["b_f1"], np.float32)
    wf2 = np.asarray(p["w_f2"], np.float32)      # (184, 120)
    bf2 = np.asarray(p["b_f2"], np.float32)
    wf3 = np.asarray(p["w_f3"], np.float32)      # (10, 84)
    bf3 = np.asarray(p["b_f3"], np.float32)

    # 0/1 row-selection matrices: r[s, i, s + 2*i] = 1 (exact in bf16).
    def selector(n_rows, n_cols):
        r = np.zeros((6, n_rows, n_cols), np.float32)
        for s in range(6):
            for i in range(n_rows):
                r[s, i, s + 2 * i] = 1.0
        return r

    r1 = selector(14, 32)                        # conv1 row gather
    r2 = selector(5, 14)                         # conv2 row gather

    # conv1 taps: m1[dy, x_in, px*128 + ox*6 + co] = w_c1[co, 0, dy, dx]
    # with x_in = 2*ox + px + dx  (ox = pooled output column).
    m1 = np.zeros((5, 32, 256), np.float32)
    for dy in range(5):
        for px in range(2):
            for ox in range(14):
                for dx in range(5):
                    m1[dy, 2 * ox + px + dx,
                       px * 128 + ox * 6: px * 128 + ox * 6 + 6] = wc1[:, 0, dy, dx]
    b1v = np.zeros((1, 128), np.float32)
    for ox in range(14):
        b1v[0, ox * 6: ox * 6 + 6] = bc1

    # conv2 taps: w2p[dy, x*6 + ci, px*128 + ox*16 + co] = w_c2[co, ci, dy, dx]
    # with x = 2*ox + px + dx (x indexes a1's lane layout x*6 + ci).
    w2p = np.zeros((5, 128, 256), np.float32)
    for dy in range(5):
        for px in range(2):
            for ox in range(5):
                for dx in range(5):
                    x = 2 * ox + px + dx
                    for ci in range(6):
                        w2p[dy, x * 6 + ci,
                            px * 128 + ox * 16: px * 128 + ox * 16 + 16] = wc2[:, ci, dy, dx]
    b2v = np.zeros((1, 128), np.float32)
    for ox in range(5):
        b2v[0, ox * 16: ox * 16 + 16] = bc2

    # fc1 permuted to the kernel's (pooled_y, pooled_x*16 + channel) layout;
    # torch flatten order of (16, 5, 5) is feature = co*25 + y*5 + x.
    w1f = np.zeros((5, 128, 128), np.float32)
    for q in range(5):
        for ox in range(5):
            for co in range(16):
                w1f[q, ox * 16 + co, :120] = wf1[:, co * 25 + q * 5 + ox]
    b1f_ = np.zeros((1, 128), np.float32)
    b1f_[0, :120] = bf1

    w2f = np.zeros((128, 256), np.float32); w2f[:120, :184] = wf2.T
    b2f_ = np.zeros((1, 256), np.float32);  b2f_[0, :184] = bf2
    w3f = np.zeros((256, 128), np.float32); w3f[:84, :10] = wf3.T
    b3f_ = np.zeros((1, 128), np.float32);  b3f_[0, :10] = bf3

    return {
        "r1": jnp.asarray(r1, bf16), "m1": jnp.asarray(m1, bf16),
        "b1v": jnp.asarray(b1v), "r2": jnp.asarray(r2, bf16),
        "w2p": jnp.asarray(w2p, bf16), "b2v": jnp.asarray(b2v),
        "w1f": jnp.asarray(w1f, bf16), "b1f": jnp.asarray(b1f_),
        "w2f": jnp.asarray(w2f, bf16), "b2f": jnp.asarray(b2f_),
        "w3f": jnp.asarray(w3f, bf16), "b3f": jnp.asarray(b3f_),
    }


# ----------------------------------------------------------------------------
# Parameter init (deterministic, PyTorch-style uniform fan-in bounds)
# ----------------------------------------------------------------------------
def _uniform(key, shape, bound):
    return jax.random.uniform(key, shape, jnp.float32, minval=-bound, maxval=bound)


def init_params(key):
    ks = jax.random.split(key, 10)
    p = {}
    b = 1.0 / (1 * 5 * 5) ** 0.5
    p["w_c1"], p["b_c1"] = _uniform(ks[0], (6, 1, 5, 5), b), _uniform(ks[1], (6,), b)
    b = 1.0 / (6 * 5 * 5) ** 0.5
    p["w_c2"], p["b_c2"] = _uniform(ks[2], (16, 6, 5, 5), b), _uniform(ks[3], (16,), b)
    b = 1.0 / 400 ** 0.5
    p["w_f1"], p["b_f1"] = _uniform(ks[4], (120, 400), b), _uniform(ks[5], (120,), b)
    b = 1.0 / 120 ** 0.5
    p["w_f2"], p["b_f2"] = _uniform(ks[6], (184, 120), b), _uniform(ks[7], (184,), b)
    b = 1.0 / 84 ** 0.5
    p["w_f3"], p["b_f3"] = _uniform(ks[8], (10, 84), b), _uniform(ks[9], (10,), b)
    return p


# ----------------------------------------------------------------------------
# Pure-JAX f32 reference (same fc3-takes-first-84-of-fc2 deviation)
# ----------------------------------------------------------------------------
def net_reference(x, p):
    xf = x.astype(jnp.float32)
    dn = ("NCHW", "OIHW", "NCHW")
    y1 = jax.lax.conv_general_dilated(xf, p["w_c1"], (1, 1), "VALID",
                                      dimension_numbers=dn)
    y1 = jax.nn.relu(y1 + p["b_c1"][None, :, None, None])
    a1 = y1.reshape(y1.shape[0], 6, 14, 2, 14, 2).max(axis=(3, 5))
    y2 = jax.lax.conv_general_dilated(a1, p["w_c2"], (1, 1), "VALID",
                                      dimension_numbers=dn)
    y2 = jax.nn.relu(y2 + p["b_c2"][None, :, None, None])
    a2 = y2.reshape(y2.shape[0], 16, 5, 2, 5, 2).max(axis=(3, 5))
    f = a2.reshape(a2.shape[0], -1)
    h1 = jax.nn.relu(f @ p["w_f1"].T + p["b_f1"])
    h2 = jax.nn.relu(h1 @ p["w_f2"].T + p["b_f2"])
    return h2[:, :84] @ p["w_f3"].T + p["b_f3"]


if __name__ == "__main__":
    key = jax.random.PRNGKey(0)
    k_x, k_p = jax.random.split(key)
    # Net requires 32x32 single-channel input (16*5*5 = 400 features after convs).
    x = jax.random.normal(k_x, (2, 1, 32, 32), jnp.float32)
    params = init_params(k_p)
    packed = pack_params(params)

    forward = jax.jit(net_forward)
    out = jax.block_until_ready(forward(x, packed))
    assert out.shape == (2, 10) and out.dtype == jnp.float32

    ref = net_reference(x, params)
    err = float(jnp.max(jnp.abs(out - ref)))
    assert err < 0.1, f"max abs err vs f32 reference: {err}"
    print("KERNEL_OK")
</pallas_src>

<mosaic_0001>
module attributes {stable_mosaic.version = 11 : i64} {
  func.func @_fused_kernel(%arg0: i32, %arg1: memref<1x32x32xf32, #tpu.memory_space<vmem>>, %arg2: memref<6x14x32xbf16, #tpu.memory_space<vmem>>, %arg3: memref<5x32x256xbf16, #tpu.memory_space<vmem>>, %arg4: memref<1x128xf32, #tpu.memory_space<vmem>>, %arg5: memref<6x5x14xbf16, #tpu.memory_space<vmem>>, %arg6: memref<5x128x256xbf16, #tpu.memory_space<vmem>>, %arg7: memref<1x128xf32, #tpu.memory_space<vmem>>, %arg8: memref<5x128x128xbf16, #tpu.memory_space<vmem>>, %arg9: memref<1x128xf32, #tpu.memory_space<vmem>>, %arg10: memref<128x256xbf16, #tpu.memory_space<vmem>>, %arg11: memref<1x256xf32, #tpu.memory_space<vmem>>, %arg12: memref<256x128xbf16, #tpu.memory_space<vmem>>, %arg13: memref<1x128xf32, #tpu.memory_space<vmem>>, %arg14: memref<1x1x128xf32, #tpu.memory_space<vmem>>) attributes {dimension_semantics = [#tpu.dimension_semantics<parallel>], iteration_bounds = array<i64: 2>, scalar_prefetch = 0 : i64, scratch_operands = 0 : i64, tpu.core_type = #tpu.core_type<tc>, window_params = [{transform_indices = @transform_0, window_bounds = array<i64: 1, 32, 32>}, {pipeline_mode = #tpu.pipeline_mode<synchronous>, transform_indices = @transform_1, window_bounds = array<i64: 6, 14, 32>}, {pipeline_mode = #tpu.pipeline_mode<synchronous>, transform_indices = @transform_2, window_bounds = array<i64: 5, 32, 256>}, {pipeline_mode = #tpu.pipeline_mode<synchronous>, transform_indices = @transform_3, window_bounds = array<i64: 1, 128>}, {pipeline_mode = #tpu.pipeline_mode<synchronous>, transform_indices = @transform_4, window_bounds = array<i64: 6, 5, 14>}, {pipeline_mode = #tpu.pipeline_mode<synchronous>, transform_indices = @transform_5, window_bounds = array<i64: 5, 128, 256>}, {pipeline_mode = #tpu.pipeline_mode<synchronous>, transform_indices = @transform_6, window_bounds = array<i64: 1, 128>}, {pipeline_mode = #tpu.pipeline_mode<synchronous>, transform_indices = @transform_7, window_bounds = array<i64: 5, 128, 128>}, {pipeline_mode = #tpu.pipeline_mode<synchronous>, transform_indices = @transform_8, window_bounds = array<i64: 1, 128>}, {pipeline_mode = #tpu.pipeline_mode<synchronous>, transform_indices = @transform_9, window_bounds = array<i64: 128, 256>}, {pipeline_mode = #tpu.pipeline_mode<synchronous>, transform_indices = @transform_10, window_bounds = array<i64: 1, 256>}, {pipeline_mode = #tpu.pipeline_mode<synchronous>, transform_indices = @transform_11, window_bounds = array<i64: 256, 128>}, {pipeline_mode = #tpu.pipeline_mode<synchronous>, transform_indices = @transform_12, window_bounds = array<i64: 1, 128>}, {transform_indices = @transform_13, window_bounds = array<i64: 1, 1, 128>}]} {
    %c0 = arith.constant 0 : index
    %c0_0 = arith.constant 0 : index
    %c0_1 = arith.constant 0 : index
    %0 = vector.load %arg1[%c0, %c0_0, %c0_1] : memref<1x32x32xf32, #tpu.memory_space<vmem>>, vector<1x32x32xf32>
    %1 = vector.shape_cast %0 : vector<1x32x32xf32> to vector<32x32xf32>
    %2 = arith.truncf %1 : vector<32x32xf32> to vector<32x32xbf16>
    %c0_2 = arith.constant 0 : index
    %c0_3 = arith.constant 0 : index
    %c0_4 = arith.constant 0 : index
    %3 = vector.load %arg2[%c0_2, %c0_3, %c0_4] : memref<6x14x32xbf16, #tpu.memory_space<vmem>>, vector<1x14x32xbf16>
    %4 = vector.shape_cast %3 : vector<1x14x32xbf16> to vector<14x32xbf16>
    %cst = arith.constant dense<0.000000e+00> : vector<14x32xf32>
    %5 = tpu.matmul %4, %2, %cst {dimension_numbers = #tpu.dot_dimension_numbers<[1], [0], [0], [1], [0, 0, 1, 1], [], []>} : vector<14x32xbf16>, vector<32x32xbf16>, vector<14x32xf32> -> vector<14x32xf32>
    %6 = arith.truncf %5 : vector<14x32xf32> to vector<14x32xbf16>
    %c1 = arith.constant 1 : index
    %c0_5 = arith.constant 0 : index
    %c0_6 = arith.constant 0 : index
    %7 = vector.load %arg2[%c1, %c0_5, %c0_6] : memref<6x14x32xbf16, #tpu.memory_space<vmem>>, vector<1x14x32xbf16>
    %8 = vector.shape_cast %7 : vector<1x14x32xbf16> to vector<14x32xbf16>
    %cst_7 = arith.constant dense<0.000000e+00> : vector<14x32xf32>
    %9 = tpu.matmul %8, %2, %cst_7 {dimension_numbers = #tpu.dot_dimension_numbers<[1], [0], [0], [1], [0, 0, 1, 1], [], []>} : vector<14x32xbf16>, vector<32x32xbf16>, vector<14x32xf32> -> vector<14x32xf32>
    %10 = arith.truncf %9 : vector<14x32xf32> to vector<14x32xbf16>
    %c2 = arith.constant 2 : index
    %c0_8 = arith.constant 0 : index
    %c0_9 = arith.constant 0 : index
    %11 = vector.load %arg2[%c2, %c0_8, %c0_9] : memref<6x14x32xbf16, #tpu.memory_space<vmem>>, vector<1x14x32xbf16>
    %12 = vector.shape_cast %11 : vector<1x14x32xbf16> to vector<14x32xbf16>
    %cst_10 = arith.constant dense<0.000000e+00> : vector<14x32xf32>
    %13 = tpu.matmul %12, %2, %cst_10 {dimension_numbers = #tpu.dot_dimension_numbers<[1], [0], [0], [1], [0, 0, 1, 1], [], []>} : vector<14x32xbf16>, vector<32x32xbf16>, vector<14x32xf32> -> vector<14x32xf32>
    %14 = arith.truncf %13 : vector<14x32xf32> to vector<14x32xbf16>
    %c3 = arith.constant 3 : index
    %c0_11 = arith.constant 0 : index
    %c0_12 = arith.constant 0 : index
    %15 = vector.load %arg2[%c3, %c0_11, %c0_12] : memref<6x14x32xbf16, #tpu.memory_space<vmem>>, vector<1x14x32xbf16>
    %16 = vector.shape_cast %15 : vector<1x14x32xbf16> to vector<14x32xbf16>
    %cst_13 = arith.constant dense<0.000000e+00> : vector<14x32xf32>
    %17 = tpu.matmul %16, %2, %cst_13 {dimension_numbers = #tpu.dot_dimension_numbers<[1], [0], [0], [1], [0, 0, 1, 1], [], []>} : vector<14x32xbf16>, vector<32x32xbf16>, vector<14x32xf32> -> vector<14x32xf32>
    %18 = arith.truncf %17 : vector<14x32xf32> to vector<14x32xbf16>
    %c4 = arith.constant 4 : index
    %c0_14 = arith.constant 0 : index
    %c0_15 = arith.constant 0 : index
    %19 = vector.load %arg2[%c4, %c0_14, %c0_15] : memref<6x14x32xbf16, #tpu.memory_space<vmem>>, vector<1x14x32xbf16>
    %20 = vector.shape_cast %19 : vector<1x14x32xbf16> to vector<14x32xbf16>
    %cst_16 = arith.constant dense<0.000000e+00> : vector<14x32xf32>
    %21 = tpu.matmul %20, %2, %cst_16 {dimension_numbers = #tpu.dot_dimension_numbers<[1], [0], [0], [1], [0, 0, 1, 1], [], []>} : vector<14x32xbf16>, vector<32x32xbf16>, vector<14x32xf32> -> vector<14x32xf32>
    %22 = arith.truncf %21 : vector<14x32xf32> to vector<14x32xbf16>
    %c5 = arith.constant 5 : index
    %c0_17 = arith.constant 0 : index
    %c0_18 = arith.constant 0 : index
    %23 = vector.load %arg2[%c5, %c0_17, %c0_18] : memref<6x14x32xbf16, #tpu.memory_space<vmem>>, vector<1x14x32xbf16>
    %24 = vector.shape_cast %23 : vector<1x14x32xbf16> to vector<14x32xbf16>
    %cst_19 = arith.constant dense<0.000000e+00> : vector<14x32xf32>
    %25 = tpu.matmul %24, %2, %cst_19 {dimension_numbers = #tpu.dot_dimension_numbers<[1], [0], [0], [1], [0, 0, 1, 1], [], []>} : vector<14x32xbf16>, vector<32x32xbf16>, vector<14x32xf32> -> vector<14x32xf32>
    %26 = arith.truncf %25 : vector<14x32xf32> to vector<14x32xbf16>
    %c0_20 = arith.constant 0 : index
    %c0_21 = arith.constant 0 : index
    %c0_22 = arith.constant 0 : index
    %27 = vector.load %arg3[%c0_20, %c0_21, %c0_22] : memref<5x32x256xbf16, #tpu.memory_space<vmem>>, vector<1x32x256xbf16>
    %28 = vector.shape_cast %27 : vector<1x32x256xbf16> to vector<32x256xbf16>
    %cst_23 = arith.constant dense<0.000000e+00> : vector<14x256xf32>
    %29 = tpu.matmul %6, %28, %cst_23 {dimension_numbers = #tpu.dot_dimension_numbers<[1], [0], [0], [1], [0, 0, 1, 1], [], []>} : vector<14x32xbf16>, vector<32x256xbf16>, vector<14x256xf32> -> vector<14x256xf32>
    %c1_24 = arith.constant 1 : index
    %c0_25 = arith.constant 0 : index
    %c0_26 = arith.constant 0 : index
    %30 = vector.load %arg3[%c1_24, %c0_25, %c0_26] : memref<5x32x256xbf16, #tpu.memory_space<vmem>>, vector<1x32x256xbf16>
    %31 = vector.shape_cast %30 : vector<1x32x256xbf16> to vector<32x256xbf16>
    %cst_27 = arith.constant dense<0.000000e+00> : vector<14x256xf32>
    %32 = tpu.matmul %10, %31, %cst_27 {dimension_numbers = #tpu.dot_dimension_numbers<[1], [0], [0], [1], [0, 0, 1, 1], [], []>} : vector<14x32xbf16>, vector<32x256xbf16>, vector<14x256xf32> -> vector<14x256xf32>
    %33 = arith.addf %29, %32 : vector<14x256xf32>
    %c2_28 = arith.constant 2 : index
    %c0_29 = arith.constant 0 : index
    %c0_30 = arith.constant 0 : index
    %34 = vector.load %arg3[%c2_28, %c0_29, %c0_30] : memref<5x32x256xbf16, #tpu.memory_space<vmem>>, vector<1x32x256xbf16>
    %35 = vector.shape_cast %34 : vector<1x32x256xbf16> to vector<32x256xbf16>
    %cst_31 = arith.constant dense<0.000000e+00> : vector<14x256xf32>
    %36 = tpu.matmul %14, %35, %cst_31 {dimension_numbers = #tpu.dot_dimension_numbers<[1], [0], [0], [1], [0, 0, 1, 1], [], []>} : vector<14x32xbf16>, vector<32x256xbf16>, vector<14x256xf32> -> vector<14x256xf32>
    %37 = arith.addf %33, %36 : vector<14x256xf32>
    %c3_32 = arith.constant 3 : index
    %c0_33 = arith.constant 0 : index
    %c0_34 = arith.constant 0 : index
    %38 = vector.load %arg3[%c3_32, %c0_33, %c0_34] : memref<5x32x256xbf16, #tpu.memory_space<vmem>>, vector<1x32x256xbf16>
    %39 = vector.shape_cast %38 : vector<1x32x256xbf16> to vector<32x256xbf16>
    %cst_35 = arith.constant dense<0.000000e+00> : vector<14x256xf32>
    %40 = tpu.matmul %18, %39, %cst_35 {dimension_numbers = #tpu.dot_dimension_numbers<[1], [0], [0], [1], [0, 0, 1, 1], [], []>} : vector<14x32xbf16>, vector<32x256xbf16>, vector<14x256xf32> -> vector<14x256xf32>
    %41 = arith.addf %37, %40 : vector<14x256xf32>
    %c4_36 = arith.constant 4 : index
    %c0_37 = arith.constant 0 : index
    %c0_38 = arith.constant 0 : index
    %42 = vector.load %arg3[%c4_36, %c0_37, %c0_38] : memref<5x32x256xbf16, #tpu.memory_space<vmem>>, vector<1x32x256xbf16>
    %43 = vector.shape_cast %42 : vector<1x32x256xbf16> to vector<32x256xbf16>
    %cst_39 = arith.constant dense<0.000000e+00> : vector<14x256xf32>
    %44 = tpu.matmul %22, %43, %cst_39 {dimension_numbers = #tpu.dot_dimension_numbers<[1], [0], [0], [1], [0, 0, 1, 1], [], []>} : vector<14x32xbf16>, vector<32x256xbf16>, vector<14x256xf32> -> vector<14x256xf32>
    %45 = arith.addf %41, %44 : vector<14x256xf32>
    %c0_40 = arith.constant 0 : index
    %c0_41 = arith.constant 0 : index
    %c0_42 = arith.constant 0 : index
    %46 = vector.load %arg3[%c0_40, %c0_41, %c0_42] : memref<5x32x256xbf16, #tpu.memory_space<vmem>>, vector<1x32x256xbf16>
    %47 = vector.shape_cast %46 : vector<1x32x256xbf16> to vector<32x256xbf16>
    %cst_43 = arith.constant dense<0.000000e+00> : vector<14x256xf32>
    %48 = tpu.matmul %10, %47, %cst_43 {dimension_numbers = #tpu.dot_dimension_numbers<[1], [0], [0], [1], [0, 0, 1, 1], [], []>} : vector<14x32xbf16>, vector<32x256xbf16>, vector<14x256xf32> -> vector<14x256xf32>
    %c1_44 = arith.constant 1 : index
    %c0_45 = arith.constant 0 : index
    %c0_46 = arith.constant 0 : index
    %49 = vector.load %arg3[%c1_44, %c0_45, %c0_46] : memref<5x32x256xbf16, #tpu.memory_space<vmem>>, vector<1x32x256xbf16>
    %50 = vector.shape_cast %49 : vector<1x32x256xbf16> to vector<32x256xbf16>
    %cst_47 = arith.constant dense<0.000000e+00> : vector<14x256xf32>
    %51 = tpu.matmul %14, %50, %cst_47 {dimension_numbers = #tpu.dot_dimension_numbers<[1], [0], [0], [1], [0, 0, 1, 1], [], []>} : vector<14x32xbf16>, vector<32x256xbf16>, vector<14x256xf32> -> vector<14x256xf32>
    %52 = arith.addf %48, %51 : vector<14x256xf32>
    %c2_48 = arith.constant 2 : index
    %c0_49 = arith.constant 0 : index
    %c0_50 = arith.constant 0 : index
    %53 = vector.load %arg3[%c2_48, %c0_49, %c0_50] : memref<5x32x256xbf16, #tpu.memory_space<vmem>>, vector<1x32x256xbf16>
    %54 = vector.shape_cast %53 : vector<1x32x256xbf16> to vector<32x256xbf16>
    %cst_51 = arith.constant dense<0.000000e+00> : vector<14x256xf32>
    %55 = tpu.matmul %18, %54, %cst_51 {dimension_numbers = #tpu.dot_dimension_numbers<[1], [0], [0], [1], [0, 0, 1, 1], [], []>} : vector<14x32xbf16>, vector<32x256xbf16>, vector<14x256xf32> -> vector<14x256xf32>
    %56 = arith.addf %52, %55 : vector<14x256xf32>
    %c3_52 = arith.constant 3 : index
    %c0_53 = arith.constant 0 : index
    %c0_54 = arith.constant 0 : index
    %57 = vector.load %arg3[%c3_52, %c0_53, %c0_54] : memref<5x32x256xbf16, #tpu.memory_space<vmem>>, vector<1x32x256xbf16>
    %58 = vector.shape_cast %57 : vector<1x32x256xbf16> to vector<32x256xbf16>
    %cst_55 = arith.constant dense<0.000000e+00> : vector<14x256xf32>
    %59 = tpu.matmul %22, %58, %cst_55 {dimension_numbers = #tpu.dot_dimension_numbers<[1], [0], [0], [1], [0, 0, 1, 1], [], []>} : vector<14x32xbf16>, vector<32x256xbf16>, vector<14x256xf32> -> vector<14x256xf32>
    %60 = arith.addf %56, %59 : vector<14x256xf32>
    %c4_56 = arith.constant 4 : index
    %c0_57 = arith.constant 0 : index
    %c0_58 = arith.constant 0 : index
    %61 = vector.load %arg3[%c4_56, %c0_57, %c0_58] : memref<5x32x256xbf16, #tpu.memory_space<vmem>>, vector<1x32x256xbf16>
    %62 = vector.shape_cast %61 : vector<1x32x256xbf16> to vector<32x256xbf16>
    %cst_59 = arith.constant dense<0.000000e+00> : vector<14x256xf32>
    %63 = tpu.matmul %26, %62, %cst_59 {dimension_numbers = #tpu.dot_dimension_numbers<[1], [0], [0], [1], [0, 0, 1, 1], [], []>} : vector<14x32xbf16>, vector<32x256xbf16>, vector<14x256xf32> -> vector<14x256xf32>
    %64 = arith.addf %60, %63 : vector<14x256xf32>
    %65 = arith.maximumf %45, %64 : vector<14x256xf32>
    %66 = vector.extract_strided_slice %65 {offsets = [0, 0], sizes = [14, 128], strides = [1, 1]} : vector<14x256xf32> to vector<14x128xf32>
    %67 = vector.extract_strided_slice %65 {offsets = [0, 128], sizes = [14, 128], strides = [1, 1]} : vector<14x256xf32> to vector<14x128xf32>
    %68 = arith.maximumf %66, %67 : vector<14x128xf32>
    %c0_60 = arith.constant 0 : index
    %c0_61 = arith.constant 0 : index
    %69 = vector.load %arg4[%c0_60, %c0_61] : memref<1x128xf32, #tpu.memory_space<vmem>>, vector<1x128xf32>
    %70 = vector.broadcast %69 : vector<1x128xf32> to vector<14x128xf32>
    %71 = arith.addf %68, %70 : vector<14x128xf32>
    %cst_62 = arith.constant 0.000000e+00 : f32
    %72 = vector.broadcast %cst_62 : f32 to vector<14x128xf32>
    %73 = arith.maximumf %71, %72 : vector<14x128xf32>
    %74 = arith.truncf %73 : vector<14x128xf32> to vector<14x128xbf16>
    %c0_63 = arith.constant 0 : index
    %c0_64 = arith.constant 0 : index
    %c0_65 = arith.constant 0 : index
    %75 = vector.load %arg5[%c0_63, %c0_64, %c0_65] : memref<6x5x14xbf16, #tpu.memory_space<vmem>>, vector<1x5x14xbf16>
    %76 = vector.shape_cast %75 : vector<1x5x14xbf16> to vector<5x14xbf16>
    %cst_66 = arith.constant dense<0.000000e+00> : vector<5x128xf32>
    %77 = tpu.matmul %76, %74, %cst_66 {dimension_numbers = #tpu.dot_dimension_numbers<[1], [0], [0], [1], [0, 0, 1, 1], [], []>} : vector<5x14xbf16>, vector<14x128xbf16>, vector<5x128xf32> -> vector<5x128xf32>
    %78 = arith.truncf %77 : vector<5x128xf32> to vector<5x128xbf16>
    %c1_67 = arith.constant 1 : index
    %c0_68 = arith.constant 0 : index
    %c0_69 = arith.constant 0 : index
    %79 = vector.load %arg5[%c1_67, %c0_68, %c0_69] : memref<6x5x14xbf16, #tpu.memory_space<vmem>>, vector<1x5x14xbf16>
    %80 = vector.shape_cast %79 : vector<1x5x14xbf16> to vector<5x14xbf16>
    %cst_70 = arith.constant dense<0.000000e+00> : vector<5x128xf32>
    %81 = tpu.matmul %80, %74, %cst_70 {dimension_numbers = #tpu.dot_dimension_numbers<[1], [0], [0], [1], [0, 0, 1, 1], [], []>} : vector<5x14xbf16>, vector<14x128xbf16>, vector<5x128xf32> -> vector<5x128xf32>
    %82 = arith.truncf %81 : vector<5x128xf32> to vector<5x128xbf16>
    %c2_71 = arith.constant 2 : index
    %c0_72 = arith.constant 0 : index
    %c0_73 = arith.constant 0 : index
    %83 = vector.load %arg5[%c2_71, %c0_72, %c0_73] : memref<6x5x14xbf16, #tpu.memory_space<vmem>>, vector<1x5x14xbf16>
    %84 = vector.shape_cast %83 : vector<1x5x14xbf16> to vector<5x14xbf16>
    %cst_74 = arith.constant dense<0.000000e+00> : vector<5x128xf32>
    %85 = tpu.matmul %84, %74, %cst_74 {dimension_numbers = #tpu.dot_dimension_numbers<[1], [0], [0], [1], [0, 0, 1, 1], [], []>} : vector<5x14xbf16>, vector<14x128xbf16>, vector<5x128xf32> -> vector<5x128xf32>
    %86 = arith.truncf %85 : vector<5x128xf32> to vector<5x128xbf16>
    %c3_75 = arith.constant 3 : index
    %c0_76 = arith.constant 0 : index
    %c0_77 = arith.constant 0 : index
    %87 = vector.load %arg5[%c3_75, %c0_76, %c0_77] : memref<6x5x14xbf16, #tpu.memory_space<vmem>>, vector<1x5x14xbf16>
    %88 = vector.shape_cast %87 : vector<1x5x14xbf16> to vector<5x14xbf16>
    %cst_78 = arith.constant dense<0.000000e+00> : vector<5x128xf32>
    %89 = tpu.matmul %88, %74, %cst_78 {dimension_numbers = #tpu.dot_dimension_numbers<[1], [0], [0], [1], [0, 0, 1, 1], [], []>} : vector<5x14xbf16>, vector<14x128xbf16>, vector<5x128xf32> -> vector<5x128xf32>
    %90 = arith.truncf %89 : vector<5x128xf32> to vector<5x128xbf16>
    %c4_79 = arith.constant 4 : index
    %c0_80 = arith.constant 0 : index
    %c0_81 = arith.constant 0 : index
    %91 = vector.load %arg5[%c4_79, %c0_80, %c0_81] : memref<6x5x14xbf16, #tpu.memory_space<vmem>>, vector<1x5x14xbf16>
    %92 = vector.shape_cast %91 : vector<1x5x14xbf16> to vector<5x14xbf16>
    %cst_82 = arith.constant dense<0.000000e+00> : vector<5x128xf32>
    %93 = tpu.matmul %92, %74, %cst_82 {dimension_numbers = #tpu.dot_dimension_numbers<[1], [0], [0], [1], [0, 0, 1, 1], [], []>} : vector<5x14xbf16>, vector<14x128xbf16>, vector<5x128xf32> -> vector<5x128xf32>
    %94 = arith.truncf %93 : vector<5x128xf32> to vector<5x128xbf16>
    %c5_83 = arith.constant 5 : index
    %c0_84 = arith.constant 0 : index
    %c0_85 = arith.constant 0 : index
    %95 = vector.load %arg5[%c5_83, %c0_84, %c0_85] : memref<6x5x14xbf16, #tpu.memory_space<vmem>>, vector<1x5x14xbf16>
    %96 = vector.shape_cast %95 : vector<1x5x14xbf16> to vector<5x14xbf16>
    %cst_86 = arith.constant dense<0.000000e+00> : vector<5x128xf32>
    %97 = tpu.matmul %96, %74, %cst_86 {dimension_numbers = #tpu.dot_dimension_numbers<[1], [0], [0], [1], [0, 0, 1, 1], [], []>} : vector<5x14xbf16>, vector<14x128xbf16>, vector<5x128xf32> -> vector<5x128xf32>
    %98 = arith.truncf %97 : vector<5x128xf32> to vector<5x128xbf16>
    %c0_87 = arith.constant 0 : index
    %c0_88 = arith.constant 0 : index
    %c0_89 = arith.constant 0 : index
    %99 = vector.load %arg6[%c0_87, %c0_88, %c0_89] : memref<5x128x256xbf16, #tpu.memory_space<vmem>>, vector<1x128x256xbf16>
    %100 = vector.shape_cast %99 : vector<1x128x256xbf16> to vector<128x256xbf16>
    %cst_90 = arith.constant dense<0.000000e+00> : vector<5x256xf32>
    %101 = tpu.matmul %78, %100, %cst_90 {dimension_numbers = #tpu.dot_dimension_numbers<[1], [0], [0], [1], [0, 0, 1, 1], [], []>} : vector<5x128xbf16>, vector<128x256xbf16>, vector<5x256xf32> -> vector<5x256xf32>
    %c1_91 = arith.constant 1 : index
    %c0_92 = arith.constant 0 : index
    %c0_93 = arith.constant 0 : index
    %102 = vector.load %arg6[%c1_91, %c0_92, %c0_93] : memref<5x128x256xbf16, #tpu.memory_space<vmem>>, vector<1x128x256xbf16>
    %103 = vector.shape_cast %102 : vector<1x128x256xbf16> to vector<128x256xbf16>
    %cst_94 = arith.constant dense<0.000000e+00> : vector<5x256xf32>
    %104 = tpu.matmul %82, %103, %cst_94 {dimension_numbers = #tpu.dot_dimension_numbers<[1], [0], [0], [1], [0, 0, 1, 1], [], []>} : vector<5x128xbf16>, vector<128x256xbf16>, vector<5x256xf32> -> vector<5x256xf32>
    %105 = arith.addf %101, %104 : vector<5x256xf32>
    %c2_95 = arith.constant 2 : index
    %c0_96 = arith.constant 0 : index
    %c0_97 = arith.constant 0 : index
    %106 = vector.load %arg6[%c2_95, %c0_96, %c0_97] : memref<5x128x256xbf16, #tpu.memory_space<vmem>>, vector<1x128x256xbf16>
    %107 = vector.shape_cast %106 : vector<1x128x256xbf16> to vector<128x256xbf16>
    %cst_98 = arith.constant dense<0.000000e+00> : vector<5x256xf32>
    %108 = tpu.matmul %86, %107, %cst_98 {dimension_numbers = #tpu.dot_dimension_numbers<[1], [0], [0], [1], [0, 0, 1, 1], [], []>} : vector<5x128xbf16>, vector<128x256xbf16>, vector<5x256xf32> -> vector<5x256xf32>
    %109 = arith.addf %105, %108 : vector<5x256xf32>
    %c3_99 = arith.constant 3 : index
    %c0_100 = arith.constant 0 : index
    %c0_101 = arith.constant 0 : index
    %110 = vector.load %arg6[%c3_99, %c0_100, %c0_101] : memref<5x128x256xbf16, #tpu.memory_space<vmem>>, vector<1x128x256xbf16>
    %111 = vector.shape_cast %110 : vector<1x128x256xbf16> to vector<128x256xbf16>
    %cst_102 = arith.constant dense<0.000000e+00> : vector<5x256xf32>
    %112 = tpu.matmul %90, %111, %cst_102 {dimension_numbers = #tpu.dot_dimension_numbers<[1], [0], [0], [1], [0, 0, 1, 1], [], []>} : vector<5x128xbf16>, vector<128x256xbf16>, vector<5x256xf32> -> vector<5x256xf32>
    %113 = arith.addf %109, %112 : vector<5x256xf32>
    %c4_103 = arith.constant 4 : index
    %c0_104 = arith.constant 0 : index
    %c0_105 = arith.constant 0 : index
    %114 = vector.load %arg6[%c4_103, %c0_104, %c0_105] : memref<5x128x256xbf16, #tpu.memory_space<vmem>>, vector<1x128x256xbf16>
    %115 = vector.shape_cast %114 : vector<1x128x256xbf16> to vector<128x256xbf16>
    %cst_106 = arith.constant dense<0.000000e+00> : vector<5x256xf32>
    %116 = tpu.matmul %94, %115, %cst_106 {dimension_numbers = #tpu.dot_dimension_numbers<[1], [0], [0], [1], [0, 0, 1, 1], [], []>} : vector<5x128xbf16>, vector<128x256xbf16>, vector<5x256xf32> -> vector<5x256xf32>
    %117 = arith.addf %113, %116 : vector<5x256xf32>
    %c0_107 = arith.constant 0 : index
    %c0_108 = arith.constant 0 : index
    %c0_109 = arith.constant 0 : index
    %118 = vector.load %arg6[%c0_107, %c0_108, %c0_109] : memref<5x128x256xbf16, #tpu.memory_space<vmem>>, vector<1x128x256xbf16>
    %119 = vector.shape_cast %118 : vector<1x128x256xbf16> to vector<128x256xbf16>
    %cst_110 = arith.constant dense<0.000000e+00> : vector<5x256xf32>
    %120 = tpu.matmul %82, %119, %cst_110 {dimension_numbers = #tpu.dot_dimension_numbers<[1], [0], [0], [1], [0, 0, 1, 1], [], []>} : vector<5x128xbf16>, vector<128x256xbf16>, vector<5x256xf32> -> vector<5x256xf32>
    %c1_111 = arith.constant 1 : index
    %c0_112 = arith.constant 0 : index
    %c0_113 = arith.constant 0 : index
    %121 = vector.load %arg6[%c1_111, %c0_112, %c0_113] : memref<5x128x256xbf16, #tpu.memory_space<vmem>>, vector<1x128x256xbf16>
    %122 = vector.shape_cast %121 : vector<1x128x256xbf16> to vector<128x256xbf16>
    %cst_114 = arith.constant dense<0.000000e+00> : vector<5x256xf32>
    %123 = tpu.matmul %86, %122, %cst_114 {dimension_numbers = #tpu.dot_dimension_numbers<[1], [0], [0], [1], [0, 0, 1, 1], [], []>} : vector<5x128xbf16>, vector<128x256xbf16>, vector<5x256xf32> -> vector<5x256xf32>
    %124 = arith.addf %120, %123 : vector<5x256xf32>
    %c2_115 = arith.constant 2 : index
    %c0_116 = arith.constant 0 : index
    %c0_117 = arith.constant 0 : index
    %125 = vector.load %arg6[%c2_115, %c0_116, %c0_117] : memref<5x128x256xbf16, #tpu.memory_space<vmem>>, vector<1x128x256xbf16>
    %126 = vector.shape_cast %125 : vector<1x128x256xbf16> to vector<128x256xbf16>
    %cst_118 = arith.constant dense<0.000000e+00> : vector<5x256xf32>
    %127 = tpu.matmul %90, %126, %cst_118 {dimension_numbers = #tpu.dot_dimension_numbers<[1], [0], [0], [1], [0, 0, 1, 1], [], []>} : vector<5x128xbf16>, vector<128x256xbf16>, vector<5x256xf32> -> vector<5x256xf32>
    %128 = arith.addf %124, %127 : vector<5x256xf32>
    %c3_119 = arith.constant 3 : index
    %c0_120 = arith.constant 0 : index
    %c0_121 = arith.constant 0 : index
    %129 = vector.load %arg6[%c3_119, %c0_120, %c0_121] : memref<5x128x256xbf16, #tpu.memory_space<vmem>>, vector<1x128x256xbf16>
    %130 = vector.shape_cast %129 : vector<1x128x256xbf16> to vector<128x256xbf16>
    %cst_122 = arith.constant dense<0.000000e+00> : vector<5x256xf32>
    %131 = tpu.matmul %94, %130, %cst_122 {dimension_numbers = #tpu.dot_dimension_numbers<[1], [0], [0], [1], [0, 0, 1, 1], [], []>} : vector<5x128xbf16>, vector<128x256xbf16>, vector<5x256xf32> -> vector<5x256xf32>
    %132 = arith.addf %128, %131 : vector<5x256xf32>
    %c4_123 = arith.constant 4 : index
    %c0_124 = arith.constant 0 : index
    %c0_125 = arith.constant 0 : index
    %133 = vector.load %arg6[%c4_123, %c0_124, %c0_125] : memref<5x128x256xbf16, #tpu.memory_space<vmem>>, vector<1x128x256xbf16>
    %134 = vector.shape_cast %133 : vector<1x128x256xbf16> to vector<128x256xbf16>
    %cst_126 = arith.constant dense<0.000000e+00> : vector<5x256xf32>
    %135 = tpu.matmul %98, %134, %cst_126 {dimension_numbers = #tpu.dot_dimension_numbers<[1], [0], [0], [1], [0, 0, 1, 1], [], []>} : vector<5x128xbf16>, vector<128x256xbf16>, vector<5x256xf32> -> vector<5x256xf32>
    %136 = arith.addf %132, %135 : vector<5x256xf32>
    %137 = arith.maximumf %117, %136 : vector<5x256xf32>
    %138 = vector.extract_strided_slice %137 {offsets = [0, 0], sizes = [5, 128], strides = [1, 1]} : vector<5x256xf32> to vector<5x128xf32>
    %139 = vector.extract_strided_slice %137 {offsets = [0, 128], sizes = [5, 128], strides = [1, 1]} : vector<5x256xf32> to vector<5x128xf32>
    %140 = arith.maximumf %138, %139 : vector<5x128xf32>
    %c0_127 = arith.constant 0 : index
    %c0_128 = arith.constant 0 : index
    %141 = vector.load %arg7[%c0_127, %c0_128] : memref<1x128xf32, #tpu.memory_space<vmem>>, vector<1x128xf32>
    %142 = vector.broadcast %141 : vector<1x128xf32> to vector<5x128xf32>
    %143 = arith.addf %140, %142 : vector<5x128xf32>
    %cst_129 = arith.constant 0.000000e+00 : f32
    %144 = vector.broadcast %cst_129 : f32 to vector<5x128xf32>
    %145 = arith.maximumf %143, %144 : vector<5x128xf32>
    %c0_130 = arith.constant 0 : index
    %c0_131 = arith.constant 0 : index
    %146 = vector.load %arg9[%c0_130, %c0_131] : memref<1x128xf32, #tpu.memory_space<vmem>>, vector<1x128xf32>
    %147 = vector.extract_strided_slice %145 {offsets = [0, 0], sizes = [1, 128], strides = [1, 1]} : vector<5x128xf32> to vector<1x128xf32>
    %148 = arith.truncf %147 : vector<1x128xf32> to vector<1x128xbf16>
    %c0_132 = arith.constant 0 : index
    %c0_133 = arith.constant 0 : index
    %c0_134 = arith.constant 0 : index
    %149 = vector.load %arg8[%c0_132, %c0_133, %c0_134] : memref<5x128x128xbf16, #tpu.memory_space<vmem>>, vector<1x128x128xbf16>
    %150 = vector.shape_cast %149 : vector<1x128x128xbf16> to vector<128x128xbf16>
    %cst_135 = arith.constant dense<0.000000e+00> : vector<1x128xf32>
    %151 = tpu.matmul %148, %150, %cst_135 {dimension_numbers = #tpu.dot_dimension_numbers<[1], [0], [0], [1], [0, 0, 1, 1], [], []>} : vector<1x128xbf16>, vector<128x128xbf16>, vector<1x128xf32> -> vector<1x128xf32>
    %152 = arith.addf %146, %151 : vector<1x128xf32>
    %153 = vector.extract_strided_slice %145 {offsets = [1, 0], sizes = [1, 128], strides = [1, 1]} : vector<5x128xf32> to vector<1x128xf32>
    %154 = arith.truncf %153 : vector<1x128xf32> to vector<1x128xbf16>
    %c1_136 = arith.constant 1 : index
    %c0_137 = arith.constant 0 : index
    %c0_138 = arith.constant 0 : index
    %155 = vector.load %arg8[%c1_136, %c0_137, %c0_138] : memref<5x128x128xbf16, #tpu.memory_space<vmem>>, vector<1x128x128xbf16>
    %156 = vector.shape_cast %155 : vector<1x128x128xbf16> to vector<128x128xbf16>
    %cst_139 = arith.constant dense<0.000000e+00> : vector<1x128xf32>
    %157 = tpu.matmul %154, %156, %cst_139 {dimension_numbers = #tpu.dot_dimension_numbers<[1], [0], [0], [1], [0, 0, 1, 1], [], []>} : vector<1x128xbf16>, vector<128x128xbf16>, vector<1x128xf32> -> vector<1x128xf32>
    %158 = arith.addf %152, %157 : vector<1x128xf32>
    %159 = vector.extract_strided_slice %145 {offsets = [2, 0], sizes = [1, 128], strides = [1, 1]} : vector<5x128xf32> to vector<1x128xf32>
    %160 = arith.truncf %159 : vector<1x128xf32> to vector<1x128xbf16>
    %c2_140 = arith.constant 2 : index
    %c0_141 = arith.constant 0 : index
    %c0_142 = arith.constant 0 : index
    %161 = vector.load %arg8[%c2_140, %c0_141, %c0_142] : memref<5x128x128xbf16, #tpu.memory_space<vmem>>, vector<1x128x128xbf16>
    %162 = vector.shape_cast %161 : vector<1x128x128xbf16> to vector<128x128xbf16>
    %cst_143 = arith.constant dense<0.000000e+00> : vector<1x128xf32>
    %163 = tpu.matmul %160, %162, %cst_143 {dimension_numbers = #tpu.dot_dimension_numbers<[1], [0], [0], [1], [0, 0, 1, 1], [], []>} : vector<1x128xbf16>, vector<128x128xbf16>, vector<1x128xf32> -> vector<1x128xf32>
    %164 = arith.addf %158, %163 : vector<1x128xf32>
    %165 = vector.extract_strided_slice %145 {offsets = [3, 0], sizes = [1, 128], strides = [1, 1]} : vector<5x128xf32> to vector<1x128xf32>
    %166 = arith.truncf %165 : vector<1x128xf32> to vector<1x128xbf16>
    %c3_144 = arith.constant 3 : index
    %c0_145 = arith.constant 0 : index
    %c0_146 = arith.constant 0 : index
    %167 = vector.load %arg8[%c3_144, %c0_145, %c0_146] : memref<5x128x128xbf16, #tpu.memory_space<vmem>>, vector<1x128x128xbf16>
    %168 = vector.shape_cast %167 : vector<1x128x128xbf16> to vector<128x128xbf16>
    %cst_147 = arith.constant dense<0.000000e+00> : vector<1x128xf32>
    %169 = tpu.matmul %166, %168, %cst_147 {dimension_numbers = #tpu.dot_dimension_numbers<[1], [0], [0], [1], [0, 0, 1, 1], [], []>} : vector<1x128xbf16>, vector<128x128xbf16>, vector<1x128xf32> -> vector<1x128xf32>
    %170 = arith.addf %164, %169 : vector<1x128xf32>
    %171 = vector.extract_strided_slice %145 {offsets = [4, 0], sizes = [1, 128], strides = [1, 1]} : vector<5x128xf32> to vector<1x128xf32>
    %172 = arith.truncf %171 : vector<1x128xf32> to vector<1x128xbf16>
    %c4_148 = arith.constant 4 : index
    %c0_149 = arith.constant 0 : index
    %c0_150 = arith.constant 0 : index
    %173 = vector.load %arg8[%c4_148, %c0_149, %c0_150] : memref<5x128x128xbf16, #tpu.memory_space<vmem>>, vector<1x128x128xbf16>
    %174 = vector.shape_cast %173 : vector<1x128x128xbf16> to vector<128x128xbf16>
    %cst_151 = arith.constant dense<0.000000e+00> : vector<1x128xf32>
    %175 = tpu.matmul %172, %174, %cst_151 {dimension_numbers = #tpu.dot_dimension_numbers<[1], [0], [0], [1], [0, 0, 1, 1], [], []>} : vector<1x128xbf16>, vector<128x128xbf16>, vector<1x128xf32> -> vector<1x128xf32>
    %176 = arith.addf %170, %175 : vector<1x128xf32>
    %cst_152 = arith.constant 0.000000e+00 : f32
    %177 = vector.broadcast %cst_152 : f32 to vector<1x128xf32>
    %178 = arith.maximumf %176, %177 : vector<1x128xf32>
    %179 = arith.truncf %178 : vector<1x128xf32> to vector<1x128xbf16>
    %c0_153 = arith.constant 0 : index
    %c0_154 = arith.constant 0 : index
    %180 = vector.load %arg10[%c0_153, %c0_154] : memref<128x256xbf16, #tpu.memory_space<vmem>>, vector<128x256xbf16>
    %cst_155 = arith.constant dense<0.000000e+00> : vector<1x256xf32>
    %181 = tpu.matmul %179, %180, %cst_155 {dimension_numbers = #tpu.dot_dimension_numbers<[1], [0], [0], [1], [0, 0, 1, 1], [], []>} : vector<1x128xbf16>, vector<128x256xbf16>, vector<1x256xf32> -> vector<1x256xf32>
    %c0_156 = arith.constant 0 : index
    %c0_157 = arith.constant 0 : index
    %182 = vector.load %arg11[%c0_156, %c0_157] : memref<1x256xf32, #tpu.memory_space<vmem>>, vector<1x256xf32>
    %183 = arith.addf %181, %182 : vector<1x256xf32>
    %cst_158 = arith.constant 0.000000e+00 : f32
    %184 = vector.broadcast %cst_158 : f32 to vector<1x256xf32>
    %185 = arith.maximumf %183, %184 : vector<1x256xf32>
    %186 = arith.truncf %185 : vector<1x256xf32> to vector<1x256xbf16>
    %c0_159 = arith.constant 0 : index
    %c0_160 = arith.constant 0 : index
    %187 = vector.load %arg12[%c0_159, %c0_160] : memref<256x128xbf16, #tpu.memory_space<vmem>>, vector<256x128xbf16>
    %cst_161 = arith.constant dense<0.000000e+00> : vector<1x128xf32>
    %188 = tpu.matmul %186, %187, %cst_161 {dimension_numbers = #tpu.dot_dimension_numbers<[1], [0], [0], [1], [0, 0, 1, 1], [], []>} : vector<1x256xbf16>, vector<256x128xbf16>, vector<1x128xf32> -> vector<1x128xf32>
    %c0_162 = arith.constant 0 : index
    %c0_163 = arith.constant 0 : index
    %189 = vector.load %arg13[%c0_162, %c0_163] : memref<1x128xf32, #tpu.memory_space<vmem>>, vector<1x128xf32>
    %190 = arith.addf %188, %189 : vector<1x128xf32>
    %c0_164 = arith.constant 0 : index
    %c0_165 = arith.constant 0 : index
    %c0_166 = arith.constant 0 : index
    %191 = vector.load %arg14[%c0_164, %c0_165, %c0_166] : memref<1x1x128xf32, #tpu.memory_space<vmem>>, vector<1x1x128xf32>
    %192 = vector.shape_cast %191 : vector<1x1x128xf32> to vector<1x128xf32>
    %193 = vector.shape_cast %190 : vector<1x128xf32> to vector<1x1x128xf32>
    tpu.vector_store %arg14[%c0_164, %c0_165, %c0_166], %193 {strides = array<i32>} : memref<1x1x128xf32, #tpu.memory_space<vmem>>, vector<1x1x128xf32>,
    return
  }
  func.func @transform_0(%arg0: i32) -> (i32, i32, i32) {
    %c0_i32 = arith.constant 0 : i32
    %c0_i32_0 = arith.constant 0 : i32
    %c0_i32_1 = arith.constant 0 : i32
    return %arg0, %c0_i32, %c0_i32_0 : i32, i32, i32
  }
  func.func @transform_1(%arg0: i32) -> (i32, i32, i32) {
    %c0_i32 = arith.constant 0 : i32
    %c0_i32_0 = arith.constant 0 : i32
    %c0_i32_1 = arith.constant 0 : i32
    %c0_i32_2 = arith.constant 0 : i32
    return %c0_i32, %c0_i32_0, %c0_i32_1 : i32, i32, i32
  }
  func.func @transform_2(%arg0: i32) -> (i32, i32, i32) {
    %c0_i32 = arith.constant 0 : i32
    %c0_i32_0 = arith.constant 0 : i32
    %c0_i32_1 = arith.constant 0 : i32
    %c0_i32_2 = arith.constant 0 : i32
    return %c0_i32, %c0_i32_0, %c0_i32_1 : i32, i32, i32
  }
  func.func @transform_3(%arg0: i32) -> (i32, i32) {
    %c0_i32 = arith.constant 0 : i32
    %c0_i32_0 = arith.constant 0 : i32
    %c0_i32_1 = arith.constant 0 : i32
    return %c0_i32, %c0_i32_0 : i32, i32
  }
  func.func @transform_4(%arg0: i32) -> (i32, i32, i32) {
    %c0_i32 = arith.constant 0 : i32
    %c0_i32_0 = arith.constant 0 : i32
    %c0_i32_1 = arith.constant 0 : i32
    %c0_i32_2 = arith.constant 0 : i32
    return %c0_i32, %c0_i32_0, %c0_i32_1 : i32, i32, i32
  }
  func.func @transform_5(%arg0: i32) -> (i32, i32, i32) {
    %c0_i32 = arith.constant 0 : i32
    %c0_i32_0 = arith.constant 0 : i32
    %c0_i32_1 = arith.constant 0 : i32
    %c0_i32_2 = arith.constant 0 : i32
    return %c0_i32, %c0_i32_0, %c0_i32_1 : i32, i32, i32
  }
  func.func @transform_6(%arg0: i32) -> (i32, i32) {
    %c0_i32 = arith.constant 0 : i32
    %c0_i32_0 = arith.constant 0 : i32
    %c0_i32_1 = arith.constant 0 : i32
    return %c0_i32, %c0_i32_0 : i32, i32
  }
  func.func @transform_7(%arg0: i32) -> (i32, i32, i32) {
    %c0_i32 = arith.constant 0 : i32
    %c0_i32_0 = arith.constant 0 : i32
    %c0_i32_1 = arith.constant 0 : i32
    %c0_i32_2 = arith.constant 0 : i32
    return %c0_i32, %c0_i32_0, %c0_i32_1 : i32, i32, i32
  }
  func.func @transform_8(%arg0: i32) -> (i32, i32) {
    %c0_i32 = arith.constant 0 : i32
    %c0_i32_0 = arith.constant 0 : i32
    %c0_i32_1 = arith.constant 0 : i32
    return %c0_i32, %c0_i32_0 : i32, i32
  }
  func.func @transform_9(%arg0: i32) -> (i32, i32) {
    %c0_i32 = arith.constant 0 : i32
    %c0_i32_0 = arith.constant 0 : i32
    %c0_i32_1 = arith.constant 0 : i32
    return %c0_i32, %c0_i32_0 : i32, i32
  }
  func.func @transform_10(%arg0: i32) -> (i32, i32) {
    %c0_i32 = arith.constant 0 : i32
    %c0_i32_0 = arith.constant 0 : i32
    %c0_i32_1 = arith.constant 0 : i32
    return %c0_i32, %c0_i32_0 : i32, i32
  }
  func.func @transform_11(%arg0: i32) -> (i32, i32) {
    %c0_i32 = arith.constant 0 : i32
    %c0_i32_0 = arith.constant 0 : i32
    %c0_i32_1 = arith.constant 0 : i32
    return %c0_i32, %c0_i32_0 : i32, i32
  }
  func.func @transform_12(%arg0: i32) -> (i32, i32) {
    %c0_i32 = arith.constant 0 : i32
    %c0_i32_0 = arith.constant 0 : i32
    %c0_i32_1 = arith.constant 0 : i32
    return %c0_i32, %c0_i32_0 : i32, i32
  }
  func.func @transform_13(%arg0: i32) -> (i32, i32, i32) {
    %c0_i32 = arith.constant 0 : i32
    %c0_i32_0 = arith.constant 0 : i32
    %c0_i32_1 = arith.constant 0 : i32
    return %arg0, %c0_i32, %c0_i32_0 : i32, i32, i32
  }
}

</mosaic_0001>

<llo_original>
// kernel: net_forward.1
$region0: #{net_forward.1}
  #allocation0 [shape = 'u32[]', space=smem, size = 0x4, offset = 0x4, fixed_abs, tag = 'smem constant byte address 0x4 - core index']
  #allocation1 [shape = 'u32[72,128]{1,0:T(1,128)}', space=vmem, size = 0x9000, scoped, tag = 'internal scratch']
  %s0 = inlined_call_operand.hbm [shape: f32[2,32,32], index: 0, kind: input, shape index: {}]
  %s1 = inlined_call_operand.vmem [shape: bf16[6,14,32], index: 1, kind: input, shape index: {}]
  %s2 = inlined_call_operand.hbm [shape: bf16[5,32,256], index: 2, kind: input, shape index: {}]
  %s3 = inlined_call_operand.vmem [shape: f32[1,128], index: 3, kind: input, shape index: {}]
  %s4 = inlined_call_operand.vmem [shape: bf16[6,5,14], index: 4, kind: input, shape index: {}]
  %s5 = inlined_call_operand.hbm [shape: bf16[5,128,256], index: 5, kind: input, shape index: {}]
  %s6 = inlined_call_operand.hbm [shape: f32[1,128], index: 6, kind: input, shape index: {}]
  %s7 = inlined_call_operand.hbm [shape: bf16[5,128,128], index: 7, kind: input, shape index: {}]
  %s8 = inlined_call_operand.hbm [shape: f32[1,128], index: 8, kind: input, shape index: {}]
  %s9 = inlined_call_operand.hbm [shape: bf16[128,256], index: 9, kind: input, shape index: {}]
  %s10 = inlined_call_operand.vmem [shape: f32[1,256], index: 10, kind: input, shape index: {}]
  %s11 = inlined_call_operand.hbm [shape: bf16[256,128], index: 11, kind: input, shape index: {}]
  %s12 = inlined_call_operand.hbm [shape: f32[1,128], index: 12, kind: input, shape index: {}]
  %s13 = inlined_call_operand.hbm [shape: f32[2,1,128], index: 13, kind: output, shape index: {}]
  %s14 = sld [smem:[#allocation0]]
  $region121: #{net_forward.1} parent=0
    _
  %s16 = ssub.s32 1, %s14
  %s17 = scalar_select 0, %s16, %s14
  $region1: #{net_forward.1} parent=0
    #allocation2 [shape = 'u8[32768]{0}', space=vmem, size = 0x8000, scoped, tag = 'input window, operand 0']
    #allocation3 [shape = 's32[2]{0}', space=sflag, size = 0x8, scoped, tag = 'scoped memory for net_forward.1']
    #allocation4 [shape = 's32[2]{0}', space=sflag, size = 0x8, scoped, tag = 'scoped memory for net_forward.1']
    #allocation5 [shape = 'u8[81920]{0}', space=vmem, size = 0x14000, scoped, tag = 'input window, operand 2, single buffered']
    #allocation6 [shape = 's32[1]{0}', space=sflag, size = 0x4, scoped, tag = 'scoped memory for net_forward.1']
    #allocation7 [shape = 'u8[327680]{0}', space=vmem, size = 0x50000, scoped, tag = 'input window, operand 5, single buffered']
    #allocation8 [shape = 'u8[512]{0}', space=vmem, size = 0x400, scoped, tag = 'input window, operand 6, single buffered']
    #allocation9 [shape = 's32[1]{0}', space=sflag, size = 0x4, scoped, tag = 'scoped memory for net_forward.1']
    #allocation10 [shape = 'u8[163840]{0}', space=vmem, size = 0x28000, scoped, tag = 'input window, operand 7, single buffered']
    #allocation11 [shape = 'u8[512]{0}', space=vmem, size = 0x400, scoped, tag = 'input window, operand 8, single buffered']
    #allocation12 [shape = 's32[1]{0}', space=sflag, size = 0x4, scoped, tag = 'scoped memory for net_forward.1']
    #allocation13 [shape = 'u8[65536]{0}', space=vmem, size = 0x10000, scoped, tag = 'input window, operand 9, single buffered']
    #allocation14 [shape = 'u8[65536]{0}', space=vmem, size = 0x10000, scoped, tag = 'input window, operand 11, single buffered']
    #allocation15 [shape = 's32[1]{0}', space=sflag, size = 0x4, scoped, tag = 'scoped memory for net_forward.1']
    #allocation16 [shape = 'u8[512]{0}', space=vmem, size = 0x400, scoped, tag = 'input window, operand 12, single buffered']
    #allocation17 [shape = 'u8[1024]{0}', space=vmem, size = 0x400, scoped, tag = 'output window, operand 0']
    %18 = vsyncpa [#allocation3], 0
    %s19 = scalar_lea.sflag [#allocation3], 1
    %20 = vsyncpa %s19, 0
    %21 = vsyncpa [#allocation6], 0
    %22 = vsyncpa [#allocation9], 0
    %23 = vsyncpa [#allocation12], 0
    %24 = vsyncpa [#allocation15], 0
    %25 = vsyncpa [#allocation4], 0
    %s26 = scalar_lea.sflag [#allocation4], 1
    %27 = vsyncpa %s26, 0
    loop: start=0, step=1, limit=4
    $region2: #{net_forward.1} parent=1 // loop_pre_header
      _
    $region3: #{net_forward.1} parent=1 // loop_header
      %s29 = sphi 0, %s33
      %p30 = scmp.ge.s32.totalorder %s29, 4
      %s39 = sphi 0, %s41
      %s42 = sphi 0, %s39
      %s43 = sphi 0, %s42
      %s59 = sphi 0, %s43
      %s63 = sphi 0, %s63
      %s65 = sphi 0, %s63
      %s66 = sphi 0, %s65
      %s80 = sphi 0, %s66
      %s84 = sphi 0, %s84
      %s86 = sphi 0, %s84
      %s87 = sphi 0, %s86
      %s101 = sphi 0, %s87
      %s105 = sphi 0, %s105
      %s107 = sphi 0, %s105
      %s108 = sphi 0, %s107
      %s122 = sphi 0, %s108
      %s126 = sphi 0, %s126
      %s128 = sphi 0, %s126
      %s129 = sphi 0, %s128
      %s143 = sphi 0, %s129
      %s147 = sphi 0, %s147
      %s149 = sphi 0, %s147
      %s150 = sphi 0, %s149
      %s164 = sphi 0, %s150
      %s168 = sphi 0, %s168
      %s170 = sphi 0, %s168
      %s171 = sphi 0, %s170
      %s185 = sphi 0, %s171
      %s189 = sphi 0, %s189
      %s191 = sphi 0, %s189
      %s192 = sphi 0, %s191
      %s206 = sphi 0, %s192
      %s210 = sphi 0, %s210
      %s212 = sphi 0, %s210
      %s213 = sphi 0, %s212
      %s227 = sphi 0, %s213
      %s231 = sphi 0, %s231
      %s233 = sphi 0, %s231
      %s234 = sphi 0, %s233
      %s248 = sphi 0, %s234
      %s252 = sphi 0, %s252
      %s254 = sphi 0, %s252
      %s255 = sphi 0, %s254
      %s269 = sphi 0, %s255
      %s273 = sphi 0, %s273
      %s275 = sphi 0, %s273
      %s276 = sphi 0, %s275
      %s290 = sphi 0, %s276
      %s294 = sphi 0, %s294
      %s296 = sphi 0, %s294
      %s297 = sphi 0, %s296
      %s311 = sphi 0, %s297
      %s317 = sphi 0, %s319
      %s320 = sphi 0, %s317
      %s321 = sphi 0, %s320
      %s337 = sphi 0, %s321
    $region4: #{net_forward.1} parent=1 // loop_header_branch
      %32 = sbr.rel (%p30) target = $region8
    $region5: #{net_forward.1} parent=1 // loop_body
      %s34 = ssub.s32 %s29, 1
      %s35 = ssub.s32 %s29, 2
      %s36 = sadd.s32 %s29, 1
      %s37 = ssub.s32 %s29, %s36
      %p38 = scmp.eq.s32.totalorder %s37, 0
      %s40 = sadd.s32 %s39, 1
      %s41 = scalar_select %p38, %s39, %s40
      %p44 = pneg %p38
      %p45 = scmp.eq.s32.totalorder %s29, 1
      %p46 = por %p44, %p45
      %p47 = scmp.ne.s32.totalorder %s39, %s42
      %p48 = scmp.eq.s32.totalorder %s29, 0
      %p49 = por %p47, %p48
      %p50 = scmp.ne.s32.totalorder %s39, %s42
      %p51 = scmp.eq.s32.totalorder %s34, 1
      %p52 = por %p50, %p51
      %p53 = scmp.ne.s32.totalorder %s42, %s43
      %p54 = scmp.eq.s32.totalorder %s34, 0
      %p55 = por %p53, %p54
      %p56 = scmp.ne.s32.totalorder %s42, %s43
      %p57 = scmp.eq.s32.totalorder %s35, 1
      %p58 = por %p56, %p57
      %p60 = scmp.ne.s32.totalorder %s43, %s59
      %p61 = scmp.eq.s32.totalorder %s35, 0
      %p62 = por %p60, %p61
      %s64 = sadd.s32 %s63, 1
      %p67 = scmp.eq.s32.totalorder %s29, 1
      %p68 = scmp.ne.s32.totalorder %s63, %s65
      %p69 = scmp.eq.s32.totalorder %s29, 0
      %p70 = por %p68, %p69
      %p71 = scmp.ne.s32.totalorder %s63, %s65
      %p72 = scmp.eq.s32.totalorder %s34, 1
      %p73 = por %p71, %p72
      %p74 = scmp.ne.s32.totalorder %s65, %s66
      %p75 = scmp.eq.s32.totalorder %s34, 0
      %p76 = por %p74, %p75
      %p77 = scmp.ne.s32.totalorder %s65, %s66
      %p78 = scmp.eq.s32.totalorder %s35, 1
      %p79 = por %p77, %p78
      %p81 = scmp.ne.s32.totalorder %s66, %s80
      %p82 = scmp.eq.s32.totalorder %s35, 0
      %p83 = por %p81, %p82
      %s85 = sadd.s32 %s84, 1
      %p88 = scmp.eq.s32.totalorder %s29, 1
      %p89 = scmp.ne.s32.totalorder %s84, %s86
      %p90 = scmp.eq.s32.totalorder %s29, 0
      %p91 = por %p89, %p90
      %p92 = scmp.ne.s32.totalorder %s84, %s86
      %p93 = scmp.eq.s32.totalorder %s34, 1
      %p94 = por %p92, %p93
      %p95 = scmp.ne.s32.totalorder %s86, %s87
      %p96 = scmp.eq.s32.totalorder %s34, 0
      %p97 = por %p95, %p96
      %p98 = scmp.ne.s32.totalorder %s86, %s87
      %p99 = scmp.eq.s32.totalorder %s35, 1
      %p100 = por %p98, %p99
      %p102 = scmp.ne.s32.totalorder %s87, %s101
      %p103 = scmp.eq.s32.totalorder %s35, 0
      %p104 = por %p102, %p103
      %s106 = sadd.s32 %s105, 1
      %p109 = scmp.eq.s32.totalorder %s29, 1
      %p110 = scmp.ne.s32.totalorder %s105, %s107
      %p111 = scmp.eq.s32.totalorder %s29, 0
      %p112 = por %p110, %p111
      %p113 = scmp.ne.s32.totalorder %s105, %s107
      %p114 = scmp.eq.s32.totalorder %s34, 1
      %p115 = por %p113, %p114
      %p116 = scmp.ne.s32.totalorder %s107, %s108
      %p117 = scmp.eq.s32.totalorder %s34, 0
      %p118 = por %p116, %p117
      %p119 = scmp.ne.s32.totalorder %s107, %s108
      %p120 = scmp.eq.s32.totalorder %s35, 1
      %p121 = por %p119, %p120
      %p123 = scmp.ne.s32.totalorder %s108, %s122
      %p124 = scmp.eq.s32.totalorder %s35, 0
      %p125 = por %p123, %p124
      %s127 = sadd.s32 %s126, 1
      %p130 = scmp.eq.s32.totalorder %s29, 1
      %p131 = scmp.ne.s32.totalorder %s126, %s128
      %p132 = scmp.eq.s32.totalorder %s29, 0
      %p133 = por %p131, %p132
      %p134 = scmp.ne.s32.totalorder %s126, %s128
      %p135 = scmp.eq.s32.totalorder %s34, 1
      %p136 = por %p134, %p135
      %p137 = scmp.ne.s32.totalorder %s128, %s129
      %p138 = scmp.eq.s32.totalorder %s34, 0
      %p139 = por %p137, %p138
      %p140 = scmp.ne.s32.totalorder %s128, %s129
      %p141 = scmp.eq.s32.totalorder %s35, 1
      %p142 = por %p140, %p141
      %p144 = scmp.ne.s32.totalorder %s129, %s143
      %p145 = scmp.eq.s32.totalorder %s35, 0
      %p146 = por %p144, %p145
      %s148 = sadd.s32 %s147, 1
      %p151 = scmp.eq.s32.totalorder %s29, 1
      %p152 = scmp.ne.s32.totalorder %s147, %s149
      %p153 = scmp.eq.s32.totalorder %s29, 0
      %p154 = por %p152, %p153
      %p155 = scmp.ne.s32.totalorder %s147, %s149
      %p156 = scmp.eq.s32.totalorder %s34, 1
      %p157 = por %p155, %p156
      %p158 = scmp.ne.s32.totalorder %s149, %s150
      %p159 = scmp.eq.s32.totalorder %s34, 0
      %p160 = por %p158, %p159
      %p161 = scmp.ne.s32.totalorder %s149, %s150
      %p162 = scmp.eq.s32.totalorder %s35, 1
      %p163 = por %p161, %p162
      %p165 = scmp.ne.s32.totalorder %s150, %s164
      %p166 = scmp.eq.s32.totalorder %s35, 0
      %p167 = por %p165, %p166
      %s169 = sadd.s32 %s168, 1
      %p172 = scmp.eq.s32.totalorder %s29, 1
      %p173 = scmp.ne.s32.totalorder %s168, %s170
      %p174 = scmp.eq.s32.totalorder %s29, 0
      %p175 = por %p173, %p174
      %p176 = scmp.ne.s32.totalorder %s168, %s170
      %p177 = scmp.eq.s32.totalorder %s34, 1
      %p178 = por %p176, %p177
      %p179 = scmp.ne.s32.totalorder %s170, %s171
      %p180 = scmp.eq.s32.totalorder %s34, 0
      %p181 = por %p179, %p180
      %p182 = scmp.ne.s32.totalorder %s170, %s171
      %p183 = scmp.eq.s32.totalorder %s35, 1
      %p184 = por %p182, %p183
      %p186 = scmp.ne.s32.totalorder %s171, %s185
      %p187 = scmp.eq.s32.totalorder %s35, 0
      %p188 = por %p186, %p187
      %s190 = sadd.s32 %s189, 1
      %p193 = scmp.eq.s32.totalorder %s29, 1
      %p194 = scmp.ne.s32.totalorder %s189, %s191
      %p195 = scmp.eq.s32.totalorder %s29, 0
      %p196 = por %p194, %p195
      %p197 = scmp.ne.s32.totalorder %s189, %s191
      %p198 = scmp.eq.s32.totalorder %s34, 1
      %p199 = por %p197, %p198
      %p200 = scmp.ne.s32.totalorder %s191, %s192
      %p201 = scmp.eq.s32.totalorder %s34, 0
      %p202 = por %p200, %p201
      %p203 = scmp.ne.s32.totalorder %s191, %s192
      %p204 = scmp.eq.s32.totalorder %s35, 1
      %p205 = por %p203, %p204
      %p207 = scmp.ne.s32.totalorder %s192, %s206
      %p208 = scmp.eq.s32.totalorder %s35, 0
      %p209 = por %p207, %p208
      %s211 = sadd.s32 %s210, 1
      %p214 = scmp.eq.s32.totalorder %s29, 1
      %p215 = scmp.ne.s32.totalorder %s210, %s212
      %p216 = scmp.eq.s32.totalorder %s29, 0
      %p217 = por %p215, %p216
      %p218 = scmp.ne.s32.totalorder %s210, %s212
      %p219 = scmp.eq.s32.totalorder %s34, 1
      %p220 = por %p218, %p219
      %p221 = scmp.ne.s32.totalorder %s212, %s213
      %p222 = scmp.eq.s32.totalorder %s34, 0
      %p223 = por %p221, %p222
      %p224 = scmp.ne.s32.totalorder %s212, %s213
      %p225 = scmp.eq.s32.totalorder %s35, 1
      %p226 = por %p224, %p225
      %p228 = scmp.ne.s32.totalorder %s213, %s227
      %p229 = scmp.eq.s32.totalorder %s35, 0
      %p230 = por %p228, %p229
      %s232 = sadd.s32 %s231, 1
      %p235 = scmp.eq.s32.totalorder %s29, 1
      %p236 = scmp.ne.s32.totalorder %s231, %s233
      %p237 = scmp.eq.s32.totalorder %s29, 0
      %p238 = por %p236, %p237
      %p239 = scmp.ne.s32.totalorder %s231, %s233
      %p240 = scmp.eq.s32.totalorder %s34, 1
      %p241 = por %p239, %p240
      %p242 = scmp.ne.s32.totalorder %s233, %s234
      %p243 = scmp.eq.s32.totalorder %s34, 0
      %p244 = por %p242, %p243
      %p245 = scmp.ne.s32.totalorder %s233, %s234
      %p246 = scmp.eq.s32.totalorder %s35, 1
      %p247 = por %p245, %p246
      %p249 = scmp.ne.s32.totalorder %s234, %s248
      %p250 = scmp.eq.s32.totalorder %s35, 0
      %p251 = por %p249, %p250
      %s253 = sadd.s32 %s252, 1
      %p256 = scmp.eq.s32.totalorder %s29, 1
      %p257 = scmp.ne.s32.totalorder %s252, %s254
      %p258 = scmp.eq.s32.totalorder %s29, 0
      %p259 = por %p257, %p258
      %p260 = scmp.ne.s32.totalorder %s252, %s254
      %p261 = scmp.eq.s32.totalorder %s34, 1
      %p262 = por %p260, %p261
      %p263 = scmp.ne.s32.totalorder %s254, %s255
      %p264 = scmp.eq.s32.totalorder %s34, 0
      %p265 = por %p263, %p264
      %p266 = scmp.ne.s32.totalorder %s254, %s255
      %p267 = scmp.eq.s32.totalorder %s35, 1
      %p268 = por %p266, %p267
      %p270 = scmp.ne.s32.totalorder %s255, %s269
      %p271 = scmp.eq.s32.totalorder %s35, 0
      %p272 = por %p270, %p271
      %s274 = sadd.s32 %s273, 1
      %p277 = scmp.eq.s32.totalorder %s29, 1
      %p278 = scmp.ne.s32.totalorder %s273, %s275
      %p279 = scmp.eq.s32.totalorder %s29, 0
      %p280 = por %p278, %p279
      %p281 = scmp.ne.s32.totalorder %s273, %s275
      %p282 = scmp.eq.s32.totalorder %s34, 1
      %p283 = por %p281, %p282
      %p284 = scmp.ne.s32.totalorder %s275, %s276
      %p285 = scmp.eq.s32.totalorder %s34, 0
      %p286 = por %p284, %p285
      %p287 = scmp.ne.s32.totalorder %s275, %s276
      %p288 = scmp.eq.s32.totalorder %s35, 1
      %p289 = por %p287, %p288
      %p291 = scmp.ne.s32.totalorder %s276, %s290
      %p292 = scmp.eq.s32.totalorder %s35, 0
      %p293 = por %p291, %p292
      %s295 = sadd.s32 %s294, 1
      %p298 = scmp.eq.s32.totalorder %s29, 1
      %p299 = scmp.ne.s32.totalorder %s294, %s296
      %p300 = scmp.eq.s32.totalorder %s29, 0
      %p301 = por %p299, %p300
      %p302 = scmp.ne.s32.totalorder %s294, %s296
      %p303 = scmp.eq.s32.totalorder %s34, 1
      %p304 = por %p302, %p303
      %p305 = scmp.ne.s32.totalorder %s296, %s297
      %p306 = scmp.eq.s32.totalorder %s34, 0
      %p307 = por %p305, %p306
      %p308 = scmp.ne.s32.totalorder %s296, %s297
      %p309 = scmp.eq.s32.totalorder %s35, 1
      %p310 = por %p308, %p309
      %p312 = scmp.ne.s32.totalorder %s297, %s311
      %p313 = scmp.eq.s32.totalorder %s35, 0
      %p314 = por %p312, %p313
      %s315 = ssub.s32 %s29, %s36
      %p316 = scmp.eq.s32.totalorder %s315, 0
      %s318 = sadd.s32 %s317, 1
      %s319 = scalar_select %p316, %s317, %s318
      %p322 = pneg %p316
      %p323 = scmp.eq.s32.totalorder %s29, 1
      %p324 = por %p322, %p323
      %p325 = scmp.ne.s32.totalorder %s317, %s320
      %p326 = scmp.eq.s32.totalorder %s29, 0
      %p327 = por %p325, %p326
      %p328 = scmp.ne.s32.totalorder %s317, %s320
      %p329 = scmp.eq.s32.totalorder %s34, 1
      %p330 = por %p328, %p329
      %p331 = scmp.ne.s32.totalorder %s320, %s321
      %p332 = scmp.eq.s32.totalorder %s34, 0
      %p333 = por %p331, %p332
      %p334 = scmp.ne.s32.totalorder %s320, %s321
      %p335 = scmp.eq.s32.totalorder %s35, 1
      %p336 = por %p334, %p335
      %p338 = scmp.ne.s32.totalorder %s321, %s337
      %p339 = scmp.eq.s32.totalorder %s35, 0
      %p340 = por %p338, %p339
      %p341 = scmp.le.s32.totalorder 1, %s29
      %p342 = scmp.lt.s32.totalorder %s29, 3
      %p343 = pnand %p341, %p342
      %p344 = pneg %p343
      // Predicated region
      $region9: #{net_forward.1} parent=5 // pred_check
        _
      $region10: #{net_forward.1} parent=5 // pred_check_branch
        %346 = sbr.rel (%p343) target = $region12
      $region11: #{net_forward.1} parent=5 // pred_region
        %s347 = ssub.s32 %s29, 1
        // Predicated region
        $region13: #{net_forward.1} parent=11 // pred_check
          %p348 = pneg %p76
        $region14: #{net_forward.1} parent=11 // pred_check_branch
          %350 = sbr.rel (%p348) target = $region16
        $region15: #{net_forward.1} parent=11 // pred_region
          _
        $region16: #{net_forward.1} parent=11 // pred_fallthru
          _
        // Predicated region
        $region17: #{net_forward.1} parent=11 // pred_check
          %p351 = pneg %p97
        $region18: #{net_forward.1} parent=11 // pred_check_branch
          %353 = sbr.rel (%p351) target = $region20
        $region19: #{net_forward.1} parent=11 // pred_region
          %355 = vsyncadd [#allocation6], 0
          %s356 = sshll.u32 %s2, 4
          %s357 = int_to_ptr.hbm [resolvable:$true] %s356
          %s358 = sshll.u32 [#allocation5], 4
          %s359 = int_to_ptr.vmem [resolvable:$true] %s358
          %364 = dma.hbm_to_vmem [thread:$0]  %s357, 2560, %s359, [#allocation6], 128, 128, 8
        $region20: #{net_forward.1} parent=11 // pred_fallthru
          _
        // Predicated region
        $region21: #{net_forward.1} parent=11 // pred_check
          %p365 = pneg %p118
        $region22: #{net_forward.1} parent=11 // pred_check_branch
          %367 = sbr.rel (%p365) target = $region24
        $region23: #{net_forward.1} parent=11 // pred_region
          _
        $region24: #{net_forward.1} parent=11 // pred_fallthru
          _
        // Predicated region
        $region25: #{net_forward.1} parent=11 // pred_check
          %p368 = pneg %p139
        $region26: #{net_forward.1} parent=11 // pred_check_branch
          %370 = sbr.rel (%p368) target = $region28
        $region27: #{net_forward.1} parent=11 // pred_region
          _
        $region28: #{net_forward.1} parent=11 // pred_fallthru
          _
        // Predicated region
        $region29: #{net_forward.1} parent=11 // pred_check
          %p371 = pneg %p160
        $region30: #{net_forward.1} parent=11 // pred_check_branch
          %373 = sbr.rel (%p371) target = $region32
        $region31: #{net_forward.1} parent=11 // pred_region
          %375 = vsyncadd [#allocation6], 0
          %s376 = sshll.u32 %s5, 4
          %s377 = int_to_ptr.hbm [resolvable:$true] %s376
          %s378 = sshll.u32 [#allocation7], 4
          %s379 = int_to_ptr.vmem [resolvable:$true] %s378
          %384 = dma.hbm_to_vmem [thread:$0]  %s377, 10240, %s379, [#allocation6], 128, 128, 8
        $region32: #{net_forward.1} parent=11 // pred_fallthru
          _
        // Predicated region
        $region33: #{net_forward.1} parent=11 // pred_check
          %p385 = pneg %p181
        $region34: #{net_forward.1} parent=11 // pred_check_branch
          %387 = sbr.rel (%p385) target = $region36
        $region35: #{net_forward.1} parent=11 // pred_region
          %389 = vsyncadd [#allocation9], 0
          %s391 = sshll.u32 %s6, 4
          %s392 = int_to_ptr.hbm [resolvable:$true] %s391
          %s393 = sshll.u32 [#allocation8], 4
          %s394 = int_to_ptr.vmem [resolvable:$true] %s393
          %396 = dma.hbm_to_vmem [thread:$0]  %s392, 16, %s394, [#allocation9]
        $region36: #{net_forward.1} parent=11 // pred_fallthru
          _
        // Predicated region
        $region37: #{net_forward.1} parent=11 // pred_check
          %p397 = pneg %p202
        $region38: #{net_forward.1} parent=11 // pred_check_branch
          %399 = sbr.rel (%p397) target = $region40
        $region39: #{net_forward.1} parent=11 // pred_region
          %401 = vsyncadd [#allocation9], 0
          %s402 = sshll.u32 %s7, 4
          %s403 = int_to_ptr.hbm [resolvable:$true] %s402
          %s404 = sshll.u32 [#allocation10], 4
          %s405 = int_to_ptr.vmem [resolvable:$true] %s404
          %410 = dma.hbm_to_vmem [thread:$0]  %s403, 5120, %s405, [#allocation9], 64, 64, 4
        $region40: #{net_forward.1} parent=11 // pred_fallthru
          _
        // Predicated region
        $region41: #{net_forward.1} parent=11 // pred_check
          %p411 = pneg %p223
        $region42: #{net_forward.1} parent=11 // pred_check_branch
          %413 = sbr.rel (%p411) target = $region44
        $region43: #{net_forward.1} parent=11 // pred_region
          %415 = vsyncadd [#allocation12], 0
          %s417 = sshll.u32 %s8, 4
          %s418 = int_to_ptr.hbm [resolvable:$true] %s417
          %s419 = sshll.u32 [#allocation11], 4
          %s420 = int_to_ptr.vmem [resolvable:$true] %s419
          %422 = dma.hbm_to_vmem [thread:$0]  %s418, 16, %s420, [#allocation12]
        $region44: #{net_forward.1} parent=11 // pred_fallthru
          _
        // Predicated region
        $region45: #{net_forward.1} parent=11 // pred_check
          %p423 = pneg %p244
        $region46: #{net_forward.1} parent=11 // pred_check_branch
          %425 = sbr.rel (%p423) target = $region48
        $region47: #{net_forward.1} parent=11 // pred_region
          %427 = vsyncadd [#allocation12], 0
          %s428 = sshll.u32 %s9, 4
          %s429 = int_to_ptr.hbm [resolvable:$true] %s428
          %s430 = sshll.u32 [#allocation13], 4
          %s431 = int_to_ptr.vmem [resolvable:$true] %s430
          %436 = dma.hbm_to_vmem [thread:$0]  %s429, 2048, %s431, [#allocation12], 128, 128, 8
        $region48: #{net_forward.1} parent=11 // pred_fallthru
          _
        // Predicated region
        $region49: #{net_forward.1} parent=11 // pred_check
          %p437 = pneg %p265
        $region50: #{net_forward.1} parent=11 // pred_check_branch
          %439 = sbr.rel (%p437) target = $region52
        $region51: #{net_forward.1} parent=11 // pred_region
          _
        $region52: #{net_forward.1} parent=11 // pred_fallthru
          _
        // Predicated region
        $region53: #{net_forward.1} parent=11 // pred_check
          %p440 = pneg %p286
        $region54: #{net_forward.1} parent=11 // pred_check_branch
          %442 = sbr.rel (%p440) target = $region56
        $region55: #{net_forward.1} parent=11 // pred_region
          %444 = vsyncadd [#allocation15], 0
          %s445 = sshll.u32 %s11, 4
          %s446 = int_to_ptr.hbm [resolvable:$true] %s445
          %s447 = sshll.u32 [#allocation14], 4
          %s448 = int_to_ptr.vmem [resolvable:$true] %s447
          %453 = dma.hbm_to_vmem [thread:$0]  %s446, 2048, %s448, [#allocation15], 64, 64, 4
        $region56: #{net_forward.1} parent=11 // pred_fallthru
          _
        // Predicated region
        $region57: #{net_forward.1} parent=11 // pred_check
          %p454 = pneg %p307
        $region58: #{net_forward.1} parent=11 // pred_check_branch
          %456 = sbr.rel (%p454) target = $region60
        $region59: #{net_forward.1} parent=11 // pred_region
          %458 = vsyncadd [#allocation15], 0
          %s460 = sshll.u32 %s12, 4
          %s461 = int_to_ptr.hbm [resolvable:$true] %s460
          %s462 = sshll.u32 [#allocation16], 4
          %s463 = int_to_ptr.vmem [resolvable:$true] %s462
          %465 = dma.hbm_to_vmem [thread:$0]  %s461, 16, %s463, [#allocation15]
        $region60: #{net_forward.1} parent=11 // pred_fallthru
          _
      $region12: #{net_forward.1} parent=5 // pred_fallthru
        _
      %p466 = scmp.lt.s32.totalorder %s29, 2
      // Predicated region
      $region61: #{net_forward.1} parent=5 // pred_check
        %p467 = pneg %p466
      $region62: #{net_forward.1} parent=5 // pred_check_branch
        %469 = sbr.rel (%p467) target = $region64
      $region63: #{net_forward.1} parent=5 // pred_region
        // Predicated region
        $region65: #{net_forward.1} parent=63 // pred_check
          %p470 = pneg %p49
        $region66: #{net_forward.1} parent=63 // pred_check_branch
          %472 = sbr.rel (%p470) target = $region68
        $region67: #{net_forward.1} parent=63 // pred_region
          %s473 = sand.u32 %s39, 1
          %s474 = scalar_lea.sflag [#allocation3], %s473
          %s475 = sand.u32 %s39, 1
          %s476 = smul.addr %s475, 32
          %s477 = scalar_lea.vmem [#allocation2], %s476
          %479 = vsyncadd %s474, 0
          %s480 = smul.addr %s29, 4
          %s481 = smul.addr %s480, 8
          %s482 = scalar_lea.hbm %s0, %s481
          %s483 = sshll.u32 %s482, 4
          %s484 = int_to_ptr.hbm [resolvable:$true] %s483
          %s485 = sshll.u32 %s477, 4
          %s486 = int_to_ptr.vmem [resolvable:$true] %s485
          %491 = dma.hbm_to_vmem [thread:$0]  %s484, 512, %s486, %s474, 128, 128, 8
        $region68: #{net_forward.1} parent=63 // pred_fallthru
          _
      $region64: #{net_forward.1} parent=5 // pred_fallthru
        _
      %p492 = scmp.le.s32.totalorder 1, %s29
      %p493 = scmp.lt.s32.totalorder %s29, 3
      %p494 = pnand %p492, %p493
      %p495 = pneg %p494
      // Predicated region
      $region69: #{net_forward.1} parent=5 // pred_check
        _
      $region70: #{net_forward.1} parent=5 // pred_check_branch
        %497 = sbr.rel (%p494) target = $region72
      $region71: #{net_forward.1} parent=5 // pred_region
        %s498 = ssub.s32 %s29, 1
        %s499 = sand.u32 %s42, 1
        %s500 = scalar_lea.sflag [#allocation3], %s499
        %s501 = sand.u32 %s42, 1
        %s502 = smul.addr %s501, 32
        %s503 = scalar_lea.vmem [#allocation2], %s502
        // Predicated region
        $region73: #{net_forward.1} parent=71 // pred_check
          %p504 = pneg %p55
        $region74: #{net_forward.1} parent=71 // pred_check_branch
          %506 = sbr.rel (%p504) target = $region76
        $region75: #{net_forward.1} parent=71 // pred_region
          %508 = dma.done %s500, 512
        $region76: #{net_forward.1} parent=71 // pred_fallthru
          _
        // Predicated region
        $region77: #{net_forward.1} parent=71 // pred_check
          %p509 = pneg %p97
        $region78: #{net_forward.1} parent=71 // pred_check_branch
          %511 = sbr.rel (%p509) target = $region80
        $region79: #{net_forward.1} parent=71 // pred_region
          %513 = dma.done [#allocation6], 2560
        $region80: #{net_forward.1} parent=71 // pred_fallthru
          _
        // Predicated region
        $region81: #{net_forward.1} parent=71 // pred_check
          %p514 = pneg %p160
        $region82: #{net_forward.1} parent=71 // pred_check_branch
          %516 = sbr.rel (%p514) target = $region84
        $region83: #{net_forward.1} parent=71 // pred_region
          %518 = dma.done [#allocation6], 10240
        $region84: #{net_forward.1} parent=71 // pred_fallthru
          _
        // Predicated region
        $region85: #{net_forward.1} parent=71 // pred_check
          %p519 = pneg %p181
        $region86: #{net_forward.1} parent=71 // pred_check_branch
          %521 = sbr.rel (%p519) target = $region88
        $region87: #{net_forward.1} parent=71 // pred_region
          %523 = dma.done [#allocation9], 16
        $region88: #{net_forward.1} parent=71 // pred_fallthru
          _
        // Predicated region
        $region89: #{net_forward.1} parent=71 // pred_check
          %p524 = pneg %p202
        $region90: #{net_forward.1} parent=71 // pred_check_branch
          %526 = sbr.rel (%p524) target = $region92
        $region91: #{net_forward.1} parent=71 // pred_region
          %528 = dma.done [#allocation9], 5120
        $region92: #{net_forward.1} parent=71 // pred_fallthru
          _
        // Predicated region
        $region93: #{net_forward.1} parent=71 // pred_check
          %p529 = pneg %p223
        $region94: #{net_forward.1} parent=71 // pred_check_branch
          %531 = sbr.rel (%p529) target = $region96
        $region95: #{net_forward.1} parent=71 // pred_region
          %533 = dma.done [#allocation12], 16
        $region96: #{net_forward.1} parent=71 // pred_fallthru
          _
        // Predicated region
        $region97: #{net_forward.1} parent=71 // pred_check
          %p534 = pneg %p244
        $region98: #{net_forward.1} parent=71 // pred_check_branch
          %536 = sbr.rel (%p534) target = $region100
        $region99: #{net_forward.1} parent=71 // pred_region
          %538 = dma.done [#allocation12], 2048
        $region100: #{net_forward.1} parent=71 // pred_fallthru
          _
        // Predicated region
        $region101: #{net_forward.1} parent=71 // pred_check
          %p539 = pneg %p286
        $region102: #{net_forward.1} parent=71 // pred_check_branch
          %541 = sbr.rel (%p539) target = $region104
        $region103: #{net_forward.1} parent=71 // pred_region
          %543 = dma.done [#allocation15], 2048
        $region104: #{net_forward.1} parent=71 // pred_fallthru
          _
        // Predicated region
        $region105: #{net_forward.1} parent=71 // pred_check
          %p544 = pneg %p307
        $region106: #{net_forward.1} parent=71 // pred_check_branch
          %546 = sbr.rel (%p544) target = $region108
        $region107: #{net_forward.1} parent=71 // pred_region
          %548 = dma.done [#allocation15], 16
        $region108: #{net_forward.1} parent=71 // pred_fallthru
          _
        %s549 = sand.u32 %s42, 1
        %s550 = scalar_lea.sflag [#allocation3], %s549
        %s551 = sand.u32 %s42, 1
        %s552 = smul.addr %s551, 32
        %s553 = scalar_lea.vmem [#allocation2], %s552
        %p554 = pneg %p55
        %p555 = pneg %p52
        %p556 = pneg %p76
        %p557 = pneg %p73
        %p558 = pneg %p97
        %p559 = pneg %p94
        %p560 = pneg %p118
        %p561 = pneg %p115
        %p562 = pneg %p139
        %p563 = pneg %p136
        %p564 = pneg %p160
        %p565 = pneg %p157
        %p566 = pneg %p181
        %p567 = pneg %p178
        %p568 = pneg %p202
        %p569 = pneg %p199
        %p570 = pneg %p223
        %p571 = pneg %p220
        %p572 = pneg %p244
        %p573 = pneg %p241
        %p574 = pneg %p265
        %p575 = pneg %p262
        %p576 = pneg %p286
        %p577 = pneg %p283
        %p578 = pneg %p307
        %p579 = pneg %p304
        %p580 = pneg %p333
        %p581 = pneg %p330
        %s582 = sand.u32 %s320, 1
        %s583 = scalar_lea.sflag [#allocation4], %s582
        %s584 = sand.u32 %s320, 1
        %s585 = scalar_lea.vmem [#allocation17], %s584
        %v587 = vld [vmem:[%s503] sm:$0xff]
        %v588 = vld [vmem:[%s503 + $0x8] sm:$0xff]
        %v589 = vld [vmem:[%s503 + $0x10] sm:$0xff]
        %v590 = vld [vmem:[%s503 + $0x18] sm:$0xff]
        %v591 = vpack.c.bf16 %v588, %v587
        %v592 = vpack.c.bf16 %v590, %v589
        %v593 = vld [vmem:[%s1] sm:$0xf]
        %v594 = vld [vmem:[%s1 + $0x4] sm:$0x7]
        %v597 = vunpack.c.l.b16 %v593
        %v598 = vunpack.c.l.b16 %v594
        %v599 = vpack.c.b16 %v598, %v597
        %vm600 = vcmask 261120
        %v602 = vsel %vm600, %v599, 0
        %604 = vmatpush.bf16.msra.mxu0 0
        %605 = vmatpush.bf16.msra.mxu0 0
        %606 = vmatpush.bf16.msra.mxu0 0
        %607 = vmatpush.bf16.msra.mxu0 0
        %608 = vmatpush.bf16.msra.mxu0 0
        %609 = vmatpush.bf16.msra.mxu0 0
        %610 = vmatpush.bf16.msra.mxu0 %v592
        %611 = vmatpush.bf16.msra.mxu0 %v591
        %612 = vmatmul.bf16.gmra.mxu0 %v602
        %v613 = vpop.f32.mrf.mxu0
        %v614 = vadd.f32 0.0, %v613
        %v615 = vpop.f32.mrf.mxu0
        %v616 = vadd.f32 0.0, %v615
        %617 = vdwg.mxu0
        %v618 = vpack.c.bf16 %v616, %v614
        %s619 = scalar_lea.vmem %s1, 8
        %v620 = vld [vmem:[%s619] sm:$0xf]
        %v621 = vld [vmem:[%s619 + $0x4] sm:$0x7]
        %v624 = vunpack.c.l.b16 %v620
        %v625 = vunpack.c.l.b16 %v621
        %v626 = vpack.c.b16 %v625, %v624
        %v628 = vsel %vm600, %v626, 0
        %630 = vmatpush.bf16.msra.mxu0 0
        %631 = vmatpush.bf16.msra.mxu0 0
        %632 = vmatpush.bf16.msra.mxu0 0
        %633 = vmatpush.bf16.msra.mxu0 0
        %634 = vmatpush.bf16.msra.mxu0 0
        %635 = vmatpush.bf16.msra.mxu0 0
        %636 = vmatpush.bf16.msra.mxu0 %v592
        %637 = vmatpush.bf16.msra.mxu0 %v591
        %638 = vmatmul.bf16.gmra.mxu0 %v628
        %v639 = vpop.f32.mrf.mxu0
        %v640 = vadd.f32 0.0, %v639
        %v641 = vpop.f32.mrf.mxu0
        %v642 = vadd.f32 0.0, %v641
        %643 = vdwg.mxu0
        %v644 = vpack.c.bf16 %v642, %v640
        %s645 = scalar_lea.vmem %s1, 16
        %v646 = vld [vmem:[%s645] sm:$0xf]
        %v647 = vld [vmem:[%s645 + $0x4] sm:$0x7]
        %v650 = vunpack.c.l.b16 %v646
        %v651 = vunpack.c.l.b16 %v647
        %v652 = vpack.c.b16 %v651, %v650
        %v654 = vsel %vm600, %v652, 0
        %656 = vmatpush.bf16.msra.mxu0 0
        %657 = vmatpush.bf16.msra.mxu0 0
        %658 = vmatpush.bf16.msra.mxu0 0
        %659 = vmatpush.bf16.msra.mxu0 0
        %660 = vmatpush.bf16.msra.mxu0 0
        %661 = vmatpush.bf16.msra.mxu0 0
        %662 = vmatpush.bf16.msra.mxu0 %v592
        %663 = vmatpush.bf16.msra.mxu0 %v591
        %664 = vmatmul.bf16.gmra.mxu0 %v654
        %v665 = vpop.f32.mrf.mxu0
        %v666 = vadd.f32 0.0, %v665
        %v667 = vpop.f32.mrf.mxu0
        %v668 = vadd.f32 0.0, %v667
        %669 = vdwg.mxu0
        %v670 = vpack.c.bf16 %v668, %v666
        %s671 = scalar_lea.vmem %s1, 24
        %v672 = vld [vmem:[%s671] sm:$0xf]
        %v673 = vld [vmem:[%s671 + $0x4] sm:$0x7]
        %v676 = vunpack.c.l.b16 %v672
        %v677 = vunpack.c.l.b16 %v673
        %v678 = vpack.c.b16 %v677, %v676
        %v680 = vsel %vm600, %v678, 0
        %682 = vmatpush.bf16.msra.mxu0 0
        %683 = vmatpush.bf16.msra.mxu0 0
        %684 = vmatpush.bf16.msra.mxu0 0
        %685 = vmatpush.bf16.msra.mxu0 0
        %686 = vmatpush.bf16.msra.mxu0 0
        %687 = vmatpush.bf16.msra.mxu0 0
        %688 = vmatpush.bf16.msra.mxu0 %v592
        %689 = vmatpush.bf16.msra.mxu0 %v591
        %690 = vmatmul.bf16.gmra.mxu0 %v680
        %v691 = vpop.f32.mrf.mxu0
        %v692 = vadd.f32 0.0, %v691
        %v693 = vpop.f32.mrf.mxu0
        %v694 = vadd.f32 0.0, %v693
        %695 = vdwg.mxu0
        %v696 = vpack.c.bf16 %v694, %v692
        %s697 = scalar_lea.vmem %s1, 32
        %v698 = vld [vmem:[%s697] sm:$0xf]
        %v699 = vld [vmem:[%s697 + $0x4] sm:$0x7]
        %v702 = vunpack.c.l.b16 %v698
        %v703 = vunpack.c.l.b16 %v699
        %v704 = vpack.c.b16 %v703, %v702
        %v706 = vsel %vm600, %v704, 0
        %708 = vmatpush.bf16.msra.mxu0 0
        %709 = vmatpush.bf16.msra.mxu0 0
        %710 = vmatpush.bf16.msra.mxu0 0
        %711 = vmatpush.bf16.msra.mxu0 0
        %712 = vmatpush.bf16.msra.mxu0 0
        %713 = vmatpush.bf16.msra.mxu0 0
        %714 = vmatpush.bf16.msra.mxu0 %v592
        %715 = vmatpush.bf16.msra.mxu0 %v591
        %716 = vmatmul.bf16.gmra.mxu0 %v706
        %v717 = vpop.f32.mrf.mxu0
        %v718 = vadd.f32 0.0, %v717
        %v719 = vpop.f32.mrf.mxu0
        %v720 = vadd.f32 0.0, %v719
        %721 = vdwg.mxu0
        %v722 = vpack.c.bf16 %v720, %v718
        %s723 = scalar_lea.vmem %s1, 40
        %v724 = vld [vmem:[%s723] sm:$0xf]
        %v725 = vld [vmem:[%s723 + $0x4] sm:$0x7]
        %v728 = vunpack.c.l.b16 %v724
        %v729 = vunpack.c.l.b16 %v725
        %v730 = vpack.c.b16 %v729, %v728
        %v732 = vsel %vm600, %v730, 0
        %734 = vmatpush.bf16.msra.mxu0 0
        %735 = vmatpush.bf16.msra.mxu0 0
        %736 = vmatpush.bf16.msra.mxu0 0
        %737 = vmatpush.bf16.msra.mxu0 0
        %738 = vmatpush.bf16.msra.mxu0 0
        %739 = vmatpush.bf16.msra.mxu0 0
        %740 = vmatpush.bf16.msra.mxu0 %v592
        %741 = vmatpush.bf16.msra.mxu0 %v591
        %742 = vmatmul.bf16.gmra.mxu0 %v732
        %v743 = vpop.f32.mrf.mxu0
        %v744 = vadd.f32 0.0, %v743
        %v745 = vpop.f32.mrf.mxu0
        %v746 = vadd.f32 0.0, %v745
        %747 = vdwg.mxu0
        %v748 = vpack.c.bf16 %v746, %v744
        %v749 = vld [vmem:[#allocation5] sm:$0xff]
        %v750 = vld [vmem:[#allocation5 + $0x8] sm:$0xff]
        %v751 = vld [vmem:[#allocation5 + $0x10] sm:$0xff]
        %v752 = vld [vmem:[#allocation5 + $0x18] sm:$0xff]
        %s753 = scalar_lea.vmem [#allocation5], 32
        %v754 = vld [vmem:[%s753] sm:$0xff]
        %v755 = vld [vmem:[%s753 + $0x8] sm:$0xff]
        %v756 = vld [vmem:[%s753 + $0x10] sm:$0xff]
        %v757 = vld [vmem:[%s753 + $0x18] sm:$0xff]
        %v762 = vunpack.c.l.b16 %v754
        %v763 = vunpack.c.h.b16 %v754
        %v764 = vunpack.c.l.b16 %v755
        %v765 = vunpack.c.h.b16 %v755
        %v766 = vunpack.c.l.b16 %v756
        %v767 = vunpack.c.h.b16 %v756
        %v768 = vunpack.c.l.b16 %v757
        %v769 = vunpack.c.h.b16 %v757
        %v770 = vpack.c.b16 %v764, %v762
        %v771 = vpack.c.b16 %v765, %v763
        %v772 = vpack.c.b16 %v768, %v766
        %v773 = vpack.c.b16 %v769, %v767
        %v779 = vsel %vm600, %v644, 0
        %781 = vmatpush.bf16.msra.mxu0 0
        %782 = vmatpush.bf16.msra.mxu0 0
        %783 = vmatpush.bf16.msra.mxu0 0
        %784 = vmatpush.bf16.msra.mxu0 0
        %785 = vmatpush.bf16.msra.mxu0 0
        %786 = vmatpush.bf16.msra.mxu0 0
        %787 = vmatpush.bf16.msra.mxu0 %v772
        %788 = vmatpush.bf16.msra.mxu0 %v770
        %789 = vmatmul.bf16.gmra.mxu0 %v779
        %v790 = vpop.f32.mrf.mxu0
        %v791 = vadd.f32 0.0, %v790
        %v792 = vpop.f32.mrf.mxu0
        %v793 = vadd.f32 0.0, %v792
        %794 = vdwg.mxu0
        %795 = vmatpush.bf16.msra.mxu0 0
        %796 = vmatpush.bf16.msra.mxu0 0
        %797 = vmatpush.bf16.msra.mxu0 0
        %798 = vmatpush.bf16.msra.mxu0 0
        %799 = vmatpush.bf16.msra.mxu0 0
        %800 = vmatpush.bf16.msra.mxu0 0
        %801 = vmatpush.bf16.msra.mxu0 %v773
        %802 = vmatpush.bf16.msra.mxu0 %v771
        %803 = vmatmul.bf16.gmra.mxu0 %v779
        %v804 = vpop.f32.mrf.mxu0
        %v805 = vadd.f32 0.0, %v804
        %v806 = vpop.f32.mrf.mxu0
        %v807 = vadd.f32 0.0, %v806
        %808 = vdwg.mxu0
        %v813 = vunpack.c.l.b16 %v749
        %v814 = vunpack.c.h.b16 %v749
        %v815 = vunpack.c.l.b16 %v750
        %v816 = vunpack.c.h.b16 %v750
        %v817 = vunpack.c.l.b16 %v751
        %v818 = vunpack.c.h.b16 %v751
        %v819 = vunpack.c.l.b16 %v752
        %v820 = vunpack.c.h.b16 %v752
        %v821 = vpack.c.b16 %v815, %v813
        %v822 = vpack.c.b16 %v816, %v814
        %v823 = vpack.c.b16 %v819, %v817
        %v824 = vpack.c.b16 %v820, %v818
        %v830 = vsel %vm600, %v618, 0
        %832 = vmatpush.bf16.msra.mxu0 0
        %833 = vmatpush.bf16.msra.mxu0 0
        %834 = vmatpush.bf16.msra.mxu0 0
        %835 = vmatpush.bf16.msra.mxu0 0
        %836 = vmatpush.bf16.msra.mxu0 0
        %837 = vmatpush.bf16.msra.mxu0 0
        %838 = vmatpush.bf16.msra.mxu0 %v823
        %839 = vmatpush.bf16.msra.mxu0 %v821
        %840 = vmatmul.bf16.gmra.mxu0 %v830
        %v841 = vpop.f32.mrf.mxu0
        %v842 = vadd.f32 %v791, %v841
        %v843 = vpop.f32.mrf.mxu0
        %v844 = vadd.f32 %v793, %v843
        %845 = vdwg.mxu0
        %846 = vmatpush.bf16.msra.mxu0 0
        %847 = vmatpush.bf16.msra.mxu0 0
        %848 = vmatpush.bf16.msra.mxu0 0
        %849 = vmatpush.bf16.msra.mxu0 0
        %850 = vmatpush.bf16.msra.mxu0 0
        %851 = vmatpush.bf16.msra.mxu0 0
        %852 = vmatpush.bf16.msra.mxu0 %v824
        %853 = vmatpush.bf16.msra.mxu0 %v822
        %854 = vmatmul.bf16.gmra.mxu0 %v830
        %v855 = vpop.f32.mrf.mxu0
        %v856 = vadd.f32 %v805, %v855
        %v857 = vpop.f32.mrf.mxu0
        %v858 = vadd.f32 %v807, %v857
        %859 = vdwg.mxu0
        %s860 = scalar_lea.vmem [#allocation5], 64
        %v861 = vld [vmem:[%s860] sm:$0xff]
        %v862 = vld [vmem:[%s860 + $0x8] sm:$0xff]
        %v863 = vld [vmem:[%s860 + $0x10] sm:$0xff]
        %v864 = vld [vmem:[%s860 + $0x18] sm:$0xff]
        %v869 = vunpack.c.l.b16 %v861
        %v870 = vunpack.c.h.b16 %v861
        %v871 = vunpack.c.l.b16 %v862
        %v872 = vunpack.c.h.b16 %v862
        %v873 = vunpack.c.l.b16 %v863
        %v874 = vunpack.c.h.b16 %v863
        %v875 = vunpack.c.l.b16 %v864
        %v876 = vunpack.c.h.b16 %v864
        %v877 = vpack.c.b16 %v871, %v869
        %v878 = vpack.c.b16 %v872, %v870
        %v879 = vpack.c.b16 %v875, %v873
        %v880 = vpack.c.b16 %v876, %v874
        %v886 = vsel %vm600, %v670, 0
        %888 = vmatpush.bf16.msra.mxu0 0
        %889 = vmatpush.bf16.msra.mxu0 0
        %890 = vmatpush.bf16.msra.mxu0 0
        %891 = vmatpush.bf16.msra.mxu0 0
        %892 = vmatpush.bf16.msra.mxu0 0
        %893 = vmatpush.bf16.msra.mxu0 0
        %894 = vmatpush.bf16.msra.mxu0 %v879
        %895 = vmatpush.bf16.msra.mxu0 %v877
        %896 = vmatmul.bf16.gmra.mxu0 %v886
        %v897 = vpop.f32.mrf.mxu0
        %v898 = vadd.f32 0.0, %v897
        %v899 = vpop.f32.mrf.mxu0
        %v900 = vadd.f32 0.0, %v899
        %901 = vdwg.mxu0
        %902 = vmatpush.bf16.msra.mxu0 0
        %903 = vmatpush.bf16.msra.mxu0 0
        %904 = vmatpush.bf16.msra.mxu0 0
        %905 = vmatpush.bf16.msra.mxu0 0
        %906 = vmatpush.bf16.msra.mxu0 0
        %907 = vmatpush.bf16.msra.mxu0 0
        %908 = vmatpush.bf16.msra.mxu0 %v880
        %909 = vmatpush.bf16.msra.mxu0 %v878
        %910 = vmatmul.bf16.gmra.mxu0 %v886
        %v911 = vpop.f32.mrf.mxu0
        %v912 = vadd.f32 0.0, %v911
        %v913 = vpop.f32.mrf.mxu0
        %v914 = vadd.f32 0.0, %v913
        %915 = vdwg.mxu0
        %v916 = vadd.f32 %v842, %v898
        %v917 = vadd.f32 %v856, %v912
        %v918 = vadd.f32 %v844, %v900
        %v919 = vadd.f32 %v858, %v914
        %s920 = scalar_lea.vmem [#allocation5], 96
        %v921 = vld [vmem:[%s920] sm:$0xff]
        %v922 = vld [vmem:[%s920 + $0x8] sm:$0xff]
        %v923 = vld [vmem:[%s920 + $0x10] sm:$0xff]
        %v924 = vld [vmem:[%s920 + $0x18] sm:$0xff]
        %v929 = vunpack.c.l.b16 %v921
        %v930 = vunpack.c.h.b16 %v921
        %v931 = vunpack.c.l.b16 %v922
        %v932 = vunpack.c.h.b16 %v922
        %v933 = vunpack.c.l.b16 %v923
        %v934 = vunpack.c.h.b16 %v923
        %v935 = vunpack.c.l.b16 %v924
        %v936 = vunpack.c.h.b16 %v924
        %v937 = vpack.c.b16 %v931, %v929
        %v938 = vpack.c.b16 %v932, %v930
        %v939 = vpack.c.b16 %v935, %v933
        %v940 = vpack.c.b16 %v936, %v934
        %v946 = vsel %vm600, %v696, 0
        %948 = vmatpush.bf16.msra.mxu0 0
        %949 = vmatpush.bf16.msra.mxu0 0
        %950 = vmatpush.bf16.msra.mxu0 0
        %951 = vmatpush.bf16.msra.mxu0 0
        %952 = vmatpush.bf16.msra.mxu0 0
        %953 = vmatpush.bf16.msra.mxu0 0
        %954 = vmatpush.bf16.msra.mxu0 %v939
        %955 = vmatpush.bf16.msra.mxu0 %v937
        %956 = vmatmul.bf16.gmra.mxu0 %v946
        %v957 = vpop.f32.mrf.mxu0
        %v958 = vadd.f32 0.0, %v957
        %v959 = vpop.f32.mrf.mxu0
        %v960 = vadd.f32 0.0, %v959
        %961 = vdwg.mxu0
        %962 = vmatpush.bf16.msra.mxu0 0
        %963 = vmatpush.bf16.msra.mxu0 0
        %964 = vmatpush.bf16.msra.mxu0 0
        %965 = vmatpush.bf16.msra.mxu0 0
        %966 = vmatpush.bf16.msra.mxu0 0
        %967 = vmatpush.bf16.msra.mxu0 0
        %968 = vmatpush.bf16.msra.mxu0 %v940
        %969 = vmatpush.bf16.msra.mxu0 %v938
        %970 = vmatmul.bf16.gmra.mxu0 %v946
        %v971 = vpop.f32.mrf.mxu0
        %v972 = vadd.f32 0.0, %v971
        %v973 = vpop.f32.mrf.mxu0
        %v974 = vadd.f32 0.0, %v973
        %975 = vdwg.mxu0
        %v976 = vadd.f32 %v916, %v958
        %v977 = vadd.f32 %v917, %v972
        %v978 = vadd.f32 %v918, %v960
        %v979 = vadd.f32 %v919, %v974
        %s980 = scalar_lea.vmem [#allocation5], 128
        %v981 = vld [vmem:[%s980] sm:$0xff]
        %v982 = vld [vmem:[%s980 + $0x8] sm:$0xff]
        %v983 = vld [vmem:[%s980 + $0x10] sm:$0xff]
        %v984 = vld [vmem:[%s980 + $0x18] sm:$0xff]
        %v989 = vunpack.c.l.b16 %v981
        %v990 = vunpack.c.h.b16 %v981
        %v991 = vunpack.c.l.b16 %v982
        %v992 = vunpack.c.h.b16 %v982
        %v993 = vunpack.c.l.b16 %v983
        %v994 = vunpack.c.h.b16 %v983
        %v995 = vunpack.c.l.b16 %v984
        %v996 = vunpack.c.h.b16 %v984
        %v997 = vpack.c.b16 %v991, %v989
        %v998 = vpack.c.b16 %v992, %v990
        %v999 = vpack.c.b16 %v995, %v993
        %v1000 = vpack.c.b16 %v996, %v994
        %v1006 = vsel %vm600, %v722, 0
        %1008 = vmatpush.bf16.msra.mxu0 0
        %1009 = vmatpush.bf16.msra.mxu0 0
        %1010 = vmatpush.bf16.msra.mxu0 0
        %1011 = vmatpush.bf16.msra.mxu0 0
        %1012 = vmatpush.bf16.msra.mxu0 0
        %1013 = vmatpush.bf16.msra.mxu0 0
        %1014 = vmatpush.bf16.msra.mxu0 %v999
        %1015 = vmatpush.bf16.msra.mxu0 %v997
        %1016 = vmatmul.bf16.gmra.mxu0 %v1006
        %v1017 = vpop.f32.mrf.mxu0
        %v1018 = vadd.f32 0.0, %v1017
        %v1019 = vpop.f32.mrf.mxu0
        %v1020 = vadd.f32 0.0, %v1019
        %1021 = vdwg.mxu0
        %1022 = vmatpush.bf16.msra.mxu0 0
        %1023 = vmatpush.bf16.msra.mxu0 0
        %1024 = vmatpush.bf16.msra.mxu0 0
        %1025 = vmatpush.bf16.msra.mxu0 0
        %1026 = vmatpush.bf16.msra.mxu0 0
        %1027 = vmatpush.bf16.msra.mxu0 0
        %1028 = vmatpush.bf16.msra.mxu0 %v1000
        %1029 = vmatpush.bf16.msra.mxu0 %v998
        %1030 = vmatmul.bf16.gmra.mxu0 %v1006
        %v1031 = vpop.f32.mrf.mxu0
        %v1032 = vadd.f32 0.0, %v1031
        %v1033 = vpop.f32.mrf.mxu0
        %v1034 = vadd.f32 0.0, %v1033
        %1035 = vdwg.mxu0
        %v1036 = vadd.f32 %v976, %v1018
        %v1037 = vadd.f32 %v977, %v1032
        %v1038 = vadd.f32 %v978, %v1020
        %v1039 = vadd.f32 %v979, %v1034
        %1040 = vmatpush.bf16.msra.mxu0 0
        %1041 = vmatpush.bf16.msra.mxu0 0
        %1042 = vmatpush.bf16.msra.mxu0 0
        %1043 = vmatpush.bf16.msra.mxu0 0
        %1044 = vmatpush.bf16.msra.mxu0 0
        %1045 = vmatpush.bf16.msra.mxu0 0
        %1046 = vmatpush.bf16.msra.mxu0 %v772
        %1047 = vmatpush.bf16.msra.mxu0 %v770
        %1048 = vmatmul.bf16.gmra.mxu0 %v886
        %v1049 = vpop.f32.mrf.mxu0
        %v1050 = vadd.f32 0.0, %v1049
        %v1051 = vpop.f32.mrf.mxu0
        %v1052 = vadd.f32 0.0, %v1051
        %1053 = vdwg.mxu0
        %1054 = vmatpush.bf16.msra.mxu0 0
        %1055 = vmatpush.bf16.msra.mxu0 0
        %1056 = vmatpush.bf16.msra.mxu0 0
        %1057 = vmatpush.bf16.msra.mxu0 0
        %1058 = vmatpush.bf16.msra.mxu0 0
        %1059 = vmatpush.bf16.msra.mxu0 0
        %1060 = vmatpush.bf16.msra.mxu0 %v773
        %1061 = vmatpush.bf16.msra.mxu0 %v771
        %1062 = vmatmul.bf16.gmra.mxu0 %v886
        %v1063 = vpop.f32.mrf.mxu0
        %v1064 = vadd.f32 0.0, %v1063
        %v1065 = vpop.f32.mrf.mxu0
        %v1066 = vadd.f32 0.0, %v1065
        %1067 = vdwg.mxu0
        %1068 = vmatpush.bf16.msra.mxu0 0
        %1069 = vmatpush.bf16.msra.mxu0 0
        %1070 = vmatpush.bf16.msra.mxu0 0
        %1071 = vmatpush.bf16.msra.mxu0 0
        %1072 = vmatpush.bf16.msra.mxu0 0
        %1073 = vmatpush.bf16.msra.mxu0 0
        %1074 = vmatpush.bf16.msra.mxu0 %v823
        %1075 = vmatpush.bf16.msra.mxu0 %v821
        %1076 = vmatmul.bf16.gmra.mxu0 %v779
        %v1077 = vpop.f32.mrf.mxu0
        %v1078 = vadd.f32 %v1050, %v1077
        %v1079 = vpop.f32.mrf.mxu0
        %v1080 = vadd.f32 %v1052, %v1079
        %1081 = vdwg.mxu0
        %1082 = vmatpush.bf16.msra.mxu0 0
        %1083 = vmatpush.bf16.msra.mxu0 0
        %1084 = vmatpush.bf16.msra.mxu0 0
        %1085 = vmatpush.bf16.msra.mxu0 0
        %1086 = vmatpush.bf16.msra.mxu0 0
        %1087 = vmatpush.bf16.msra.mxu0 0
        %1088 = vmatpush.bf16.msra.mxu0 %v824
        %1089 = vmatpush.bf16.msra.mxu0 %v822
        %1090 = vmatmul.bf16.gmra.mxu0 %v779
        %v1091 = vpop.f32.mrf.mxu0
        %v1092 = vadd.f32 %v1064, %v1091
        %v1093 = vpop.f32.mrf.mxu0
        %v1094 = vadd.f32 %v1066, %v1093
        %1095 = vdwg.mxu0
        %1096 = vmatpush.bf16.msra.mxu0 0
        %1097 = vmatpush.bf16.msra.mxu0 0
        %1098 = vmatpush.bf16.msra.mxu0 0
        %1099 = vmatpush.bf16.msra.mxu0 0
        %1100 = vmatpush.bf16.msra.mxu0 0
        %1101 = vmatpush.bf16.msra.mxu0 0
        %1102 = vmatpush.bf16.msra.mxu0 %v879
        %1103 = vmatpush.bf16.msra.mxu0 %v877
        %1104 = vmatmul.bf16.gmra.mxu0 %v946
        %v1105 = vpop.f32.mrf.mxu0
        %v1106 = vadd.f32 0.0, %v1105
        %v1107 = vpop.f32.mrf.mxu0
        %v1108 = vadd.f32 0.0, %v1107
        %1109 = vdwg.mxu0
        %1110 = vmatpush.bf16.msra.mxu0 0
        %1111 = vmatpush.bf16.msra.mxu0 0
        %1112 = vmatpush.bf16.msra.mxu0 0
        %1113 = vmatpush.bf16.msra.mxu0 0
        %1114 = vmatpush.bf16.msra.mxu0 0
        %1115 = vmatpush.bf16.msra.mxu0 0
        %1116 = vmatpush.bf16.msra.mxu0 %v880
        %1117 = vmatpush.bf16.msra.mxu0 %v878
        %1118 = vmatmul.bf16.gmra.mxu0 %v946
        %v1119 = vpop.f32.mrf.mxu0
        %v1120 = vadd.f32 0.0, %v1119
        %v1121 = vpop.f32.mrf.mxu0
        %v1122 = vadd.f32 0.0, %v1121
        %1123 = vdwg.mxu0
        %v1124 = vadd.f32 %v1078, %v1106
        %v1125 = vadd.f32 %v1092, %v1120
        %v1126 = vadd.f32 %v1080, %v1108
        %v1127 = vadd.f32 %v1094, %v1122
        %1128 = vmatpush.bf16.msra.mxu0 0
        %1129 = vmatpush.bf16.msra.mxu0 0
        %1130 = vmatpush.bf16.msra.mxu0 0
        %1131 = vmatpush.bf16.msra.mxu0 0
        %1132 = vmatpush.bf16.msra.mxu0 0
        %1133 = vmatpush.bf16.msra.mxu0 0
        %1134 = vmatpush.bf16.msra.mxu0 %v939
        %1135 = vmatpush.bf16.msra.mxu0 %v937
        %1136 = vmatmul.bf16.gmra.mxu0 %v1006
        %v1137 = vpop.f32.mrf.mxu0
        %v1138 = vadd.f32 0.0, %v1137
        %v1139 = vpop.f32.mrf.mxu0
        %v1140 = vadd.f32 0.0, %v1139
        %1141 = vdwg.mxu0
        %1142 = vmatpush.bf16.msra.mxu0 0
        %1143 = vmatpush.bf16.msra.mxu0 0
        %1144 = vmatpush.bf16.msra.mxu0 0
        %1145 = vmatpush.bf16.msra.mxu0 0
        %1146 = vmatpush.bf16.msra.mxu0 0
        %1147 = vmatpush.bf16.msra.mxu0 0
        %1148 = vmatpush.bf16.msra.mxu0 %v940
        %1149 = vmatpush.bf16.msra.mxu0 %v938
        %1150 = vmatmul.bf16.gmra.mxu0 %v1006
        %v1151 = vpop.f32.mrf.mxu0
        %v1152 = vadd.f32 0.0, %v1151
        %v1153 = vpop.f32.mrf.mxu0
        %v1154 = vadd.f32 0.0, %v1153
        %1155 = vdwg.mxu0
        %v1156 = vadd.f32 %v1124, %v1138
        %v1157 = vadd.f32 %v1125, %v1152
        %v1158 = vadd.f32 %v1126, %v1140
        %v1159 = vadd.f32 %v1127, %v1154
        %v1161 = vsel %vm600, %v748, 0
        %1163 = vmatpush.bf16.msra.mxu0 0
        %1164 = vmatpush.bf16.msra.mxu0 0
        %1165 = vmatpush.bf16.msra.mxu0 0
        %1166 = vmatpush.bf16.msra.mxu0 0
        %1167 = vmatpush.bf16.msra.mxu0 0
        %1168 = vmatpush.bf16.msra.mxu0 0
        %1169 = vmatpush.bf16.msra.mxu0 %v999
        %1170 = vmatpush.bf16.msra.mxu0 %v997
        %1171 = vmatmul.bf16.gmra.mxu0 %v1161
        %v1172 = vpop.f32.mrf.mxu0
        %v1173 = vadd.f32 0.0, %v1172
        %v1174 = vpop.f32.mrf.mxu0
        %v1175 = vadd.f32 0.0, %v1174
        %1176 = vdwg.mxu0
        %1177 = vmatpush.bf16.msra.mxu0 0
        %1178 = vmatpush.bf16.msra.mxu0 0
        %1179 = vmatpush.bf16.msra.mxu0 0
        %1180 = vmatpush.bf16.msra.mxu0 0
        %1181 = vmatpush.bf16.msra.mxu0 0
        %1182 = vmatpush.bf16.msra.mxu0 0
        %1183 = vmatpush.bf16.msra.mxu0 %v1000
        %1184 = vmatpush.bf16.msra.mxu0 %v998
        %1185 = vmatmul.bf16.gmra.mxu0 %v1161
        %v1186 = vpop.f32.mrf.mxu0
        %v1187 = vadd.f32 0.0, %v1186
        %v1188 = vpop.f32.mrf.mxu0
        %v1189 = vadd.f32 0.0, %v1188
        %1190 = vdwg.mxu0
        %v1191 = vadd.f32 %v1156, %v1173
        %v1192 = vadd.f32 %v1157, %v1187
        %v1193 = vadd.f32 %v1158, %v1175
        %v1194 = vadd.f32 %v1159, %v1189
        %v1195 = vmax.f32 %v1036, %v1191
        %v1196 = vmax.f32 %v1037, %v1192
        %v1197 = vmax.f32 %v1038, %v1193
        %v1198 = vmax.f32 %v1039, %v1194
        %v1199 = vmax.f32 %v1195, %v1196
        %v1200 = vmax.f32 %v1197, %v1198
        %v1201 = vld [vmem:[%s3] sm:$0x1]
        %v1203 = vperm.slane %v1201, 0
        %v1205 = vadd.f32 %v1199, %v1203
        %v1206 = vadd.f32 %v1200, %v1203
        %v1207 = vmax.f32 %v1205, 0.0
        %v1208 = vmax.f32 %v1206, 0.0
        %v1209 = vpack.c.bf16 %v1208, %v1207
        %v1210 = vld [vmem:[%s4] sm:$0x7]
        %vm1211 = vcmask 113664
        %v1213 = vsel %vm1211, %v1210, 0
        %vm1215 = vcmask 1046528
        %v1217 = vsel %vm1215, %v1209, 0
        %1219 = vmatpush.bf16.msra.mxu0 0
        %1220 = vmatpush.bf16.msra.mxu0 0
        %1221 = vmatpush.bf16.msra.mxu0 0
        %1222 = vmatpush.bf16.msra.mxu0 0
        %1223 = vmatpush.bf16.msra.mxu0 0
        %1224 = vmatpush.bf16.msra.mxu0 0
        %1225 = vmatpush.bf16.msra.mxu0 0
        %1226 = vmatpush.bf16.msra.mxu0 %v1217
        %1227 = vmatmul.bf16.gmra.mxu0 %v1213
        %v1228 = vpop.f32.mrf.mxu0
        %v1229 = vadd.f32 0.0, %v1228
        %v1230 = vpop.f32.mrf.mxu0
        %1231 = vdwg.mxu0
        %v1232 = vpack.c.bf16 %v1229, %v1229
        %s1233 = scalar_lea.vmem %s4, 4
        %v1234 = vld [vmem:[%s1233] sm:$0x7]
        %v1236 = vsel %vm1211, %v1234, 0
        %1238 = vmatpush.bf16.msra.mxu0 0
        %1239 = vmatpush.bf16.msra.mxu0 0
        %1240 = vmatpush.bf16.msra.mxu0 0
        %1241 = vmatpush.bf16.msra.mxu0 0
        %1242 = vmatpush.bf16.msra.mxu0 0
        %1243 = vmatpush.bf16.msra.mxu0 0
        %1244 = vmatpush.bf16.msra.mxu0 0
        %1245 = vmatpush.bf16.msra.mxu0 %v1217
        %1246 = vmatmul.bf16.gmra.mxu0 %v1236
        %v1247 = vpop.f32.mrf.mxu0
        %v1248 = vadd.f32 0.0, %v1247
        %v1249 = vpop.f32.mrf.mxu0
        %1250 = vdwg.mxu0
        %v1251 = vpack.c.bf16 %v1248, %v1248
        %s1252 = scalar_lea.vmem %s4, 8
        %v1253 = vld [vmem:[%s1252] sm:$0x7]
        %v1255 = vsel %vm1211, %v1253, 0
        %1257 = vmatpush.bf16.msra.mxu0 0
        %1258 = vmatpush.bf16.msra.mxu0 0
        %1259 = vmatpush.bf16.msra.mxu0 0
        %1260 = vmatpush.bf16.msra.mxu0 0
        %1261 = vmatpush.bf16.msra.mxu0 0
        %1262 = vmatpush.bf16.msra.mxu0 0
        %1263 = vmatpush.bf16.msra.mxu0 0
        %1264 = vmatpush.bf16.msra.mxu0 %v1217
        %1265 = vmatmul.bf16.gmra.mxu0 %v1255
        %v1266 = vpop.f32.mrf.mxu0
        %v1267 = vadd.f32 0.0, %v1266
        %v1268 = vpop.f32.mrf.mxu0
        %1269 = vdwg.mxu0
        %v1270 = vpack.c.bf16 %v1267, %v1267
        %s1271 = scalar_lea.vmem %s4, 12
        %v1272 = vld [vmem:[%s1271] sm:$0x7]
        %v1274 = vsel %vm1211, %v1272, 0
        %1276 = vmatpush.bf16.msra.mxu0 0
        %1277 = vmatpush.bf16.msra.mxu0 0
        %1278 = vmatpush.bf16.msra.mxu0 0
        %1279 = vmatpush.bf16.msra.mxu0 0
        %1280 = vmatpush.bf16.msra.mxu0 0
        %1281 = vmatpush.bf16.msra.mxu0 0
        %1282 = vmatpush.bf16.msra.mxu0 0
        %1283 = vmatpush.bf16.msra.mxu0 %v1217
        %1284 = vmatmul.bf16.gmra.mxu0 %v1274
        %v1285 = vpop.f32.mrf.mxu0
        %v1286 = vadd.f32 0.0, %v1285
        %v1287 = vpop.f32.mrf.mxu0
        %1288 = vdwg.mxu0
        %v1289 = vpack.c.bf16 %v1286, %v1286
        %s1290 = scalar_lea.vmem %s4, 16
        %v1291 = vld [vmem:[%s1290] sm:$0x7]
        %v1293 = vsel %vm1211, %v1291, 0
        %1295 = vmatpush.bf16.msra.mxu0 0
        %1296 = vmatpush.bf16.msra.mxu0 0
        %1297 = vmatpush.bf16.msra.mxu0 0
        %1298 = vmatpush.bf16.msra.mxu0 0
        %1299 = vmatpush.bf16.msra.mxu0 0
        %1300 = vmatpush.bf16.msra.mxu0 0
        %1301 = vmatpush.bf16.msra.mxu0 0
        %1302 = vmatpush.bf16.msra.mxu0 %v1217
        %1303 = vmatmul.bf16.gmra.mxu0 %v1293
        %v1304 = vpop.f32.mrf.mxu0
        %v1305 = vadd.f32 0.0, %v1304
        %v1306 = vpop.f32.mrf.mxu0
        %1307 = vdwg.mxu0
        %v1308 = vpack.c.bf16 %v1305, %v1305
        %s1309 = scalar_lea.vmem %s4, 20
        %v1310 = vld [vmem:[%s1309] sm:$0x7]
        %v1312 = vsel %vm1211, %v1310, 0
        %1314 = vmatpush.bf16.msra.mxu0 0
        %1315 = vmatpush.bf16.msra.mxu0 0
        %1316 = vmatpush.bf16.msra.mxu0 0
        %1317 = vmatpush.bf16.msra.mxu0 0
        %1318 = vmatpush.bf16.msra.mxu0 0
        %1319 = vmatpush.bf16.msra.mxu0 0
        %1320 = vmatpush.bf16.msra.mxu0 0
        %1321 = vmatpush.bf16.msra.mxu0 %v1217
        %1322 = vmatmul.bf16.gmra.mxu0 %v1312
        %v1323 = vpop.f32.mrf.mxu0
        %v1324 = vadd.f32 0.0, %v1323
        %v1325 = vpop.f32.mrf.mxu0
        %1326 = vdwg.mxu0
        %v1327 = vpack.c.bf16 %v1324, %v1324
        %v1328 = vld [vmem:[#allocation7] sm:$0xff]
        %v1329 = vld [vmem:[#allocation7 + $0x8] sm:$0xff]
        %v1330 = vld [vmem:[#allocation7 + $0x10] sm:$0xff]
        %v1331 = vld [vmem:[#allocation7 + $0x18] sm:$0xff]
        %v1332 = vld [vmem:[#allocation7 + $0x20] sm:$0xff]
        %v1333 = vld [vmem:[#allocation7 + $0x28] sm:$0xff]
        %v1334 = vld [vmem:[#allocation7 + $0x30] sm:$0xff]
        %v1335 = vld [vmem:[#allocation7 + $0x38] sm:$0xff]
        %v1336 = vld [vmem:[#allocation7 + $0x40] sm:$0xff]
        %v1337 = vld [vmem:[#allocation7 + $0x48] sm:$0xff]
        %v1338 = vld [vmem:[#allocation7 + $0x50] sm:$0xff]
        %v1339 = vld [vmem:[#allocation7 + $0x58] sm:$0xff]
        %v1340 = vld [vmem:[#allocation7 + $0x60] sm:$0xff]
        %v1341 = vld [vmem:[#allocation7 + $0x68] sm:$0xff]
        %v1342 = vld [vmem:[#allocation7 + $0x70] sm:$0xff]
        %v1343 = vld [vmem:[#allocation7 + $0x78] sm:$0xff]
        %s1344 = scalar_lea.vmem [#allocation7], 128
        %v1345 = vld [vmem:[%s1344] sm:$0xff]
        %v1346 = vld [vmem:[%s1344 + $0x8] sm:$0xff]
        %v1347 = vld [vmem:[%s1344 + $0x10] sm:$0xff]
        %v1348 = vld [vmem:[%s1344 + $0x18] sm:$0xff]
        %v1349 = vld [vmem:[%s1344 + $0x20] sm:$0xff]
        %v1350 = vld [vmem:[%s1344 + $0x28] sm:$0xff]
        %v1351 = vld [vmem:[%s1344 + $0x30] sm:$0xff]
        %v1352 = vld [vmem:[%s1344 + $0x38] sm:$0xff]
        %v1353 = vld [vmem:[%s1344 + $0x40] sm:$0xff]
        %v1354 = vld [vmem:[%s1344 + $0x48] sm:$0xff]
        %v1355 = vld [vmem:[%s1344 + $0x50] sm:$0xff]
        %v1356 = vld [vmem:[%s1344 + $0x58] sm:$0xff]
        %v1357 = vld [vmem:[%s1344 + $0x60] sm:$0xff]
        %v1358 = vld [vmem:[%s1344 + $0x68] sm:$0xff]
        %v1359 = vld [vmem:[%s1344 + $0x70] sm:$0xff]
        %v1360 = vld [vmem:[%s1344 + $0x78] sm:$0xff]
        %v1377 = vunpack.c.l.b16 %v1345
        %v1378 = vunpack.c.h.b16 %v1345
        %v1379 = vunpack.c.l.b16 %v1346
        %v1380 = vunpack.c.h.b16 %v1346
        %v1381 = vunpack.c.l.b16 %v1347
        %v1382 = vunpack.c.h.b16 %v1347
        %v1383 = vunpack.c.l.b16 %v1348
        %v1384 = vunpack.c.h.b16 %v1348
        %v1385 = vunpack.c.l.b16 %v1349
        %v1386 = vunpack.c.h.b16 %v1349
        %v1387 = vunpack.c.l.b16 %v1350
        %v1388 = vunpack.c.h.b16 %v1350
        %v1389 = vunpack.c.l.b16 %v1351
        %v1390 = vunpack.c.h.b16 %v1351
        %v1391 = vunpack.c.l.b16 %v1352
        %v1392 = vunpack.c.h.b16 %v1352
        %v1393 = vunpack.c.l.b16 %v1353
        %v1394 = vunpack.c.h.b16 %v1353
        %v1395 = vunpack.c.l.b16 %v1354
        %v1396 = vunpack.c.h.b16 %v1354
        %v1397 = vunpack.c.l.b16 %v1355
        %v1398 = vunpack.c.h.b16 %v1355
        %v1399 = vunpack.c.l.b16 %v1356
        %v1400 = vunpack.c.h.b16 %v1356
        %v1401 = vunpack.c.l.b16 %v1357
        %v1402 = vunpack.c.h.b16 %v1357
        %v1403 = vunpack.c.l.b16 %v1358
        %v1404 = vunpack.c.h.b16 %v1358
        %v1405 = vunpack.c.l.b16 %v1359
        %v1406 = vunpack.c.h.b16 %v1359
        %v1407 = vunpack.c.l.b16 %v1360
        %v1408 = vunpack.c.h.b16 %v1360
        %v1409 = vpack.c.b16 %v1379, %v1377
        %v1410 = vpack.c.b16 %v1380, %v1378
        %v1411 = vpack.c.b16 %v1383, %v1381
        %v1412 = vpack.c.b16 %v1384, %v1382
        %v1413 = vpack.c.b16 %v1387, %v1385
        %v1414 = vpack.c.b16 %v1388, %v1386
        %v1415 = vpack.c.b16 %v1391, %v1389
        %v1416 = vpack.c.b16 %v1392, %v1390
        %v1417 = vpack.c.b16 %v1395, %v1393
        %v1418 = vpack.c.b16 %v1396, %v1394
        %v1419 = vpack.c.b16 %v1399, %v1397
        %v1420 = vpack.c.b16 %v1400, %v1398
        %v1421 = vpack.c.b16 %v1403, %v1401
        %v1422 = vpack.c.b16 %v1404, %v1402
        %v1423 = vpack.c.b16 %v1407, %v1405
        %v1424 = vpack.c.b16 %v1408, %v1406
        %1441 = vmatpush.bf16.msra.mxu0 %v1423
        %1442 = vmatpush.bf16.msra.mxu0 %v1421
        %1443 = vmatpush.bf16.msra.mxu0 %v1419
        %1444 = vmatpush.bf16.msra.mxu0 %v1417
        %1445 = vmatpush.bf16.msra.mxu0 %v1415
        %1446 = vmatpush.bf16.msra.mxu0 %v1413
        %1447 = vmatpush.bf16.msra.mxu0 %v1411
        %1448 = vmatpush.bf16.msra.mxu0 %v1409
        %1449 = vmatmul.bf16.gmra.mxu0 %v1251
        %v1450 = vpop.f32.mrf.mxu0
        %v1451 = vadd.f32 0.0, %v1450
        %v1452 = vpop.f32.mrf.mxu0
        %1453 = vdwg.mxu0
        %1454 = vmatpush.bf16.msra.mxu0 %v1424
        %1455 = vmatpush.bf16.msra.mxu0 %v1422
        %1456 = vmatpush.bf16.msra.mxu0 %v1420
        %1457 = vmatpush.bf16.msra.mxu0 %v1418
        %1458 = vmatpush.bf16.msra.mxu0 %v1416
        %1459 = vmatpush.bf16.msra.mxu0 %v1414
        %1460 = vmatpush.bf16.msra.mxu0 %v1412
        %1461 = vmatpush.bf16.msra.mxu0 %v1410
        %1462 = vmatmul.bf16.gmra.mxu0 %v1251
        %v1463 = vpop.f32.mrf.mxu0
        %v1464 = vadd.f32 0.0, %v1463
        %v1465 = vpop.f32.mrf.mxu0
        %1466 = vdwg.mxu0
        %v1483 = vunpack.c.l.b16 %v1328
        %v1484 = vunpack.c.h.b16 %v1328
        %v1485 = vunpack.c.l.b16 %v1329
        %v1486 = vunpack.c.h.b16 %v1329
        %v1487 = vunpack.c.l.b16 %v1330
        %v1488 = vunpack.c.h.b16 %v1330
        %v1489 = vunpack.c.l.b16 %v1331
        %v1490 = vunpack.c.h.b16 %v1331
        %v1491 = vunpack.c.l.b16 %v1332
        %v1492 = vunpack.c.h.b16 %v1332
        %v1493 = vunpack.c.l.b16 %v1333
        %v1494 = vunpack.c.h.b16 %v1333
        %v1495 = vunpack.c.l.b16 %v1334
        %v1496 = vunpack.c.h.b16 %v1334
        %v1497 = vunpack.c.l.b16 %v1335
        %v1498 = vunpack.c.h.b16 %v1335
        %v1499 = vunpack.c.l.b16 %v1336
        %v1500 = vunpack.c.h.b16 %v1336
        %v1501 = vunpack.c.l.b16 %v1337
        %v1502 = vunpack.c.h.b16 %v1337
        %v1503 = vunpack.c.l.b16 %v1338
        %v1504 = vunpack.c.h.b16 %v1338
        %v1505 = vunpack.c.l.b16 %v1339
        %v1506 = vunpack.c.h.b16 %v1339
        %v1507 = vunpack.c.l.b16 %v1340
        %v1508 = vunpack.c.h.b16 %v1340
        %v1509 = vunpack.c.l.b16 %v1341
        %v1510 = vunpack.c.h.b16 %v1341
        %v1511 = vunpack.c.l.b16 %v1342
        %v1512 = vunpack.c.h.b16 %v1342
        %v1513 = vunpack.c.l.b16 %v1343
        %v1514 = vunpack.c.h.b16 %v1343
        %v1515 = vpack.c.b16 %v1485, %v1483
        %v1516 = vpack.c.b16 %v1486, %v1484
        %v1517 = vpack.c.b16 %v1489, %v1487
        %v1518 = vpack.c.b16 %v1490, %v1488
        %v1519 = vpack.c.b16 %v1493, %v1491
        %v1520 = vpack.c.b16 %v1494, %v1492
        %v1521 = vpack.c.b16 %v1497, %v1495
        %v1522 = vpack.c.b16 %v1498, %v1496
        %v1523 = vpack.c.b16 %v1501, %v1499
        %v1524 = vpack.c.b16 %v1502, %v1500
        %v1525 = vpack.c.b16 %v1505, %v1503
        %v1526 = vpack.c.b16 %v1506, %v1504
        %v1527 = vpack.c.b16 %v1509, %v1507
        %v1528 = vpack.c.b16 %v1510, %v1508
        %v1529 = vpack.c.b16 %v1513, %v1511
        %v1530 = vpack.c.b16 %v1514, %v1512
        %1547 = vmatpush.bf16.msra.mxu0 %v1529
        %1548 = vmatpush.bf16.msra.mxu0 %v1527
        %1549 = vmatpush.bf16.msra.mxu0 %v1525
        %1550 = vmatpush.bf16.msra.mxu0 %v1523
        %1551 = vmatpush.bf16.msra.mxu0 %v1521
        %1552 = vmatpush.bf16.msra.mxu0 %v1519
        %1553 = vmatpush.bf16.msra.mxu0 %v1517
        %1554 = vmatpush.bf16.msra.mxu0 %v1515
        %1555 = vmatmul.bf16.gmra.mxu0 %v1232
        %v1556 = vpop.f32.mrf.mxu0
        %v1557 = vadd.f32 %v1451, %v1556
        %v1558 = vpop.f32.mrf.mxu0
        %1559 = vdwg.mxu0
        %1560 = vmatpush.bf16.msra.mxu0 %v1530
        %1561 = vmatpush.bf16.msra.mxu0 %v1528
        %1562 = vmatpush.bf16.msra.mxu0 %v1526
        %1563 = vmatpush.bf16.msra.mxu0 %v1524
        %1564 = vmatpush.bf16.msra.mxu0 %v1522
        %1565 = vmatpush.bf16.msra.mxu0 %v1520
        %1566 = vmatpush.bf16.msra.mxu0 %v1518
        %1567 = vmatpush.bf16.msra.mxu0 %v1516
        %1568 = vmatmul.bf16.gmra.mxu0 %v1232
        %v1569 = vpop.f32.mrf.mxu0
        %v1570 = vadd.f32 %v1464, %v1569
        %v1571 = vpop.f32.mrf.mxu0
        %1572 = vdwg.mxu0
        %s1573 = scalar_lea.vmem [#allocation7], 256
        %v1574 = vld [vmem:[%s1573] sm:$0xff]
        %v1575 = vld [vmem:[%s1573 + $0x8] sm:$0xff]
        %v1576 = vld [vmem:[%s1573 + $0x10] sm:$0xff]
        %v1577 = vld [vmem:[%s1573 + $0x18] sm:$0xff]
        %v1578 = vld [vmem:[%s1573 + $0x20] sm:$0xff]
        %v1579 = vld [vmem:[%s1573 + $0x28] sm:$0xff]
        %v1580 = vld [vmem:[%s1573 + $0x30] sm:$0xff]
        %v1581 = vld [vmem:[%s1573 + $0x38] sm:$0xff]
        %v1582 = vld [vmem:[%s1573 + $0x40] sm:$0xff]
        %v1583 = vld [vmem:[%s1573 + $0x48] sm:$0xff]
        %v1584 = vld [vmem:[%s1573 + $0x50] sm:$0xff]
        %v1585 = vld [vmem:[%s1573 + $0x58] sm:$0xff]
        %v1586 = vld [vmem:[%s1573 + $0x60] sm:$0xff]
        %v1587 = vld [vmem:[%s1573 + $0x68] sm:$0xff]
        %v1588 = vld [vmem:[%s1573 + $0x70] sm:$0xff]
        %v1589 = vld [vmem:[%s1573 + $0x78] sm:$0xff]
        %v1606 = vunpack.c.l.b16 %v1574
        %v1607 = vunpack.c.h.b16 %v1574
        %v1608 = vunpack.c.l.b16 %v1575
        %v1609 = vunpack.c.h.b16 %v1575
        %v1610 = vunpack.c.l.b16 %v1576
        %v1611 = vunpack.c.h.b16 %v1576
        %v1612 = vunpack.c.l.b16 %v1577
        %v1613 = vunpack.c.h.b16 %v1577
        %v1614 = vunpack.c.l.b16 %v1578
        %v1615 = vunpack.c.h.b16 %v1578
        %v1616 = vunpack.c.l.b16 %v1579
        %v1617 = vunpack.c.h.b16 %v1579
        %v1618 = vunpack.c.l.b16 %v1580
        %v1619 = vunpack.c.h.b16 %v1580
        %v1620 = vunpack.c.l.b16 %v1581
        %v1621 = vunpack.c.h.b16 %v1581
        %v1622 = vunpack.c.l.b16 %v1582
        %v1623 = vunpack.c.h.b16 %v1582
        %v1624 = vunpack.c.l.b16 %v1583
        %v1625 = vunpack.c.h.b16 %v1583
        %v1626 = vunpack.c.l.b16 %v1584
        %v1627 = vunpack.c.h.b16 %v1584
        %v1628 = vunpack.c.l.b16 %v1585
        %v1629 = vunpack.c.h.b16 %v1585
        %v1630 = vunpack.c.l.b16 %v1586
        %v1631 = vunpack.c.h.b16 %v1586
        %v1632 = vunpack.c.l.b16 %v1587
        %v1633 = vunpack.c.h.b16 %v1587
        %v1634 = vunpack.c.l.b16 %v1588
        %v1635 = vunpack.c.h.b16 %v1588
        %v1636 = vunpack.c.l.b16 %v1589
        %v1637 = vunpack.c.h.b16 %v1589
        %v1638 = vpack.c.b16 %v1608, %v1606
        %v1639 = vpack.c.b16 %v1609, %v1607
        %v1640 = vpack.c.b16 %v1612, %v1610
        %v1641 = vpack.c.b16 %v1613, %v1611
        %v1642 = vpack.c.b16 %v1616, %v1614
        %v1643 = vpack.c.b16 %v1617, %v1615
        %v1644 = vpack.c.b16 %v1620, %v1618
        %v1645 = vpack.c.b16 %v1621, %v1619
        %v1646 = vpack.c.b16 %v1624, %v1622
        %v1647 = vpack.c.b16 %v1625, %v1623
        %v1648 = vpack.c.b16 %v1628, %v1626
        %v1649 = vpack.c.b16 %v1629, %v1627
        %v1650 = vpack.c.b16 %v1632, %v1630
        %v1651 = vpack.c.b16 %v1633, %v1631
        %v1652 = vpack.c.b16 %v1636, %v1634
        %v1653 = vpack.c.b16 %v1637, %v1635
        %1670 = vmatpush.bf16.msra.mxu0 %v1652
        %1671 = vmatpush.bf16.msra.mxu0 %v1650
        %1672 = vmatpush.bf16.msra.mxu0 %v1648
        %1673 = vmatpush.bf16.msra.mxu0 %v1646
        %1674 = vmatpush.bf16.msra.mxu0 %v1644
        %1675 = vmatpush.bf16.msra.mxu0 %v1642
        %1676 = vmatpush.bf16.msra.mxu0 %v1640
        %1677 = vmatpush.bf16.msra.mxu0 %v1638
        %1678 = vmatmul.bf16.gmra.mxu0 %v1270
        %v1679 = vpop.f32.mrf.mxu0
        %v1680 = vadd.f32 0.0, %v1679
        %v1681 = vpop.f32.mrf.mxu0
        %1682 = vdwg.mxu0
        %1683 = vmatpush.bf16.msra.mxu0 %v1653
        %1684 = vmatpush.bf16.msra.mxu0 %v1651
        %1685 = vmatpush.bf16.msra.mxu0 %v1649
        %1686 = vmatpush.bf16.msra.mxu0 %v1647
        %1687 = vmatpush.bf16.msra.mxu0 %v1645
        %1688 = vmatpush.bf16.msra.mxu0 %v1643
        %1689 = vmatpush.bf16.msra.mxu0 %v1641
        %1690 = vmatpush.bf16.msra.mxu0 %v1639
        %1691 = vmatmul.bf16.gmra.mxu0 %v1270
        %v1692 = vpop.f32.mrf.mxu0
        %v1693 = vadd.f32 0.0, %v1692
        %v1694 = vpop.f32.mrf.mxu0
        %1695 = vdwg.mxu0
        %v1696 = vadd.f32 %v1557, %v1680
        %v1697 = vadd.f32 %v1570, %v1693
        %s1698 = scalar_lea.vmem [#allocation7], 384
        %v1699 = vld [vmem:[%s1698] sm:$0xff]
        %v1700 = vld [vmem:[%s1698 + $0x8] sm:$0xff]
        %v1701 = vld [vmem:[%s1698 + $0x10] sm:$0xff]
        %v1702 = vld [vmem:[%s1698 + $0x18] sm:$0xff]
        %v1703 = vld [vmem:[%s1698 + $0x20] sm:$0xff]
        %v1704 = vld [vmem:[%s1698 + $0x28] sm:$0xff]
        %v1705 = vld [vmem:[%s1698 + $0x30] sm:$0xff]
        %v1706 = vld [vmem:[%s1698 + $0x38] sm:$0xff]
        %v1707 = vld [vmem:[%s1698 + $0x40] sm:$0xff]
        %v1708 = vld [vmem:[%s1698 + $0x48] sm:$0xff]
        %v1709 = vld [vmem:[%s1698 + $0x50] sm:$0xff]
        %v1710 = vld [vmem:[%s1698 + $0x58] sm:$0xff]
        %v1711 = vld [vmem:[%s1698 + $0x60] sm:$0xff]
        %v1712 = vld [vmem:[%s1698 + $0x68] sm:$0xff]
        %v1713 = vld [vmem:[%s1698 + $0x70] sm:$0xff]
        %v1714 = vld [vmem:[%s1698 + $0x78] sm:$0xff]
        %v1731 = vunpack.c.l.b16 %v1699
        %v1732 = vunpack.c.h.b16 %v1699
        %v1733 = vunpack.c.l.b16 %v1700
        %v1734 = vunpack.c.h.b16 %v1700
        %v1735 = vunpack.c.l.b16 %v1701
        %v1736 = vunpack.c.h.b16 %v1701
        %v1737 = vunpack.c.l.b16 %v1702
        %v1738 = vunpack.c.h.b16 %v1702
        %v1739 = vunpack.c.l.b16 %v1703
        %v1740 = vunpack.c.h.b16 %v1703
        %v1741 = vunpack.c.l.b16 %v1704
        %v1742 = vunpack.c.h.b16 %v1704
        %v1743 = vunpack.c.l.b16 %v1705
        %v1744 = vunpack.c.h.b16 %v1705
        %v1745 = vunpack.c.l.b16 %v1706
        %v1746 = vunpack.c.h.b16 %v1706
        %v1747 = vunpack.c.l.b16 %v1707
        %v1748 = vunpack.c.h.b16 %v1707
        %v1749 = vunpack.c.l.b16 %v1708
        %v1750 = vunpack.c.h.b16 %v1708
        %v1751 = vunpack.c.l.b16 %v1709
        %v1752 = vunpack.c.h.b16 %v1709
        %v1753 = vunpack.c.l.b16 %v1710
        %v1754 = vunpack.c.h.b16 %v1710
        %v1755 = vunpack.c.l.b16 %v1711
        %v1756 = vunpack.c.h.b16 %v1711
        %v1757 = vunpack.c.l.b16 %v1712
        %v1758 = vunpack.c.h.b16 %v1712
        %v1759 = vunpack.c.l.b16 %v1713
        %v1760 = vunpack.c.h.b16 %v1713
        %v1761 = vunpack.c.l.b16 %v1714
        %v1762 = vunpack.c.h.b16 %v1714
        %v1763 = vpack.c.b16 %v1733, %v1731
        %v1764 = vpack.c.b16 %v1734, %v1732
        %v1765 = vpack.c.b16 %v1737, %v1735
        %v1766 = vpack.c.b16 %v1738, %v1736
        %v1767 = vpack.c.b16 %v1741, %v1739
        %v1768 = vpack.c.b16 %v1742, %v1740
        %v1769 = vpack.c.b16 %v1745, %v1743
        %v1770 = vpack.c.b16 %v1746, %v1744
        %v1771 = vpack.c.b16 %v1749, %v1747
        %v1772 = vpack.c.b16 %v1750, %v1748
        %v1773 = vpack.c.b16 %v1753, %v1751
        %v1774 = vpack.c.b16 %v1754, %v1752
        %v1775 = vpack.c.b16 %v1757, %v1755
        %v1776 = vpack.c.b16 %v1758, %v1756
        %v1777 = vpack.c.b16 %v1761, %v1759
        %v1778 = vpack.c.b16 %v1762, %v1760
        %1795 = vmatpush.bf16.msra.mxu0 %v1777
        %1796 = vmatpush.bf16.msra.mxu0 %v1775
        %1797 = vmatpush.bf16.msra.mxu0 %v1773
        %1798 = vmatpush.bf16.msra.mxu0 %v1771
        %1799 = vmatpush.bf16.msra.mxu0 %v1769
        %1800 = vmatpush.bf16.msra.mxu0 %v1767
        %1801 = vmatpush.bf16.msra.mxu0 %v1765
        %1802 = vmatpush.bf16.msra.mxu0 %v1763
        %1803 = vmatmul.bf16.gmra.mxu0 %v1289
        %v1804 = vpop.f32.mrf.mxu0
        %v1805 = vadd.f32 0.0, %v1804
        %v1806 = vpop.f32.mrf.mxu0
        %1807 = vdwg.mxu0
        %1808 = vmatpush.bf16.msra.mxu0 %v1778
        %1809 = vmatpush.bf16.msra.mxu0 %v1776
        %1810 = vmatpush.bf16.msra.mxu0 %v1774
        %1811 = vmatpush.bf16.msra.mxu0 %v1772
        %1812 = vmatpush.bf16.msra.mxu0 %v1770
        %1813 = vmatpush.bf16.msra.mxu0 %v1768
        %1814 = vmatpush.bf16.msra.mxu0 %v1766
        %1815 = vmatpush.bf16.msra.mxu0 %v1764
        %1816 = vmatmul.bf16.gmra.mxu0 %v1289
        %v1817 = vpop.f32.mrf.mxu0
        %v1818 = vadd.f32 0.0, %v1817
        %v1819 = vpop.f32.mrf.mxu0
        %1820 = vdwg.mxu0
        %v1821 = vadd.f32 %v1696, %v1805
        %v1822 = vadd.f32 %v1697, %v1818
        %s1823 = scalar_lea.vmem [#allocation7], 512
        %v1824 = vld [vmem:[%s1823] sm:$0xff]
        %v1825 = vld [vmem:[%s1823 + $0x8] sm:$0xff]
        %v1826 = vld [vmem:[%s1823 + $0x10] sm:$0xff]
        %v1827 = vld [vmem:[%s1823 + $0x18] sm:$0xff]
        %v1828 = vld [vmem:[%s1823 + $0x20] sm:$0xff]
        %v1829 = vld [vmem:[%s1823 + $0x28] sm:$0xff]
        %v1830 = vld [vmem:[%s1823 + $0x30] sm:$0xff]
        %v1831 = vld [vmem:[%s1823 + $0x38] sm:$0xff]
        %v1832 = vld [vmem:[%s1823 + $0x40] sm:$0xff]
        %v1833 = vld [vmem:[%s1823 + $0x48] sm:$0xff]
        %v1834 = vld [vmem:[%s1823 + $0x50] sm:$0xff]
        %v1835 = vld [vmem:[%s1823 + $0x58] sm:$0xff]
        %v1836 = vld [vmem:[%s1823 + $0x60] sm:$0xff]
        %v1837 = vld [vmem:[%s1823 + $0x68] sm:$0xff]
        %v1838 = vld [vmem:[%s1823 + $0x70] sm:$0xff]
        %v1839 = vld [vmem:[%s1823 + $0x78] sm:$0xff]
        %v1856 = vunpack.c.l.b16 %v1824
        %v1857 = vunpack.c.h.b16 %v1824
        %v1858 = vunpack.c.l.b16 %v1825
        %v1859 = vunpack.c.h.b16 %v1825
        %v1860 = vunpack.c.l.b16 %v1826
        %v1861 = vunpack.c.h.b16 %v1826
        %v1862 = vunpack.c.l.b16 %v1827
        %v1863 = vunpack.c.h.b16 %v1827
        %v1864 = vunpack.c.l.b16 %v1828
        %v1865 = vunpack.c.h.b16 %v1828
        %v1866 = vunpack.c.l.b16 %v1829
        %v1867 = vunpack.c.h.b16 %v1829
        %v1868 = vunpack.c.l.b16 %v1830
        %v1869 = vunpack.c.h.b16 %v1830
        %v1870 = vunpack.c.l.b16 %v1831
        %v1871 = vunpack.c.h.b16 %v1831
        %v1872 = vunpack.c.l.b16 %v1832
        %v1873 = vunpack.c.h.b16 %v1832
        %v1874 = vunpack.c.l.b16 %v1833
        %v1875 = vunpack.c.h.b16 %v1833
        %v1876 = vunpack.c.l.b16 %v1834
        %v1877 = vunpack.c.h.b16 %v1834
        %v1878 = vunpack.c.l.b16 %v1835
        %v1879 = vunpack.c.h.b16 %v1835
        %v1880 = vunpack.c.l.b16 %v1836
        %v1881 = vunpack.c.h.b16 %v1836
        %v1882 = vunpack.c.l.b16 %v1837
        %v1883 = vunpack.c.h.b16 %v1837
        %v1884 = vunpack.c.l.b16 %v1838
        %v1885 = vunpack.c.h.b16 %v1838
        %v1886 = vunpack.c.l.b16 %v1839
        %v1887 = vunpack.c.h.b16 %v1839
        %v1888 = vpack.c.b16 %v1858, %v1856
        %v1889 = vpack.c.b16 %v1859, %v1857
        %v1890 = vpack.c.b16 %v1862, %v1860
        %v1891 = vpack.c.b16 %v1863, %v1861
        %v1892 = vpack.c.b16 %v1866, %v1864
        %v1893 = vpack.c.b16 %v1867, %v1865
        %v1894 = vpack.c.b16 %v1870, %v1868
        %v1895 = vpack.c.b16 %v1871, %v1869
        %v1896 = vpack.c.b16 %v1874, %v1872
        %v1897 = vpack.c.b16 %v1875, %v1873
        %v1898 = vpack.c.b16 %v1878, %v1876
        %v1899 = vpack.c.b16 %v1879, %v1877
        %v1900 = vpack.c.b16 %v1882, %v1880
        %v1901 = vpack.c.b16 %v1883, %v1881
        %v1902 = vpack.c.b16 %v1886, %v1884
        %v1903 = vpack.c.b16 %v1887, %v1885
        %1920 = vmatpush.bf16.msra.mxu0 %v1902
        %1921 = vmatpush.bf16.msra.mxu0 %v1900
        %1922 = vmatpush.bf16.msra.mxu0 %v1898
        %1923 = vmatpush.bf16.msra.mxu0 %v1896
        %1924 = vmatpush.bf16.msra.mxu0 %v1894
        %1925 = vmatpush.bf16.msra.mxu0 %v1892
        %1926 = vmatpush.bf16.msra.mxu0 %v1890
        %1927 = vmatpush.bf16.msra.mxu0 %v1888
        %1928 = vmatmul.bf16.gmra.mxu0 %v1308
        %v1929 = vpop.f32.mrf.mxu0
        %v1930 = vadd.f32 0.0, %v1929
        %v1931 = vpop.f32.mrf.mxu0
        %1932 = vdwg.mxu0
        %1933 = vmatpush.bf16.msra.mxu0 %v1903
        %1934 = vmatpush.bf16.msra.mxu0 %v1901
        %1935 = vmatpush.bf16.msra.mxu0 %v1899
        %1936 = vmatpush.bf16.msra.mxu0 %v1897
        %1937 = vmatpush.bf16.msra.mxu0 %v1895
        %1938 = vmatpush.bf16.msra.mxu0 %v1893
        %1939 = vmatpush.bf16.msra.mxu0 %v1891
        %1940 = vmatpush.bf16.msra.mxu0 %v1889
        %1941 = vmatmul.bf16.gmra.mxu0 %v1308
        %v1942 = vpop.f32.mrf.mxu0
        %v1943 = vadd.f32 0.0, %v1942
        %v1944 = vpop.f32.mrf.mxu0
        %1945 = vdwg.mxu0
        %v1946 = vadd.f32 %v1821, %v1930
        %v1947 = vadd.f32 %v1822, %v1943
        %1948 = vmatpush.bf16.msra.mxu0 %v1423
        %1949 = vmatpush.bf16.msra.mxu0 %v1421
        %1950 = vmatpush.bf16.msra.mxu0 %v1419
        %1951 = vmatpush.bf16.msra.mxu0 %v1417
        %1952 = vmatpush.bf16.msra.mxu0 %v1415
        %1953 = vmatpush.bf16.msra.mxu0 %v1413
        %1954 = vmatpush.bf16.msra.mxu0 %v1411
        %1955 = vmatpush.bf16.msra.mxu0 %v1409
        %1956 = vmatmul.bf16.gmra.mxu0 %v1270
        %v1957 = vpop.f32.mrf.mxu0
        %v1958 = vadd.f32 0.0, %v1957
        %v1959 = vpop.f32.mrf.mxu0
        %1960 = vdwg.mxu0
        %1961 = vmatpush.bf16.msra.mxu0 %v1424
        %1962 = vmatpush.bf16.msra.mxu0 %v1422
        %1963 = vmatpush.bf16.msra.mxu0 %v1420
        %1964 = vmatpush.bf16.msra.mxu0 %v1418
        %1965 = vmatpush.bf16.msra.mxu0 %v1416
        %1966 = vmatpush.bf16.msra.mxu0 %v1414
        %1967 = vmatpush.bf16.msra.mxu0 %v1412
        %1968 = vmatpush.bf16.msra.mxu0 %v1410
        %1969 = vmatmul.bf16.gmra.mxu0 %v1270
        %v1970 = vpop.f32.mrf.mxu0
        %v1971 = vadd.f32 0.0, %v1970
        %v1972 = vpop.f32.mrf.mxu0
        %1973 = vdwg.mxu0
        %1974 = vmatpush.bf16.msra.mxu0 %v1529
        %1975 = vmatpush.bf16.msra.mxu0 %v1527
        %1976 = vmatpush.bf16.msra.mxu0 %v1525
        %1977 = vmatpush.bf16.msra.mxu0 %v1523
        %1978 = vmatpush.bf16.msra.mxu0 %v1521
        %1979 = vmatpush.bf16.msra.mxu0 %v1519
        %1980 = vmatpush.bf16.msra.mxu0 %v1517
        %1981 = vmatpush.bf16.msra.mxu0 %v1515
        %1982 = vmatmul.bf16.gmra.mxu0 %v1251
        %v1983 = vpop.f32.mrf.mxu0
        %v1984 = vadd.f32 %v1958, %v1983
        %v1985 = vpop.f32.mrf.mxu0
        %1986 = vdwg.mxu0
        %1987 = vmatpush.bf16.msra.mxu0 %v1530
        %1988 = vmatpush.bf16.msra.mxu0 %v1528
        %1989 = vmatpush.bf16.msra.mxu0 %v1526
        %1990 = vmatpush.bf16.msra.mxu0 %v1524
        %1991 = vmatpush.bf16.msra.mxu0 %v1522
        %1992 = vmatpush.bf16.msra.mxu0 %v1520
        %1993 = vmatpush.bf16.msra.mxu0 %v1518
        %1994 = vmatpush.bf16.msra.mxu0 %v1516
        %1995 = vmatmul.bf16.gmra.mxu0 %v1251
        %v1996 = vpop.f32.mrf.mxu0
        %v1997 = vadd.f32 %v1971, %v1996
        %v1998 = vpop.f32.mrf.mxu0
        %1999 = vdwg.mxu0
        %2000 = vmatpush.bf16.msra.mxu0 %v1652
        %2001 = vmatpush.bf16.msra.mxu0 %v1650
        %2002 = vmatpush.bf16.msra.mxu0 %v1648
        %2003 = vmatpush.bf16.msra.mxu0 %v1646
        %2004 = vmatpush.bf16.msra.mxu0 %v1644
        %2005 = vmatpush.bf16.msra.mxu0 %v1642
        %2006 = vmatpush.bf16.msra.mxu0 %v1640
        %2007 = vmatpush.bf16.msra.mxu0 %v1638
        %2008 = vmatmul.bf16.gmra.mxu0 %v1289
        %v2009 = vpop.f32.mrf.mxu0
        %v2010 = vadd.f32 0.0, %v2009
        %v2011 = vpop.f32.mrf.mxu0
        %2012 = vdwg.mxu0
        %2013 = vmatpush.bf16.msra.mxu0 %v1653
        %2014 = vmatpush.bf16.msra.mxu0 %v1651
        %2015 = vmatpush.bf16.msra.mxu0 %v1649
        %2016 = vmatpush.bf16.msra.mxu0 %v1647
        %2017 = vmatpush.bf16.msra.mxu0 %v1645
        %2018 = vmatpush.bf16.msra.mxu0 %v1643
        %2019 = vmatpush.bf16.msra.mxu0 %v1641
        %2020 = vmatpush.bf16.msra.mxu0 %v1639
        %2021 = vmatmul.bf16.gmra.mxu0 %v1289
        %v2022 = vpop.f32.mrf.mxu0
        %v2023 = vadd.f32 0.0, %v2022
        %v2024 = vpop.f32.mrf.mxu0
        %2025 = vdwg.mxu0
        %v2026 = vadd.f32 %v1984, %v2010
        %v2027 = vadd.f32 %v1997, %v2023
        %2028 = vmatpush.bf16.msra.mxu0 %v1777
        %2029 = vmatpush.bf16.msra.mxu0 %v1775
        %2030 = vmatpush.bf16.msra.mxu0 %v1773
        %2031 = vmatpush.bf16.msra.mxu0 %v1771
        %2032 = vmatpush.bf16.msra.mxu0 %v1769
        %2033 = vmatpush.bf16.msra.mxu0 %v1767
        %2034 = vmatpush.bf16.msra.mxu0 %v1765
        %2035 = vmatpush.bf16.msra.mxu0 %v1763
        %2036 = vmatmul.bf16.gmra.mxu0 %v1308
        %v2037 = vpop.f32.mrf.mxu0
        %v2038 = vadd.f32 0.0, %v2037
        %v2039 = vpop.f32.mrf.mxu0
        %2040 = vdwg.mxu0
        %2041 = vmatpush.bf16.msra.mxu0 %v1778
        %2042 = vmatpush.bf16.msra.mxu0 %v1776
        %2043 = vmatpush.bf16.msra.mxu0 %v1774
        %2044 = vmatpush.bf16.msra.mxu0 %v1772
        %2045 = vmatpush.bf16.msra.mxu0 %v1770
        %2046 = vmatpush.bf16.msra.mxu0 %v1768
        %2047 = vmatpush.bf16.msra.mxu0 %v1766
        %2048 = vmatpush.bf16.msra.mxu0 %v1764
        %2049 = vmatmul.bf16.gmra.mxu0 %v1308
        %v2050 = vpop.f32.mrf.mxu0
        %v2051 = vadd.f32 0.0, %v2050
        %v2052 = vpop.f32.mrf.mxu0
        %2053 = vdwg.mxu0
        %v2054 = vadd.f32 %v2026, %v2038
        %v2055 = vadd.f32 %v2027, %v2051
        %2056 = vmatpush.bf16.msra.mxu0 %v1902
        %2057 = vmatpush.bf16.msra.mxu0 %v1900
        %2058 = vmatpush.bf16.msra.mxu0 %v1898
        %2059 = vmatpush.bf16.msra.mxu0 %v1896
        %2060 = vmatpush.bf16.msra.mxu0 %v1894
        %2061 = vmatpush.bf16.msra.mxu0 %v1892
        %2062 = vmatpush.bf16.msra.mxu0 %v1890
        %2063 = vmatpush.bf16.msra.mxu0 %v1888
        %2064 = vmatmul.bf16.gmra.mxu0 %v1327
        %v2065 = vpop.f32.mrf.mxu0
        %v2066 = vadd.f32 0.0, %v2065
        %v2067 = vpop.f32.mrf.mxu0
        %2068 = vdwg.mxu0
        %2069 = vmatpush.bf16.msra.mxu0 %v1903
        %2070 = vmatpush.bf16.msra.mxu0 %v1901
        %2071 = vmatpush.bf16.msra.mxu0 %v1899
        %2072 = vmatpush.bf16.msra.mxu0 %v1897
        %2073 = vmatpush.bf16.msra.mxu0 %v1895
        %2074 = vmatpush.bf16.msra.mxu0 %v1893
        %2075 = vmatpush.bf16.msra.mxu0 %v1891
        %2076 = vmatpush.bf16.msra.mxu0 %v1889
        %2077 = vmatmul.bf16.gmra.mxu0 %v1327
        %v2078 = vpop.f32.mrf.mxu0
        %v2079 = vadd.f32 0.0, %v2078
        %v2080 = vpop.f32.mrf.mxu0
        %2081 = vdwg.mxu0
        %v2082 = vadd.f32 %v2054, %v2066
        %v2083 = vadd.f32 %v2055, %v2079
        %v2084 = vmax.f32 %v1946, %v2082
        %v2085 = vmax.f32 %v1947, %v2083
        %v2086 = vmax.f32 %v2084, %v2085
        %v2087 = vld [vmem:[#allocation8] sm:$0x1]
        %v2089 = vperm.slane %v2087, 0
        %v2091 = vadd.f32 %v2086, %v2089
        %v2092 = vmax.f32 %v2091, 0.0
        %v2093 = vld [vmem:[#allocation11] sm:$0x1]
        %v2094 = vpack.c.bf16 %v2092, %v2092
        %v2095 = vld [vmem:[#allocation10] sm:$0xf]
        %v2096 = vld [vmem:[#allocation10 + $0x4] sm:$0xf]
        %v2097 = vld [vmem:[#allocation10 + $0x8] sm:$0xf]
        %v2098 = vld [vmem:[#allocation10 + $0xc] sm:$0xf]
        %v2099 = vld [vmem:[#allocation10 + $0x10] sm:$0xf]
        %v2100 = vld [vmem:[#allocation10 + $0x14] sm:$0xf]
        %v2101 = vld [vmem:[#allocation10 + $0x18] sm:$0xf]
        %v2102 = vld [vmem:[#allocation10 + $0x1c] sm:$0xf]
        %v2103 = vld [vmem:[#allocation10 + $0x20] sm:$0xf]
        %v2104 = vld [vmem:[#allocation10 + $0x24] sm:$0xf]
        %v2105 = vld [vmem:[#allocation10 + $0x28] sm:$0xf]
        %v2106 = vld [vmem:[#allocation10 + $0x2c] sm:$0xf]
        %v2107 = vld [vmem:[#allocation10 + $0x30] sm:$0xf]
        %v2108 = vld [vmem:[#allocation10 + $0x34] sm:$0xf]
        %v2109 = vld [vmem:[#allocation10 + $0x38] sm:$0xf]
        %v2110 = vld [vmem:[#allocation10 + $0x3c] sm:$0xf]
        %v2127 = vunpack.c.l.b16 %v2095
        %v2128 = vunpack.c.l.b16 %v2096
        %v2129 = vunpack.c.l.b16 %v2097
        %v2130 = vunpack.c.l.b16 %v2098
        %v2131 = vunpack.c.l.b16 %v2099
        %v2132 = vunpack.c.l.b16 %v2100
        %v2133 = vunpack.c.l.b16 %v2101
        %v2134 = vunpack.c.l.b16 %v2102
        %v2135 = vunpack.c.l.b16 %v2103
        %v2136 = vunpack.c.l.b16 %v2104
        %v2137 = vunpack.c.l.b16 %v2105
        %v2138 = vunpack.c.l.b16 %v2106
        %v2139 = vunpack.c.l.b16 %v2107
        %v2140 = vunpack.c.l.b16 %v2108
        %v2141 = vunpack.c.l.b16 %v2109
        %v2142 = vunpack.c.l.b16 %v2110
        %v2143 = vpack.c.b16 %v2128, %v2127
        %v2144 = vpack.c.b16 %v2130, %v2129
        %v2145 = vpack.c.b16 %v2132, %v2131
        %v2146 = vpack.c.b16 %v2134, %v2133
        %v2147 = vpack.c.b16 %v2136, %v2135
        %v2148 = vpack.c.b16 %v2138, %v2137
        %v2149 = vpack.c.b16 %v2140, %v2139
        %v2150 = vpack.c.b16 %v2142, %v2141
        %2159 = vmatpush.bf16.msra.mxu0 %v2150
        %2160 = vmatpush.bf16.msra.mxu0 %v2149
        %2161 = vmatpush.bf16.msra.mxu0 %v2148
        %2162 = vmatpush.bf16.msra.mxu0 %v2147
        %2163 = vmatpush.bf16.msra.mxu0 %v2146
        %2164 = vmatpush.bf16.msra.mxu0 %v2145
        %2165 = vmatpush.bf16.msra.mxu0 %v2144
        %2166 = vmatpush.bf16.msra.mxu0 %v2143
        %2167 = vmatmul.bf16.gmra.mxu0 %v2094
        %v2168 = vpop.f32.mrf.mxu0
        %v2169 = vadd.f32 0.0, %v2168
        %v2170 = vpop.f32.mrf.mxu0
        %2171 = vdwg.mxu0
        %v2172 = vadd.f32 %v2093, %v2169
        %s2173 = scalar_lea.vmem [#allocation10], 64
        %v2174 = vld [vmem:[%s2173] sm:$0xf]
        %v2175 = vld [vmem:[%s2173 + $0x4] sm:$0xf]
        %v2176 = vld [vmem:[%s2173 + $0x8] sm:$0xf]
        %v2177 = vld [vmem:[%s2173 + $0xc] sm:$0xf]
        %v2178 = vld [vmem:[%s2173 + $0x10] sm:$0xf]
        %v2179 = vld [vmem:[%s2173 + $0x14] sm:$0xf]
        %v2180 = vld [vmem:[%s2173 + $0x18] sm:$0xf]
        %v2181 = vld [vmem:[%s2173 + $0x1c] sm:$0xf]
        %v2182 = vld [vmem:[%s2173 + $0x20] sm:$0xf]
        %v2183 = vld [vmem:[%s2173 + $0x24] sm:$0xf]
        %v2184 = vld [vmem:[%s2173 + $0x28] sm:$0xf]
        %v2185 = vld [vmem:[%s2173 + $0x2c] sm:$0xf]
        %v2186 = vld [vmem:[%s2173 + $0x30] sm:$0xf]
        %v2187 = vld [vmem:[%s2173 + $0x34] sm:$0xf]
        %v2188 = vld [vmem:[%s2173 + $0x38] sm:$0xf]
        %v2189 = vld [vmem:[%s2173 + $0x3c] sm:$0xf]
        %v2191 = vshrl.u32 %v2094, 16
        %v2210 = vunpack.c.l.b16 %v2174
        %v2211 = vunpack.c.l.b16 %v2175
        %v2212 = vunpack.c.l.b16 %v2176
        %v2213 = vunpack.c.l.b16 %v2177
        %v2214 = vunpack.c.l.b16 %v2178
        %v2215 = vunpack.c.l.b16 %v2179
        %v2216 = vunpack.c.l.b16 %v2180
        %v2217 = vunpack.c.l.b16 %v2181
        %v2218 = vunpack.c.l.b16 %v2182
        %v2219 = vunpack.c.l.b16 %v2183
        %v2220 = vunpack.c.l.b16 %v2184
        %v2221 = vunpack.c.l.b16 %v2185
        %v2222 = vunpack.c.l.b16 %v2186
        %v2223 = vunpack.c.l.b16 %v2187
        %v2224 = vunpack.c.l.b16 %v2188
        %v2225 = vunpack.c.l.b16 %v2189
        %v2226 = vpack.c.b16 %v2211, %v2210
        %v2227 = vpack.c.b16 %v2213, %v2212
        %v2228 = vpack.c.b16 %v2215, %v2214
        %v2229 = vpack.c.b16 %v2217, %v2216
        %v2230 = vpack.c.b16 %v2219, %v2218
        %v2231 = vpack.c.b16 %v2221, %v2220
        %v2232 = vpack.c.b16 %v2223, %v2222
        %v2233 = vpack.c.b16 %v2225, %v2224
        %2242 = vmatpush.bf16.msra.mxu0 %v2233
        %2243 = vmatpush.bf16.msra.mxu0 %v2232
        %2244 = vmatpush.bf16.msra.mxu0 %v2231
        %2245 = vmatpush.bf16.msra.mxu0 %v2230
        %2246 = vmatpush.bf16.msra.mxu0 %v2229
        %2247 = vmatpush.bf16.msra.mxu0 %v2228
        %2248 = vmatpush.bf16.msra.mxu0 %v2227
        %2249 = vmatpush.bf16.msra.mxu0 %v2226
        %2250 = vmatmul.bf16.gmra.mxu0 %v2191
        %v2251 = vpop.f32.mrf.mxu0
        %v2252 = vadd.f32 0.0, %v2251
        %v2253 = vpop.f32.mrf.mxu0
        %2254 = vdwg.mxu0
        %v2255 = vadd.f32 %v2172, %v2252
        %s2256 = scalar_lea.vmem [#allocation10], 128
        %v2257 = vld [vmem:[%s2256] sm:$0xf]
        %v2258 = vld [vmem:[%s2256 + $0x4] sm:$0xf]
        %v2259 = vld [vmem:[%s2256 + $0x8] sm:$0xf]
        %v2260 = vld [vmem:[%s2256 + $0xc] sm:$0xf]
        %v2261 = vld [vmem:[%s2256 + $0x10] sm:$0xf]
        %v2262 = vld [vmem:[%s2256 + $0x14] sm:$0xf]
        %v2263 = vld [vmem:[%s2256 + $0x18] sm:$0xf]
        %v2264 = vld [vmem:[%s2256 + $0x1c] sm:$0xf]
        %v2265 = vld [vmem:[%s2256 + $0x20] sm:$0xf]
        %v2266 = vld [vmem:[%s2256 + $0x24] sm:$0xf]
        %v2267 = vld [vmem:[%s2256 + $0x28] sm:$0xf]
        %v2268 = vld [vmem:[%s2256 + $0x2c] sm:$0xf]
        %v2269 = vld [vmem:[%s2256 + $0x30] sm:$0xf]
        %v2270 = vld [vmem:[%s2256 + $0x34] sm:$0xf]
        %v2271 = vld [vmem:[%s2256 + $0x38] sm:$0xf]
        %v2272 = vld [vmem:[%s2256 + $0x3c] sm:$0xf]
        %v2274 = vrot.slane %v2094, 1
        %v2292 = vunpack.c.l.b16 %v2257
        %v2293 = vunpack.c.l.b16 %v2258
        %v2294 = vunpack.c.l.b16 %v2259
        %v2295 = vunpack.c.l.b16 %v2260
        %v2296 = vunpack.c.l.b16 %v2261
        %v2297 = vunpack.c.l.b16 %v2262
        %v2298 = vunpack.c.l.b16 %v2263
        %v2299 = vunpack.c.l.b16 %v2264
        %v2300 = vunpack.c.l.b16 %v2265
        %v2301 = vunpack.c.l.b16 %v2266
        %v2302 = vunpack.c.l.b16 %v2267
        %v2303 = vunpack.c.l.b16 %v2268
        %v2304 = vunpack.c.l.b16 %v2269
        %v2305 = vunpack.c.l.b16 %v2270
        %v2306 = vunpack.c.l.b16 %v2271
        %v2307 = vunpack.c.l.b16 %v2272
        %v2308 = vpack.c.b16 %v2293, %v2292
        %v2309 = vpack.c.b16 %v2295, %v2294
        %v2310 = vpack.c.b16 %v2297, %v2296
        %v2311 = vpack.c.b16 %v2299, %v2298
        %v2312 = vpack.c.b16 %v2301, %v2300
        %v2313 = vpack.c.b16 %v2303, %v2302
        %v2314 = vpack.c.b16 %v2305, %v2304
        %v2315 = vpack.c.b16 %v2307, %v2306
        %2324 = vmatpush.bf16.msra.mxu0 %v2315
        %2325 = vmatpush.bf16.msra.mxu0 %v2314
        %2326 = vmatpush.bf16.msra.mxu0 %v2313
        %2327 = vmatpush.bf16.msra.mxu0 %v2312
        %2328 = vmatpush.bf16.msra.mxu0 %v2311
        %2329 = vmatpush.bf16.msra.mxu0 %v2310
        %2330 = vmatpush.bf16.msra.mxu0 %v2309
        %2331 = vmatpush.bf16.msra.mxu0 %v2308
        %2332 = vmatmul.bf16.gmra.mxu0 %v2274
        %v2333 = vpop.f32.mrf.mxu0
        %v2334 = vadd.f32 0.0, %v2333
        %v2335 = vpop.f32.mrf.mxu0
        %2336 = vdwg.mxu0
        %v2337 = vadd.f32 %v2255, %v2334
        %s2338 = scalar_lea.vmem [#allocation10], 192
        %v2339 = vld [vmem:[%s2338] sm:$0xf]
        %v2340 = vld [vmem:[%s2338 + $0x4] sm:$0xf]
        %v2341 = vld [vmem:[%s2338 + $0x8] sm:$0xf]
        %v2342 = vld [vmem:[%s2338 + $0xc] sm:$0xf]
        %v2343 = vld [vmem:[%s2338 + $0x10] sm:$0xf]
        %v2344 = vld [vmem:[%s2338 + $0x14] sm:$0xf]
        %v2345 = vld [vmem:[%s2338 + $0x18] sm:$0xf]
        %v2346 = vld [vmem:[%s2338 + $0x1c] sm:$0xf]
        %v2347 = vld [vmem:[%s2338 + $0x20] sm:$0xf]
        %v2348 = vld [vmem:[%s2338 + $0x24] sm:$0xf]
        %v2349 = vld [vmem:[%s2338 + $0x28] sm:$0xf]
        %v2350 = vld [vmem:[%s2338 + $0x2c] sm:$0xf]
        %v2351 = vld [vmem:[%s2338 + $0x30] sm:$0xf]
        %v2352 = vld [vmem:[%s2338 + $0x34] sm:$0xf]
        %v2353 = vld [vmem:[%s2338 + $0x38] sm:$0xf]
        %v2354 = vld [vmem:[%s2338 + $0x3c] sm:$0xf]
        %v2355 = vrot.slane %v2191, 1
        %v2373 = vunpack.c.l.b16 %v2339
        %v2374 = vunpack.c.l.b16 %v2340
        %v2375 = vunpack.c.l.b16 %v2341
        %v2376 = vunpack.c.l.b16 %v2342
        %v2377 = vunpack.c.l.b16 %v2343
        %v2378 = vunpack.c.l.b16 %v2344
        %v2379 = vunpack.c.l.b16 %v2345
        %v2380 = vunpack.c.l.b16 %v2346
        %v2381 = vunpack.c.l.b16 %v2347
        %v2382 = vunpack.c.l.b16 %v2348
        %v2383 = vunpack.c.l.b16 %v2349
        %v2384 = vunpack.c.l.b16 %v2350
        %v2385 = vunpack.c.l.b16 %v2351
        %v2386 = vunpack.c.l.b16 %v2352
        %v2387 = vunpack.c.l.b16 %v2353
        %v2388 = vunpack.c.l.b16 %v2354
        %v2389 = vpack.c.b16 %v2374, %v2373
        %v2390 = vpack.c.b16 %v2376, %v2375
        %v2391 = vpack.c.b16 %v2378, %v2377
        %v2392 = vpack.c.b16 %v2380, %v2379
        %v2393 = vpack.c.b16 %v2382, %v2381
        %v2394 = vpack.c.b16 %v2384, %v2383
        %v2395 = vpack.c.b16 %v2386, %v2385
        %v2396 = vpack.c.b16 %v2388, %v2387
        %2405 = vmatpush.bf16.msra.mxu0 %v2396
        %2406 = vmatpush.bf16.msra.mxu0 %v2395
        %2407 = vmatpush.bf16.msra.mxu0 %v2394
        %2408 = vmatpush.bf16.msra.mxu0 %v2393
        %2409 = vmatpush.bf16.msra.mxu0 %v2392
        %2410 = vmatpush.bf16.msra.mxu0 %v2391
        %2411 = vmatpush.bf16.msra.mxu0 %v2390
        %2412 = vmatpush.bf16.msra.mxu0 %v2389
        %2413 = vmatmul.bf16.gmra.mxu0 %v2355
        %v2414 = vpop.f32.mrf.mxu0
        %v2415 = vadd.f32 0.0, %v2414
        %v2416 = vpop.f32.mrf.mxu0
        %2417 = vdwg.mxu0
        %v2418 = vadd.f32 %v2337, %v2415
        %s2419 = scalar_lea.vmem [#allocation10], 256
        %v2420 = vld [vmem:[%s2419] sm:$0xf]
        %v2421 = vld [vmem:[%s2419 + $0x4] sm:$0xf]
        %v2422 = vld [vmem:[%s2419 + $0x8] sm:$0xf]
        %v2423 = vld [vmem:[%s2419 + $0xc] sm:$0xf]
        %v2424 = vld [vmem:[%s2419 + $0x10] sm:$0xf]
        %v2425 = vld [vmem:[%s2419 + $0x14] sm:$0xf]
        %v2426 = vld [vmem:[%s2419 + $0x18] sm:$0xf]
        %v2427 = vld [vmem:[%s2419 + $0x1c] sm:$0xf]
        %v2428 = vld [vmem:[%s2419 + $0x20] sm:$0xf]
        %v2429 = vld [vmem:[%s2419 + $0x24] sm:$0xf]
        %v2430 = vld [vmem:[%s2419 + $0x28] sm:$0xf]
        %v2431 = vld [vmem:[%s2419 + $0x2c] sm:$0xf]
        %v2432 = vld [vmem:[%s2419 + $0x30] sm:$0xf]
        %v2433 = vld [vmem:[%s2419 + $0x34] sm:$0xf]
        %v2434 = vld [vmem:[%s2419 + $0x38] sm:$0xf]
        %v2435 = vld [vmem:[%s2419 + $0x3c] sm:$0xf]
        %v2436 = vrot.slane %v2094, 2
        %v2454 = vunpack.c.l.b16 %v2420
        %v2455 = vunpack.c.l.b16 %v2421
        %v2456 = vunpack.c.l.b16 %v2422
        %v2457 = vunpack.c.l.b16 %v2423
        %v2458 = vunpack.c.l.b16 %v2424
        %v2459 = vunpack.c.l.b16 %v2425
        %v2460 = vunpack.c.l.b16 %v2426
        %v2461 = vunpack.c.l.b16 %v2427
        %v2462 = vunpack.c.l.b16 %v2428
        %v2463 = vunpack.c.l.b16 %v2429
        %v2464 = vunpack.c.l.b16 %v2430
        %v2465 = vunpack.c.l.b16 %v2431
        %v2466 = vunpack.c.l.b16 %v2432
        %v2467 = vunpack.c.l.b16 %v2433
        %v2468 = vunpack.c.l.b16 %v2434
        %v2469 = vunpack.c.l.b16 %v2435
        %v2470 = vpack.c.b16 %v2455, %v2454
        %v2471 = vpack.c.b16 %v2457, %v2456
        %v2472 = vpack.c.b16 %v2459, %v2458
        %v2473 = vpack.c.b16 %v2461, %v2460
        %v2474 = vpack.c.b16 %v2463, %v2462
        %v2475 = vpack.c.b16 %v2465, %v2464
        %v2476 = vpack.c.b16 %v2467, %v2466
        %v2477 = vpack.c.b16 %v2469, %v2468
        %2486 = vmatpush.bf16.msra.mxu0 %v2477
        %2487 = vmatpush.bf16.msra.mxu0 %v2476
        %2488 = vmatpush.bf16.msra.mxu0 %v2475
        %2489 = vmatpush.bf16.msra.mxu0 %v2474
        %2490 = vmatpush.bf16.msra.mxu0 %v2473
        %2491 = vmatpush.bf16.msra.mxu0 %v2472
        %2492 = vmatpush.bf16.msra.mxu0 %v2471
        %2493 = vmatpush.bf16.msra.mxu0 %v2470
        %2494 = vmatmul.bf16.gmra.mxu0 %v2436
        %v2495 = vpop.f32.mrf.mxu0
        %v2496 = vadd.f32 0.0, %v2495
        %v2497 = vpop.f32.mrf.mxu0
        %2498 = vdwg.mxu0
        %v2499 = vadd.f32 %v2418, %v2496
        %v2500 = vmax.f32 %v2499, 0.0
        %v2501 = vpack.c.bf16 %v2500, %v2500
        %v2502 = vld [vmem:[#allocation13] sm:$0xff]
        %v2503 = vld [vmem:[#allocation13 + $0x8] sm:$0xff]
        %v2504 = vld [vmem:[#allocation13 + $0x10] sm:$0xff]
        %v2505 = vld [vmem:[#allocation13 + $0x18] sm:$0xff]
        %v2506 = vld [vmem:[#allocation13 + $0x20] sm:$0xff]
        %v2507 = vld [vmem:[#allocation13 + $0x28] sm:$0xff]
        %v2508 = vld [vmem:[#allocation13 + $0x30] sm:$0xff]
        %v2509 = vld [vmem:[#allocation13 + $0x38] sm:$0xff]
        %v2510 = vld [vmem:[#allocation13 + $0x40] sm:$0xff]
        %v2511 = vld [vmem:[#allocation13 + $0x48] sm:$0xff]
        %v2512 = vld [vmem:[#allocation13 + $0x50] sm:$0xff]
        %v2513 = vld [vmem:[#allocation13 + $0x58] sm:$0xff]
        %v2514 = vld [vmem:[#allocation13 + $0x60] sm:$0xff]
        %v2515 = vld [vmem:[#allocation13 + $0x68] sm:$0xff]
        %v2516 = vld [vmem:[#allocation13 + $0x70] sm:$0xff]
        %v2517 = vld [vmem:[#allocation13 + $0x78] sm:$0xff]
        %v2518 = vld [vmem:[%s10] sm:$0x3]
        %v2535 = vunpack.c.l.b16 %v2502
        %v2536 = vunpack.c.h.b16 %v2502
        %v2537 = vunpack.c.l.b16 %v2503
        %v2538 = vunpack.c.h.b16 %v2503
        %v2539 = vunpack.c.l.b16 %v2504
        %v2540 = vunpack.c.h.b16 %v2504
        %v2541 = vunpack.c.l.b16 %v2505
        %v2542 = vunpack.c.h.b16 %v2505
        %v2543 = vunpack.c.l.b16 %v2506
        %v2544 = vunpack.c.h.b16 %v2506
        %v2545 = vunpack.c.l.b16 %v2507
        %v2546 = vunpack.c.h.b16 %v2507
        %v2547 = vunpack.c.l.b16 %v2508
        %v2548 = vunpack.c.h.b16 %v2508
        %v2549 = vunpack.c.l.b16 %v2509
        %v2550 = vunpack.c.h.b16 %v2509
        %v2551 = vunpack.c.l.b16 %v2510
        %v2552 = vunpack.c.h.b16 %v2510
        %v2553 = vunpack.c.l.b16 %v2511
        %v2554 = vunpack.c.h.b16 %v2511
        %v2555 = vunpack.c.l.b16 %v2512
        %v2556 = vunpack.c.h.b16 %v2512
        %v2557 = vunpack.c.l.b16 %v2513
        %v2558 = vunpack.c.h.b16 %v2513
        %v2559 = vunpack.c.l.b16 %v2514
        %v2560 = vunpack.c.h.b16 %v2514
        %v2561 = vunpack.c.l.b16 %v2515
        %v2562 = vunpack.c.h.b16 %v2515
        %v2563 = vunpack.c.l.b16 %v2516
        %v2564 = vunpack.c.h.b16 %v2516
        %v2565 = vunpack.c.l.b16 %v2517
        %v2566 = vunpack.c.h.b16 %v2517
        %v2567 = vpack.c.b16 %v2537, %v2535
        %v2568 = vpack.c.b16 %v2538, %v2536
        %v2569 = vpack.c.b16 %v2541, %v2539
        %v2570 = vpack.c.b16 %v2542, %v2540
        %v2571 = vpack.c.b16 %v2545, %v2543
        %v2572 = vpack.c.b16 %v2546, %v2544
        %v2573 = vpack.c.b16 %v2549, %v2547
        %v2574 = vpack.c.b16 %v2550, %v2548
        %v2575 = vpack.c.b16 %v2553, %v2551
        %v2576 = vpack.c.b16 %v2554, %v2552
        %v2577 = vpack.c.b16 %v2557, %v2555
        %v2578 = vpack.c.b16 %v2558, %v2556
        %v2579 = vpack.c.b16 %v2561, %v2559
        %v2580 = vpack.c.b16 %v2562, %v2560
        %v2581 = vpack.c.b16 %v2565, %v2563
        %v2582 = vpack.c.b16 %v2566, %v2564
        %v2600 = vperm.slane %v2518, 0
        %v2601 = vperm.slane %v2518, 1
        %2604 = vmatpush.bf16.msra.mxu0 %v2581
        %2605 = vmatpush.bf16.msra.mxu0 %v2579
        %2606 = vmatpush.bf16.msra.mxu0 %v2577
        %2607 = vmatpush.bf16.msra.mxu0 %v2575
        %2608 = vmatpush.bf16.msra.mxu0 %v2573
        %2609 = vmatpush.bf16.msra.mxu0 %v2571
        %2610 = vmatpush.bf16.msra.mxu0 %v2569
        %2611 = vmatpush.bf16.msra.mxu0 %v2567
        %2612 = vmatmul.bf16.gmra.mxu0 %v2501
        %v2613 = vpop.f32.mrf.mxu0
        %v2614 = vadd.f32 %v2600, %v2613
        %v2615 = vpop.f32.mrf.mxu0
        %2616 = vdwg.mxu0
        %2617 = vmatpush.bf16.msra.mxu0 %v2582
        %2618 = vmatpush.bf16.msra.mxu0 %v2580
        %2619 = vmatpush.bf16.msra.mxu0 %v2578
        %2620 = vmatpush.bf16.msra.mxu0 %v2576
        %2621 = vmatpush.bf16.msra.mxu0 %v2574
        %2622 = vmatpush.bf16.msra.mxu0 %v2572
        %2623 = vmatpush.bf16.msra.mxu0 %v2570
        %2624 = vmatpush.bf16.msra.mxu0 %v2568
        %2625 = vmatmul.bf16.gmra.mxu0 %v2501
        %v2626 = vpop.f32.mrf.mxu0
        %v2627 = vadd.f32 %v2601, %v2626
        %v2628 = vpop.f32.mrf.mxu0
        %2629 = vdwg.mxu0
        %v2630 = vmax.f32 %v2614, 0.0
        %v2631 = vmax.f32 %v2627, 0.0
        %v2632 = vpack.c.bf16 %v2630, %v2630
        %v2633 = vpack.c.bf16 %v2631, %v2631
        %v2634 = vld [vmem:[#allocation14] sm:$0xf]
        %v2635 = vld [vmem:[#allocation14 + $0x4] sm:$0xf]
        %v2636 = vld [vmem:[#allocation14 + $0x8] sm:$0xf]
        %v2637 = vld [vmem:[#allocation14 + $0xc] sm:$0xf]
        %v2638 = vld [vmem:[#allocation14 + $0x10] sm:$0xf]
        %v2639 = vld [vmem:[#allocation14 + $0x14] sm:$0xf]
        %v2640 = vld [vmem:[#allocation14 + $0x18] sm:$0xf]
        %v2641 = vld [vmem:[#allocation14 + $0x1c] sm:$0xf]
        %v2642 = vld [vmem:[#allocation14 + $0x20] sm:$0xf]
        %v2643 = vld [vmem:[#allocation14 + $0x24] sm:$0xf]
        %v2644 = vld [vmem:[#allocation14 + $0x28] sm:$0xf]
        %v2645 = vld [vmem:[#allocation14 + $0x2c] sm:$0xf]
        %v2646 = vld [vmem:[#allocation14 + $0x30] sm:$0xf]
        %v2647 = vld [vmem:[#allocation14 + $0x34] sm:$0xf]
        %v2648 = vld [vmem:[#allocation14 + $0x38] sm:$0xf]
        %v2649 = vld [vmem:[#allocation14 + $0x3c] sm:$0xf]
        %v2650 = vld [vmem:[#allocation14 + $0x40] sm:$0xf]
        %v2651 = vld [vmem:[#allocation14 + $0x44] sm:$0xf]
        %v2652 = vld [vmem:[#allocation14 + $0x48] sm:$0xf]
        %v2653 = vld [vmem:[#allocation14 + $0x4c] sm:$0xf]
        %v2654 = vld [vmem:[#allocation14 + $0x50] sm:$0xf]
        %v2655 = vld [vmem:[#allocation14 + $0x54] sm:$0xf]
        %v2656 = vld [vmem:[#allocation14 + $0x58] sm:$0xf]
        %v2657 = vld [vmem:[#allocation14 + $0x5c] sm:$0xf]
        %v2658 = vld [vmem:[#allocation14 + $0x60] sm:$0xf]
        %v2659 = vld [vmem:[#allocation14 + $0x64] sm:$0xf]
        %v2660 = vld [vmem:[#allocation14 + $0x68] sm:$0xf]
        %v2661 = vld [vmem:[#allocation14 + $0x6c] sm:$0xf]
        %v2662 = vld [vmem:[#allocation14 + $0x70] sm:$0xf]
        %v2663 = vld [vmem:[#allocation14 + $0x74] sm:$0xf]
        %v2664 = vld [vmem:[#allocation14 + $0x78] sm:$0xf]
        %v2665 = vld [vmem:[#allocation14 + $0x7c] sm:$0xf]
        %v2666 = vld [vmem:[#allocation16] sm:$0x1]
        %v2699 = vunpack.c.l.b16 %v2634
        %v2700 = vunpack.c.l.b16 %v2635
        %v2701 = vunpack.c.l.b16 %v2636
        %v2702 = vunpack.c.l.b16 %v2637
        %v2703 = vunpack.c.l.b16 %v2638
        %v2704 = vunpack.c.l.b16 %v2639
        %v2705 = vunpack.c.l.b16 %v2640
        %v2706 = vunpack.c.l.b16 %v2641
        %v2707 = vunpack.c.l.b16 %v2642
        %v2708 = vunpack.c.l.b16 %v2643
        %v2709 = vunpack.c.l.b16 %v2644
        %v2710 = vunpack.c.l.b16 %v2645
        %v2711 = vunpack.c.l.b16 %v2646
        %v2712 = vunpack.c.l.b16 %v2647
        %v2713 = vunpack.c.l.b16 %v2648
        %v2714 = vunpack.c.l.b16 %v2649
        %v2715 = vunpack.c.l.b16 %v2650
        %v2716 = vunpack.c.l.b16 %v2651
        %v2717 = vunpack.c.l.b16 %v2652
        %v2718 = vunpack.c.l.b16 %v2653
        %v2719 = vunpack.c.l.b16 %v2654
        %v2720 = vunpack.c.l.b16 %v2655
        %v2721 = vunpack.c.l.b16 %v2656
        %v2722 = vunpack.c.l.b16 %v2657
        %v2723 = vunpack.c.l.b16 %v2658
        %v2724 = vunpack.c.l.b16 %v2659
        %v2725 = vunpack.c.l.b16 %v2660
        %v2726 = vunpack.c.l.b16 %v2661
        %v2727 = vunpack.c.l.b16 %v2662
        %v2728 = vunpack.c.l.b16 %v2663
        %v2729 = vunpack.c.l.b16 %v2664
        %v2730 = vunpack.c.l.b16 %v2665
        %v2731 = vpack.c.b16 %v2700, %v2699
        %v2732 = vpack.c.b16 %v2702, %v2701
        %v2733 = vpack.c.b16 %v2704, %v2703
        %v2734 = vpack.c.b16 %v2706, %v2705
        %v2735 = vpack.c.b16 %v2708, %v2707
        %v2736 = vpack.c.b16 %v2710, %v2709
        %v2737 = vpack.c.b16 %v2712, %v2711
        %v2738 = vpack.c.b16 %v2714, %v2713
        %v2739 = vpack.c.b16 %v2716, %v2715
        %v2740 = vpack.c.b16 %v2718, %v2717
        %v2741 = vpack.c.b16 %v2720, %v2719
        %v2742 = vpack.c.b16 %v2722, %v2721
        %v2743 = vpack.c.b16 %v2724, %v2723
        %v2744 = vpack.c.b16 %v2726, %v2725
        %v2745 = vpack.c.b16 %v2728, %v2727
        %v2746 = vpack.c.b16 %v2730, %v2729
        %2763 = vmatpush.bf16.msra.mxu0 %v2738
        %2764 = vmatpush.bf16.msra.mxu0 %v2737
        %2765 = vmatpush.bf16.msra.mxu0 %v2736
        %2766 = vmatpush.bf16.msra.mxu0 %v2735
        %2767 = vmatpush.bf16.msra.mxu0 %v2734
        %2768 = vmatpush.bf16.msra.mxu0 %v2733
        %2769 = vmatpush.bf16.msra.mxu0 %v2732
        %2770 = vmatpush.bf16.msra.mxu0 %v2731
        %2771 = vmatmul.bf16.gmra.mxu0 %v2632
        %v2772 = vpop.f32.mrf.mxu0
        %v2773 = vadd.f32 %v2666, %v2772
        %v2774 = vpop.f32.mrf.mxu0
        %2775 = vdwg.mxu0
        %2776 = vmatpush.bf16.msra.mxu0 %v2746
        %2777 = vmatpush.bf16.msra.mxu0 %v2745
        %2778 = vmatpush.bf16.msra.mxu0 %v2744
        %2779 = vmatpush.bf16.msra.mxu0 %v2743
        %2780 = vmatpush.bf16.msra.mxu0 %v2742
        %2781 = vmatpush.bf16.msra.mxu0 %v2741
        %2782 = vmatpush.bf16.msra.mxu0 %v2740
        %2783 = vmatpush.bf16.msra.mxu0 %v2739
        %2784 = vmatmul.bf16.gmra.mxu0 %v2633
        %v2785 = vpop.f32.mrf.mxu0
        %v2786 = vadd.f32 %v2773, %v2785
        %v2787 = vpop.f32.mrf.mxu0
        %2788 = vdwg.mxu0
        %2789 = vst [vmem:[%s585] sm:$0x1] %v2786
        %s2790 = sand.u32 %s320, 1
        %s2791 = scalar_lea.sflag [#allocation4], %s2790
        %s2792 = sand.u32 %s320, 1
        %s2793 = scalar_lea.vmem [#allocation17], %s2792
        // Predicated region
        $region109: #{net_forward.1} parent=71 // pred_check
          %p2794 = pneg %p330
        $region110: #{net_forward.1} parent=71 // pred_check_branch
          %2796 = sbr.rel (%p2794) target = $region112
        $region111: #{net_forward.1} parent=71 // pred_region
          %2798 = vsyncadd %s2791, 0
          %s2799 = scalar_lea.hbm %s13, %s34
          %s2801 = sshll.u32 %s2793, 4
          %s2802 = int_to_ptr.vmem [resolvable:$true] %s2801
          %s2803 = sshll.u32 %s2799, 4
          %s2804 = int_to_ptr.hbm [resolvable:$true] %s2803
          %2806 = dma.vmem_to_hbm [thread:$0]  %s2802, 16, %s2804, %s2791
        $region112: #{net_forward.1} parent=71 // pred_fallthru
          _
      $region72: #{net_forward.1} parent=5 // pred_fallthru
        _
      %p2807 = scmp.le.s32.totalorder 2, %s29
      // Predicated region
      $region113: #{net_forward.1} parent=5 // pred_check
        %p2808 = pneg %p2807
      $region114: #{net_forward.1} parent=5 // pred_check_branch
        %2810 = sbr.rel (%p2808) target = $region116
      $region115: #{net_forward.1} parent=5 // pred_region
        %s2811 = ssub.s32 %s29, 2
        // Predicated region
        $region117: #{net_forward.1} parent=115 // pred_check
          %p2812 = pneg %p336
        $region118: #{net_forward.1} parent=115 // pred_check_branch
          %2814 = sbr.rel (%p2812) target = $region120
        $region119: #{net_forward.1} parent=115 // pred_region
          %s2815 = sand.u32 %s321, 1
          %s2816 = scalar_lea.sflag [#allocation4], %s2815
          %s2817 = sand.u32 %s321, 1
          %s2818 = scalar_lea.vmem [#allocation17], %s2817
          %2820 = dma.done %s2816, 16
        $region120: #{net_forward.1} parent=115 // pred_fallthru
          _
      $region116: #{net_forward.1} parent=5 // pred_fallthru
        _
    $region6: #{net_forward.1} parent=1 // loop_footer
      %s33 = sadd.s32 1, %s29
    $region7: #{net_forward.1} parent=1 // loop_footer_branch
      %28 = sbr.rel target = $region3
    $region8: #{net_forward.1} parent=1 // loop_exit
      _
    %2821 = vsyncpa [#allocation3], 1
    %s2822 = scalar_lea.sflag [#allocation3], 1
    %2823 = vsyncpa %s2822, 1
    %2824 = vsyncpa [#allocation6], 1
    %2825 = vsyncpa [#allocation9], 1
    %2826 = vsyncpa [#allocation12], 1
    %2827 = vsyncpa [#allocation15], 1
    %2828 = vsyncpa [#allocation4], 1
    %s2829 = scalar_lea.sflag [#allocation4], 1
    %2830 = vsyncpa %s2829, 1

</llo_original>
